<compile_context>
chip_gen: v5e
topology: v5e:2x2
jax: 0.10.0
libtpu: 0.0.40
codegen_flags: <defaults>
</compile_context>

<pallas_src>
import math
import functools

import jax
import jax.numpy as jnp
from jax import lax
from jax.experimental import pallas as pl
from jax.experimental.pallas import tpu as pltpu


def _round_up(v, m):
    return ((v + m - 1) // m) * m


def _make_gru_kernel(T, Bblk, Hp, L, needs_mask, unroll):
    """One grid step = T GRU timesteps for one batch slice (recurrence carried in VMEM)."""

    def kernel(x_ref, wih_ref, whh_ref, bhn_ref, hn_ref, h_scr):
        c = pl.program_id(1)                       # sequential time-chunk axis

        @pl.when(c == 0)
        def _():
            h_scr[...] = jnp.zeros_like(h_scr)     # h0 = 0 (PyTorch default)

        # Hoisted: JAX does not CSE broadcast_in_dim, so keep it out of the unrolled loop.
        b_hn = jnp.broadcast_to(bhn_ref[...], (Bblk, Hp))

        def step(s, h):
            # Fused input projection for timestep s.  r/z biases and b_ih_n are folded
            # into wih via the constant-one column of x, so no bias add is needed here.
            # Independent of h -> overlaps with the dependent recurrence chain.
            gi = jnp.dot(x_ref[s], wih_ref[...], preferred_element_type=jnp.float32)
            # Recurrent projection: bf16 operands (MXU-native), f32 accumulate.
            gh = jnp.dot(h.astype(jnp.bfloat16), whh_ref[...],
                         preferred_element_type=jnp.float32)
            r = jax.nn.sigmoid(gi[:, 0 * Hp:1 * Hp] + gh[:, 0 * Hp:1 * Hp])
            z = jax.nn.sigmoid(gi[:, 1 * Hp:2 * Hp] + gh[:, 1 * Hp:2 * Hp])
            n = jnp.tanh(gi[:, 2 * Hp:3 * Hp] + r * (gh[:, 2 * Hp:3 * Hp] + b_hn))
            h_new = (1.0 - z) * n + z * h
            if needs_mask:                          # tail chunk: freeze h for t >= L
                h_new = jnp.where(c * T + s < L, h_new, h)
            return h_new

        h = lax.fori_loop(0, T, step, h_scr[...], unroll=unroll)
        h_scr[...] = h

        @pl.when(c == pl.num_programs(1) - 1)
        def _():
            hn_ref[0] = h.astype(hn_ref.dtype)

    return kernel


@functools.partial(jax.jit, static_argnames=("max_time_chunk",))
def rnn_block_forward(x, w_ih, w_hh, b_ih, b_hh, *, max_time_chunk=512):
    """x: (B, sequenceDim, L).  Returns hn: (1, B, hidR), like the PyTorch module."""
    B, D, L = x.shape
    H = w_hh.shape[1]
    Hp = _round_up(max(H, 1), 128)                 # per-gate lane padding
    Dp = _round_up(D + 1, 8)                       # +1: ones column carries the folded biases

    x = x.astype(jnp.float32)
    w_ih = w_ih.astype(jnp.float32)
    w_hh = w_hh.astype(jnp.float32)
    b_ih = b_ih.astype(jnp.float32)
    b_hh = b_hh.astype(jnp.float32)

    if L == 0:                                     # PyTorch would return h0 = zeros
        return jnp.zeros((1, B, H), jnp.float32)

    # ---- time-major x with a ones column (bias folding); tiny HBM footprint ----
    x_tm = jnp.zeros((L, B, Dp), jnp.float32)
    x_tm = x_tm.at[:, :, :D].set(jnp.transpose(x, (2, 0, 1)))
    x_tm = x_tm.at[:, :, D].set(1.0)

    # ---- lane-aligned, per-gate-padded parameters (gate order r, z, n) ---------
    wih_T = w_ih.T                                 # (D, 3H)
    whh_T = w_hh.T                                 # (H, 3H)
    # r/z biases fold completely; b_ih_n folds too.  Only b_hh_n (which sits inside
    # r * (W_hn h + b_hn)) stays separate.
    bias_fold = (b_ih[0:H] + b_hh[0:H],
                 b_ih[H:2 * H] + b_hh[H:2 * H],
                 b_ih[2 * H:3 * H])
    wih_t = jnp.zeros((Dp, 3 * Hp), jnp.float32)
    whh_t = jnp.zeros((Hp, 3 * Hp), jnp.float32)
    for g in range(3):
        wih_t = wih_t.at[:D, g * Hp:g * Hp + H].set(wih_T[:, g * H:(g + 1) * H])
        wih_t = wih_t.at[D, g * Hp:g * Hp + H].set(bias_fold[g])
        whh_t = whh_t.at[:H, g * Hp:g * Hp + H].set(whh_T[:, g * H:(g + 1) * H])
    whh_t = whh_t.astype(jnp.bfloat16)             # MXU-native recurrent weight
    b_hn = jnp.zeros((1, Hp), jnp.float32).at[0, :H].set(b_hh[2 * H:3 * H])

    # ---- batch split across TensorCores (v7x megacore); no-op for small B ------
    nb = 2 if (B % 16 == 0) else 1                 # Bblk must stay a multiple of 8
    Bblk = B // nb

    # ---- VMEM-budget-derived time chunk -----------------------------------------
    # Double-buffered x chunk, layout-padded to (8,128) f32 tiles, kept well under
    # the scoped VMEM limit on every generation (v5e 16 MiB default, v7x 64 MiB
    # physical).  Weights / h carry / temporaries are small by comparison.
    per_t_bytes = 2 * _round_up(Bblk, 8) * _round_up(Dp, 128) * 4
    budget_bytes = 16 * 1024 * 1024
    T = int(max(1, min(max_time_chunk, budget_bytes // per_t_bytes, L)))
    num_chunks = pl.cdiv(L, T)
    L_pad = num_chunks * T
    needs_mask = (L_pad != L)
    if needs_mask:
        x_tm = jnp.pad(x_tm, ((0, L_pad - L), (0, 0), (0, 0)))
    # Full unroll only for short chunks; modest unroll otherwise to avoid vreg spills.
    unroll = True if T <= 16 else 8

    kernel = _make_gru_kernel(T, Bblk, Hp, L, needs_mask, unroll)

    hn_pad = pl.pallas_call(
        kernel,
        out_shape=jax.ShapeDtypeStruct((1, B, Hp), jnp.float32),
        grid_spec=pltpu.PrefetchScalarGridSpec(
            num_scalar_prefetch=0,
            grid=(nb, num_chunks),
            in_specs=[
                pl.BlockSpec((T, Bblk, Dp), lambda bb, c: (c, bb, 0)),   # x chunk (double-buffered)
                pl.BlockSpec((Dp, 3 * Hp), lambda bb, c: (0, 0)),        # W_ih^T + folded biases (f32)
                pl.BlockSpec((Hp, 3 * Hp), lambda bb, c: (0, 0)),        # W_hh^T (bf16, resident)
                pl.BlockSpec((1, Hp), lambda bb, c: (0, 0)),             # b_hh_n
            ],
            out_specs=pl.BlockSpec((1, Bblk, Hp), lambda bb, c: (0, bb, 0)),
            scratch_shapes=[pltpu.VMEM((Bblk, Hp), jnp.float32)],        # hidden-state carry
        ),
        compiler_params=pltpu.CompilerParams(
            dimension_semantics=("parallel", "arbitrary"),               # batch parallel, time sequential
            vmem_limit_bytes=32 * 1024 * 1024,
        ),
    )(x_tm, wih_t, whh_t, b_hn)

    return hn_pad[:, :, :H]


def _gru_reference(x, w_ih, w_hh, b_ih, b_hh):
    """Pure-JAX reference of torch.nn.GRU forward (batch_first), returns hn (1,B,H)."""
    B, D, L = x.shape
    H = w_hh.shape[1]
    xs = jnp.transpose(x, (2, 0, 1))  # (L, B, D)

    def step(h, x_t):
        gi = x_t @ w_ih.T + b_ih
        gh = h @ w_hh.T + b_hh
        i_r, i_z, i_n = gi[:, :H], gi[:, H:2 * H], gi[:, 2 * H:]
        h_r, h_z, h_n = gh[:, :H], gh[:, H:2 * H], gh[:, 2 * H:]
        r = jax.nn.sigmoid(i_r + h_r)
        z = jax.nn.sigmoid(i_z + h_z)
        n = jnp.tanh(i_n + r * h_n)
        h_new = (1.0 - z) * n + z * h
        return h_new, None

    h0 = jnp.zeros((B, H), jnp.float32)
    hT, _ = lax.scan(step, h0, xs)
    return hT[None]


if __name__ == "__main__":
    # Shapes consistent with the module: input (B, sequenceDim, L)
    B, sequenceDim, L, hidR = 2, 4, 16, 32

    key = jax.random.PRNGKey(0)
    kx, k1, k2, k3, k4 = jax.random.split(key, 5)

    x = jax.random.normal(kx, (B, sequenceDim, L), dtype=jnp.float32)

    # Deterministic parameter init matching nn.GRU's U(-1/sqrt(H), 1/sqrt(H))
    bound = 1.0 / math.sqrt(hidR)
    w_ih = jax.random.uniform(k1, (3 * hidR, sequenceDim), jnp.float32, -bound, bound)
    w_hh = jax.random.uniform(k2, (3 * hidR, hidR), jnp.float32, -bound, bound)
    b_ih = jax.random.uniform(k3, (3 * hidR,), jnp.float32, -bound, bound)
    b_hh = jax.random.uniform(k4, (3 * hidR,), jnp.float32, -bound, bound)

    hn = rnn_block_forward(x, w_ih, w_hh, b_ih, b_hh)
    hn = jax.block_until_ready(hn)

    ref = _gru_reference(x, w_ih, w_hh, b_ih, b_hh)
    assert hn.shape == (1, B, hidR)
    # Both kernel and reference run their matmuls through bf16 MXU passes (the
    # kernel explicitly, the reference via TPU default matmul precision), along
    # different contraction/padding structures, so allow ~1e-2 tolerance; wiring
    # errors would be orders of magnitude larger.
    assert jnp.allclose(hn, ref, atol=1e-2, rtol=1e-2), "mismatch vs reference GRU"

    print("KERNEL_OK")
</pallas_src>

<mosaic_0001>
module attributes {stable_mosaic.version = 11 : i64} {
  func.func @kernel(%arg0: i32, %arg1: i32, %arg2: memref<16x2x8xf32, #tpu.memory_space<vmem>>, %arg3: memref<8x384xf32, #tpu.memory_space<vmem>>, %arg4: memref<128x384xbf16, #tpu.memory_space<vmem>>, %arg5: memref<1x128xf32, #tpu.memory_space<vmem>>, %arg6: memref<1x2x128xf32, #tpu.memory_space<vmem>>, %arg7: memref<2x128xf32, #tpu.memory_space<vmem>>) attributes {dimension_semantics = [#tpu.dimension_semantics<parallel>, #tpu.dimension_semantics<arbitrary>], iteration_bounds = array<i64: 1, 1>, scalar_prefetch = 0 : i64, scratch_operands = 1 : i64, tpu.core_type = #tpu.core_type<tc>, window_params = [{transform_indices = @transform_0, window_bounds = array<i64: 16, 2, 8>}, {pipeline_mode = #tpu.pipeline_mode<synchronous>, transform_indices = @transform_1, window_bounds = array<i64: 8, 384>}, {pipeline_mode = #tpu.pipeline_mode<synchronous>, transform_indices = @transform_2, window_bounds = array<i64: 128, 384>}, {pipeline_mode = #tpu.pipeline_mode<synchronous>, transform_indices = @transform_3, window_bounds = array<i64: 1, 128>}, {transform_indices = @transform_4, window_bounds = array<i64: 1, 2, 128>}]} {
    %c0_i32 = arith.constant 0 : i32
    %0 = arith.cmpi eq, %arg1, %c0_i32 : i32
    %1 = arith.extui %0 : i1 to i32
    %c0_i32_0 = arith.constant 0 : i32
    %2 = arith.cmpi ne, %1, %c0_i32_0 : i32
    scf.if %2 {
      %cst_184 = arith.constant 0.000000e+00 : f32
      %571 = vector.broadcast %cst_184 : f32 to vector<2x128xf32>
      %c0_185 = arith.constant 0 : index
      %c0_186 = arith.constant 0 : index
      %572 = vector.load %arg7[%c0_185, %c0_186] : memref<2x128xf32, #tpu.memory_space<vmem>>, vector<2x128xf32>
      tpu.vector_store %arg7[%c0_185, %c0_186], %571 {strides = array<i32>} : memref<2x128xf32, #tpu.memory_space<vmem>>, vector<2x128xf32>,
    } else {
    }
    %c0 = arith.constant 0 : index
    %c0_1 = arith.constant 0 : index
    %3 = vector.load %arg5[%c0, %c0_1] : memref<1x128xf32, #tpu.memory_space<vmem>>, vector<1x128xf32>
    %4 = vector.shape_cast %3 : vector<1x128xf32> to vector<1x128xf32>
    %5 = vector.broadcast %4 : vector<1x128xf32> to vector<2x128xf32>
    %c0_2 = arith.constant 0 : index
    %c0_3 = arith.constant 0 : index
    %6 = vector.load %arg7[%c0_2, %c0_3] : memref<2x128xf32, #tpu.memory_space<vmem>>, vector<2x128xf32>
    %c0_i32_4 = arith.constant 0 : i32
    %7 = arith.index_cast %c0_i32_4 : i32 to index
    %c0_5 = arith.constant 0 : index
    %c0_6 = arith.constant 0 : index
    %8 = vector.load %arg2[%7, %c0_5, %c0_6] : memref<16x2x8xf32, #tpu.memory_space<vmem>>, vector<1x2x8xf32>
    %9 = vector.shape_cast %8 : vector<1x2x8xf32> to vector<2x8xf32>
    %c0_7 = arith.constant 0 : index
    %c0_8 = arith.constant 0 : index
    %10 = vector.load %arg3[%c0_7, %c0_8] : memref<8x384xf32, #tpu.memory_space<vmem>>, vector<8x384xf32>
    %cst = arith.constant dense<0.000000e+00> : vector<2x384xf32>
    %11 = tpu.matmul %9, %10, %cst {dimension_numbers = #tpu.dot_dimension_numbers<[1], [0], [0], [1], [0, 0, 1, 1], [], []>} : vector<2x8xf32>, vector<8x384xf32>, vector<2x384xf32> -> vector<2x384xf32>
    %12 = arith.truncf %6 : vector<2x128xf32> to vector<2x128xbf16>
    %c0_9 = arith.constant 0 : index
    %c0_10 = arith.constant 0 : index
    %13 = vector.load %arg4[%c0_9, %c0_10] : memref<128x384xbf16, #tpu.memory_space<vmem>>, vector<128x384xbf16>
    %cst_11 = arith.constant dense<0.000000e+00> : vector<2x384xf32>
    %14 = tpu.matmul %12, %13, %cst_11 {dimension_numbers = #tpu.dot_dimension_numbers<[1], [0], [0], [1], [0, 0, 1, 1], [], []>} : vector<2x128xbf16>, vector<128x384xbf16>, vector<2x384xf32> -> vector<2x384xf32>
    %15 = vector.extract_strided_slice %11 {offsets = [0, 0], sizes = [2, 128], strides = [1, 1]} : vector<2x384xf32> to vector<2x128xf32>
    %16 = vector.extract_strided_slice %14 {offsets = [0, 0], sizes = [2, 128], strides = [1, 1]} : vector<2x384xf32> to vector<2x128xf32>
    %17 = arith.addf %15, %16 : vector<2x128xf32>
    %18 = arith.negf %17 : vector<2x128xf32>
    %19 = math.exp %18 : vector<2x128xf32>
    %cst_12 = arith.constant 1.000000e+00 : f32
    %20 = vector.broadcast %cst_12 : f32 to vector<2x128xf32>
    %21 = arith.addf %20, %19 : vector<2x128xf32>
    %22 = arith.divf %20, %21 : vector<2x128xf32>
    %23 = vector.extract_strided_slice %11 {offsets = [0, 128], sizes = [2, 128], strides = [1, 1]} : vector<2x384xf32> to vector<2x128xf32>
    %24 = vector.extract_strided_slice %14 {offsets = [0, 128], sizes = [2, 128], strides = [1, 1]} : vector<2x384xf32> to vector<2x128xf32>
    %25 = arith.addf %23, %24 : vector<2x128xf32>
    %26 = arith.negf %25 : vector<2x128xf32>
    %27 = math.exp %26 : vector<2x128xf32>
    %cst_13 = arith.constant 1.000000e+00 : f32
    %28 = vector.broadcast %cst_13 : f32 to vector<2x128xf32>
    %29 = arith.addf %28, %27 : vector<2x128xf32>
    %30 = arith.divf %28, %29 : vector<2x128xf32>
    %31 = vector.extract_strided_slice %11 {offsets = [0, 256], sizes = [2, 128], strides = [1, 1]} : vector<2x384xf32> to vector<2x128xf32>
    %32 = vector.extract_strided_slice %14 {offsets = [0, 256], sizes = [2, 128], strides = [1, 1]} : vector<2x384xf32> to vector<2x128xf32>
    %33 = arith.addf %32, %5 : vector<2x128xf32>
    %34 = arith.mulf %22, %33 : vector<2x128xf32>
    %35 = arith.addf %31, %34 : vector<2x128xf32>
    %36 = math.tanh %35 : vector<2x128xf32>
    %cst_14 = arith.constant 1.000000e+00 : f32
    %37 = vector.broadcast %cst_14 : f32 to vector<2x128xf32>
    %38 = arith.subf %37, %30 : vector<2x128xf32>
    %39 = arith.mulf %38, %36 : vector<2x128xf32>
    %40 = arith.mulf %30, %6 : vector<2x128xf32>
    %41 = arith.addf %39, %40 : vector<2x128xf32>
    %c1_i32 = arith.constant 1 : i32
    %42 = arith.index_cast %c1_i32 : i32 to index
    %c0_15 = arith.constant 0 : index
    %c0_16 = arith.constant 0 : index
    %43 = vector.load %arg2[%42, %c0_15, %c0_16] : memref<16x2x8xf32, #tpu.memory_space<vmem>>, vector<1x2x8xf32>
    %44 = vector.shape_cast %43 : vector<1x2x8xf32> to vector<2x8xf32>
    %c0_17 = arith.constant 0 : index
    %c0_18 = arith.constant 0 : index
    %45 = vector.load %arg3[%c0_17, %c0_18] : memref<8x384xf32, #tpu.memory_space<vmem>>, vector<8x384xf32>
    %cst_19 = arith.constant dense<0.000000e+00> : vector<2x384xf32>
    %46 = tpu.matmul %44, %45, %cst_19 {dimension_numbers = #tpu.dot_dimension_numbers<[1], [0], [0], [1], [0, 0, 1, 1], [], []>} : vector<2x8xf32>, vector<8x384xf32>, vector<2x384xf32> -> vector<2x384xf32>
    %47 = arith.truncf %41 : vector<2x128xf32> to vector<2x128xbf16>
    %c0_20 = arith.constant 0 : index
    %c0_21 = arith.constant 0 : index
    %48 = vector.load %arg4[%c0_20, %c0_21] : memref<128x384xbf16, #tpu.memory_space<vmem>>, vector<128x384xbf16>
    %cst_22 = arith.constant dense<0.000000e+00> : vector<2x384xf32>
    %49 = tpu.matmul %47, %48, %cst_22 {dimension_numbers = #tpu.dot_dimension_numbers<[1], [0], [0], [1], [0, 0, 1, 1], [], []>} : vector<2x128xbf16>, vector<128x384xbf16>, vector<2x384xf32> -> vector<2x384xf32>
    %50 = vector.extract_strided_slice %46 {offsets = [0, 0], sizes = [2, 128], strides = [1, 1]} : vector<2x384xf32> to vector<2x128xf32>
    %51 = vector.extract_strided_slice %49 {offsets = [0, 0], sizes = [2, 128], strides = [1, 1]} : vector<2x384xf32> to vector<2x128xf32>
    %52 = arith.addf %50, %51 : vector<2x128xf32>
    %53 = arith.negf %52 : vector<2x128xf32>
    %54 = math.exp %53 : vector<2x128xf32>
    %cst_23 = arith.constant 1.000000e+00 : f32
    %55 = vector.broadcast %cst_23 : f32 to vector<2x128xf32>
    %56 = arith.addf %55, %54 : vector<2x128xf32>
    %57 = arith.divf %55, %56 : vector<2x128xf32>
    %58 = vector.extract_strided_slice %46 {offsets = [0, 128], sizes = [2, 128], strides = [1, 1]} : vector<2x384xf32> to vector<2x128xf32>
    %59 = vector.extract_strided_slice %49 {offsets = [0, 128], sizes = [2, 128], strides = [1, 1]} : vector<2x384xf32> to vector<2x128xf32>
    %60 = arith.addf %58, %59 : vector<2x128xf32>
    %61 = arith.negf %60 : vector<2x128xf32>
    %62 = math.exp %61 : vector<2x128xf32>
    %cst_24 = arith.constant 1.000000e+00 : f32
    %63 = vector.broadcast %cst_24 : f32 to vector<2x128xf32>
    %64 = arith.addf %63, %62 : vector<2x128xf32>
    %65 = arith.divf %63, %64 : vector<2x128xf32>
    %66 = vector.extract_strided_slice %46 {offsets = [0, 256], sizes = [2, 128], strides = [1, 1]} : vector<2x384xf32> to vector<2x128xf32>
    %67 = vector.extract_strided_slice %49 {offsets = [0, 256], sizes = [2, 128], strides = [1, 1]} : vector<2x384xf32> to vector<2x128xf32>
    %68 = arith.addf %67, %5 : vector<2x128xf32>
    %69 = arith.mulf %57, %68 : vector<2x128xf32>
    %70 = arith.addf %66, %69 : vector<2x128xf32>
    %71 = math.tanh %70 : vector<2x128xf32>
    %cst_25 = arith.constant 1.000000e+00 : f32
    %72 = vector.broadcast %cst_25 : f32 to vector<2x128xf32>
    %73 = arith.subf %72, %65 : vector<2x128xf32>
    %74 = arith.mulf %73, %71 : vector<2x128xf32>
    %75 = arith.mulf %65, %41 : vector<2x128xf32>
    %76 = arith.addf %74, %75 : vector<2x128xf32>
    %c2_i32 = arith.constant 2 : i32
    %77 = arith.index_cast %c2_i32 : i32 to index
    %c0_26 = arith.constant 0 : index
    %c0_27 = arith.constant 0 : index
    %78 = vector.load %arg2[%77, %c0_26, %c0_27] : memref<16x2x8xf32, #tpu.memory_space<vmem>>, vector<1x2x8xf32>
    %79 = vector.shape_cast %78 : vector<1x2x8xf32> to vector<2x8xf32>
    %c0_28 = arith.constant 0 : index
    %c0_29 = arith.constant 0 : index
    %80 = vector.load %arg3[%c0_28, %c0_29] : memref<8x384xf32, #tpu.memory_space<vmem>>, vector<8x384xf32>
    %cst_30 = arith.constant dense<0.000000e+00> : vector<2x384xf32>
    %81 = tpu.matmul %79, %80, %cst_30 {dimension_numbers = #tpu.dot_dimension_numbers<[1], [0], [0], [1], [0, 0, 1, 1], [], []>} : vector<2x8xf32>, vector<8x384xf32>, vector<2x384xf32> -> vector<2x384xf32>
    %82 = arith.truncf %76 : vector<2x128xf32> to vector<2x128xbf16>
    %c0_31 = arith.constant 0 : index
    %c0_32 = arith.constant 0 : index
    %83 = vector.load %arg4[%c0_31, %c0_32] : memref<128x384xbf16, #tpu.memory_space<vmem>>, vector<128x384xbf16>
    %cst_33 = arith.constant dense<0.000000e+00> : vector<2x384xf32>
    %84 = tpu.matmul %82, %83, %cst_33 {dimension_numbers = #tpu.dot_dimension_numbers<[1], [0], [0], [1], [0, 0, 1, 1], [], []>} : vector<2x128xbf16>, vector<128x384xbf16>, vector<2x384xf32> -> vector<2x384xf32>
    %85 = vector.extract_strided_slice %81 {offsets = [0, 0], sizes = [2, 128], strides = [1, 1]} : vector<2x384xf32> to vector<2x128xf32>
    %86 = vector.extract_strided_slice %84 {offsets = [0, 0], sizes = [2, 128], strides = [1, 1]} : vector<2x384xf32> to vector<2x128xf32>
    %87 = arith.addf %85, %86 : vector<2x128xf32>
    %88 = arith.negf %87 : vector<2x128xf32>
    %89 = math.exp %88 : vector<2x128xf32>
    %cst_34 = arith.constant 1.000000e+00 : f32
    %90 = vector.broadcast %cst_34 : f32 to vector<2x128xf32>
    %91 = arith.addf %90, %89 : vector<2x128xf32>
    %92 = arith.divf %90, %91 : vector<2x128xf32>
    %93 = vector.extract_strided_slice %81 {offsets = [0, 128], sizes = [2, 128], strides = [1, 1]} : vector<2x384xf32> to vector<2x128xf32>
    %94 = vector.extract_strided_slice %84 {offsets = [0, 128], sizes = [2, 128], strides = [1, 1]} : vector<2x384xf32> to vector<2x128xf32>
    %95 = arith.addf %93, %94 : vector<2x128xf32>
    %96 = arith.negf %95 : vector<2x128xf32>
    %97 = math.exp %96 : vector<2x128xf32>
    %cst_35 = arith.constant 1.000000e+00 : f32
    %98 = vector.broadcast %cst_35 : f32 to vector<2x128xf32>
    %99 = arith.addf %98, %97 : vector<2x128xf32>
    %100 = arith.divf %98, %99 : vector<2x128xf32>
    %101 = vector.extract_strided_slice %81 {offsets = [0, 256], sizes = [2, 128], strides = [1, 1]} : vector<2x384xf32> to vector<2x128xf32>
    %102 = vector.extract_strided_slice %84 {offsets = [0, 256], sizes = [2, 128], strides = [1, 1]} : vector<2x384xf32> to vector<2x128xf32>
    %103 = arith.addf %102, %5 : vector<2x128xf32>
    %104 = arith.mulf %92, %103 : vector<2x128xf32>
    %105 = arith.addf %101, %104 : vector<2x128xf32>
    %106 = math.tanh %105 : vector<2x128xf32>
    %cst_36 = arith.constant 1.000000e+00 : f32
    %107 = vector.broadcast %cst_36 : f32 to vector<2x128xf32>
    %108 = arith.subf %107, %100 : vector<2x128xf32>
    %109 = arith.mulf %108, %106 : vector<2x128xf32>
    %110 = arith.mulf %100, %76 : vector<2x128xf32>
    %111 = arith.addf %109, %110 : vector<2x128xf32>
    %c3_i32 = arith.constant 3 : i32
    %112 = arith.index_cast %c3_i32 : i32 to index
    %c0_37 = arith.constant 0 : index
    %c0_38 = arith.constant 0 : index
    %113 = vector.load %arg2[%112, %c0_37, %c0_38] : memref<16x2x8xf32, #tpu.memory_space<vmem>>, vector<1x2x8xf32>
    %114 = vector.shape_cast %113 : vector<1x2x8xf32> to vector<2x8xf32>
    %c0_39 = arith.constant 0 : index
    %c0_40 = arith.constant 0 : index
    %115 = vector.load %arg3[%c0_39, %c0_40] : memref<8x384xf32, #tpu.memory_space<vmem>>, vector<8x384xf32>
    %cst_41 = arith.constant dense<0.000000e+00> : vector<2x384xf32>
    %116 = tpu.matmul %114, %115, %cst_41 {dimension_numbers = #tpu.dot_dimension_numbers<[1], [0], [0], [1], [0, 0, 1, 1], [], []>} : vector<2x8xf32>, vector<8x384xf32>, vector<2x384xf32> -> vector<2x384xf32>
    %117 = arith.truncf %111 : vector<2x128xf32> to vector<2x128xbf16>
    %c0_42 = arith.constant 0 : index
    %c0_43 = arith.constant 0 : index
    %118 = vector.load %arg4[%c0_42, %c0_43] : memref<128x384xbf16, #tpu.memory_space<vmem>>, vector<128x384xbf16>
    %cst_44 = arith.constant dense<0.000000e+00> : vector<2x384xf32>
    %119 = tpu.matmul %117, %118, %cst_44 {dimension_numbers = #tpu.dot_dimension_numbers<[1], [0], [0], [1], [0, 0, 1, 1], [], []>} : vector<2x128xbf16>, vector<128x384xbf16>, vector<2x384xf32> -> vector<2x384xf32>
    %120 = vector.extract_strided_slice %116 {offsets = [0, 0], sizes = [2, 128], strides = [1, 1]} : vector<2x384xf32> to vector<2x128xf32>
    %121 = vector.extract_strided_slice %119 {offsets = [0, 0], sizes = [2, 128], strides = [1, 1]} : vector<2x384xf32> to vector<2x128xf32>
    %122 = arith.addf %120, %121 : vector<2x128xf32>
    %123 = arith.negf %122 : vector<2x128xf32>
    %124 = math.exp %123 : vector<2x128xf32>
    %cst_45 = arith.constant 1.000000e+00 : f32
    %125 = vector.broadcast %cst_45 : f32 to vector<2x128xf32>
    %126 = arith.addf %125, %124 : vector<2x128xf32>
    %127 = arith.divf %125, %126 : vector<2x128xf32>
    %128 = vector.extract_strided_slice %116 {offsets = [0, 128], sizes = [2, 128], strides = [1, 1]} : vector<2x384xf32> to vector<2x128xf32>
    %129 = vector.extract_strided_slice %119 {offsets = [0, 128], sizes = [2, 128], strides = [1, 1]} : vector<2x384xf32> to vector<2x128xf32>
    %130 = arith.addf %128, %129 : vector<2x128xf32>
    %131 = arith.negf %130 : vector<2x128xf32>
    %132 = math.exp %131 : vector<2x128xf32>
    %cst_46 = arith.constant 1.000000e+00 : f32
    %133 = vector.broadcast %cst_46 : f32 to vector<2x128xf32>
    %134 = arith.addf %133, %132 : vector<2x128xf32>
    %135 = arith.divf %133, %134 : vector<2x128xf32>
    %136 = vector.extract_strided_slice %116 {offsets = [0, 256], sizes = [2, 128], strides = [1, 1]} : vector<2x384xf32> to vector<2x128xf32>
    %137 = vector.extract_strided_slice %119 {offsets = [0, 256], sizes = [2, 128], strides = [1, 1]} : vector<2x384xf32> to vector<2x128xf32>
    %138 = arith.addf %137, %5 : vector<2x128xf32>
    %139 = arith.mulf %127, %138 : vector<2x128xf32>
    %140 = arith.addf %136, %139 : vector<2x128xf32>
    %141 = math.tanh %140 : vector<2x128xf32>
    %cst_47 = arith.constant 1.000000e+00 : f32
    %142 = vector.broadcast %cst_47 : f32 to vector<2x128xf32>
    %143 = arith.subf %142, %135 : vector<2x128xf32>
    %144 = arith.mulf %143, %141 : vector<2x128xf32>
    %145 = arith.mulf %135, %111 : vector<2x128xf32>
    %146 = arith.addf %144, %145 : vector<2x128xf32>
    %c4_i32 = arith.constant 4 : i32
    %147 = arith.index_cast %c4_i32 : i32 to index
    %c0_48 = arith.constant 0 : index
    %c0_49 = arith.constant 0 : index
    %148 = vector.load %arg2[%147, %c0_48, %c0_49] : memref<16x2x8xf32, #tpu.memory_space<vmem>>, vector<1x2x8xf32>
    %149 = vector.shape_cast %148 : vector<1x2x8xf32> to vector<2x8xf32>
    %c0_50 = arith.constant 0 : index
    %c0_51 = arith.constant 0 : index
    %150 = vector.load %arg3[%c0_50, %c0_51] : memref<8x384xf32, #tpu.memory_space<vmem>>, vector<8x384xf32>
    %cst_52 = arith.constant dense<0.000000e+00> : vector<2x384xf32>
    %151 = tpu.matmul %149, %150, %cst_52 {dimension_numbers = #tpu.dot_dimension_numbers<[1], [0], [0], [1], [0, 0, 1, 1], [], []>} : vector<2x8xf32>, vector<8x384xf32>, vector<2x384xf32> -> vector<2x384xf32>
    %152 = arith.truncf %146 : vector<2x128xf32> to vector<2x128xbf16>
    %c0_53 = arith.constant 0 : index
    %c0_54 = arith.constant 0 : index
    %153 = vector.load %arg4[%c0_53, %c0_54] : memref<128x384xbf16, #tpu.memory_space<vmem>>, vector<128x384xbf16>
    %cst_55 = arith.constant dense<0.000000e+00> : vector<2x384xf32>
    %154 = tpu.matmul %152, %153, %cst_55 {dimension_numbers = #tpu.dot_dimension_numbers<[1], [0], [0], [1], [0, 0, 1, 1], [], []>} : vector<2x128xbf16>, vector<128x384xbf16>, vector<2x384xf32> -> vector<2x384xf32>
    %155 = vector.extract_strided_slice %151 {offsets = [0, 0], sizes = [2, 128], strides = [1, 1]} : vector<2x384xf32> to vector<2x128xf32>
    %156 = vector.extract_strided_slice %154 {offsets = [0, 0], sizes = [2, 128], strides = [1, 1]} : vector<2x384xf32> to vector<2x128xf32>
    %157 = arith.addf %155, %156 : vector<2x128xf32>
    %158 = arith.negf %157 : vector<2x128xf32>
    %159 = math.exp %158 : vector<2x128xf32>
    %cst_56 = arith.constant 1.000000e+00 : f32
    %160 = vector.broadcast %cst_56 : f32 to vector<2x128xf32>
    %161 = arith.addf %160, %159 : vector<2x128xf32>
    %162 = arith.divf %160, %161 : vector<2x128xf32>
    %163 = vector.extract_strided_slice %151 {offsets = [0, 128], sizes = [2, 128], strides = [1, 1]} : vector<2x384xf32> to vector<2x128xf32>
    %164 = vector.extract_strided_slice %154 {offsets = [0, 128], sizes = [2, 128], strides = [1, 1]} : vector<2x384xf32> to vector<2x128xf32>
    %165 = arith.addf %163, %164 : vector<2x128xf32>
    %166 = arith.negf %165 : vector<2x128xf32>
    %167 = math.exp %166 : vector<2x128xf32>
    %cst_57 = arith.constant 1.000000e+00 : f32
    %168 = vector.broadcast %cst_57 : f32 to vector<2x128xf32>
    %169 = arith.addf %168, %167 : vector<2x128xf32>
    %170 = arith.divf %168, %169 : vector<2x128xf32>
    %171 = vector.extract_strided_slice %151 {offsets = [0, 256], sizes = [2, 128], strides = [1, 1]} : vector<2x384xf32> to vector<2x128xf32>
    %172 = vector.extract_strided_slice %154 {offsets = [0, 256], sizes = [2, 128], strides = [1, 1]} : vector<2x384xf32> to vector<2x128xf32>
    %173 = arith.addf %172, %5 : vector<2x128xf32>
    %174 = arith.mulf %162, %173 : vector<2x128xf32>
    %175 = arith.addf %171, %174 : vector<2x128xf32>
    %176 = math.tanh %175 : vector<2x128xf32>
    %cst_58 = arith.constant 1.000000e+00 : f32
    %177 = vector.broadcast %cst_58 : f32 to vector<2x128xf32>
    %178 = arith.subf %177, %170 : vector<2x128xf32>
    %179 = arith.mulf %178, %176 : vector<2x128xf32>
    %180 = arith.mulf %170, %146 : vector<2x128xf32>
    %181 = arith.addf %179, %180 : vector<2x128xf32>
    %c5_i32 = arith.constant 5 : i32
    %182 = arith.index_cast %c5_i32 : i32 to index
    %c0_59 = arith.constant 0 : index
    %c0_60 = arith.constant 0 : index
    %183 = vector.load %arg2[%182, %c0_59, %c0_60] : memref<16x2x8xf32, #tpu.memory_space<vmem>>, vector<1x2x8xf32>
    %184 = vector.shape_cast %183 : vector<1x2x8xf32> to vector<2x8xf32>
    %c0_61 = arith.constant 0 : index
    %c0_62 = arith.constant 0 : index
    %185 = vector.load %arg3[%c0_61, %c0_62] : memref<8x384xf32, #tpu.memory_space<vmem>>, vector<8x384xf32>
    %cst_63 = arith.constant dense<0.000000e+00> : vector<2x384xf32>
    %186 = tpu.matmul %184, %185, %cst_63 {dimension_numbers = #tpu.dot_dimension_numbers<[1], [0], [0], [1], [0, 0, 1, 1], [], []>} : vector<2x8xf32>, vector<8x384xf32>, vector<2x384xf32> -> vector<2x384xf32>
    %187 = arith.truncf %181 : vector<2x128xf32> to vector<2x128xbf16>
    %c0_64 = arith.constant 0 : index
    %c0_65 = arith.constant 0 : index
    %188 = vector.load %arg4[%c0_64, %c0_65] : memref<128x384xbf16, #tpu.memory_space<vmem>>, vector<128x384xbf16>
    %cst_66 = arith.constant dense<0.000000e+00> : vector<2x384xf32>
    %189 = tpu.matmul %187, %188, %cst_66 {dimension_numbers = #tpu.dot_dimension_numbers<[1], [0], [0], [1], [0, 0, 1, 1], [], []>} : vector<2x128xbf16>, vector<128x384xbf16>, vector<2x384xf32> -> vector<2x384xf32>
    %190 = vector.extract_strided_slice %186 {offsets = [0, 0], sizes = [2, 128], strides = [1, 1]} : vector<2x384xf32> to vector<2x128xf32>
    %191 = vector.extract_strided_slice %189 {offsets = [0, 0], sizes = [2, 128], strides = [1, 1]} : vector<2x384xf32> to vector<2x128xf32>
    %192 = arith.addf %190, %191 : vector<2x128xf32>
    %193 = arith.negf %192 : vector<2x128xf32>
    %194 = math.exp %193 : vector<2x128xf32>
    %cst_67 = arith.constant 1.000000e+00 : f32
    %195 = vector.broadcast %cst_67 : f32 to vector<2x128xf32>
    %196 = arith.addf %195, %194 : vector<2x128xf32>
    %197 = arith.divf %195, %196 : vector<2x128xf32>
    %198 = vector.extract_strided_slice %186 {offsets = [0, 128], sizes = [2, 128], strides = [1, 1]} : vector<2x384xf32> to vector<2x128xf32>
    %199 = vector.extract_strided_slice %189 {offsets = [0, 128], sizes = [2, 128], strides = [1, 1]} : vector<2x384xf32> to vector<2x128xf32>
    %200 = arith.addf %198, %199 : vector<2x128xf32>
    %201 = arith.negf %200 : vector<2x128xf32>
    %202 = math.exp %201 : vector<2x128xf32>
    %cst_68 = arith.constant 1.000000e+00 : f32
    %203 = vector.broadcast %cst_68 : f32 to vector<2x128xf32>
    %204 = arith.addf %203, %202 : vector<2x128xf32>
    %205 = arith.divf %203, %204 : vector<2x128xf32>
    %206 = vector.extract_strided_slice %186 {offsets = [0, 256], sizes = [2, 128], strides = [1, 1]} : vector<2x384xf32> to vector<2x128xf32>
    %207 = vector.extract_strided_slice %189 {offsets = [0, 256], sizes = [2, 128], strides = [1, 1]} : vector<2x384xf32> to vector<2x128xf32>
    %208 = arith.addf %207, %5 : vector<2x128xf32>
    %209 = arith.mulf %197, %208 : vector<2x128xf32>
    %210 = arith.addf %206, %209 : vector<2x128xf32>
    %211 = math.tanh %210 : vector<2x128xf32>
    %cst_69 = arith.constant 1.000000e+00 : f32
    %212 = vector.broadcast %cst_69 : f32 to vector<2x128xf32>
    %213 = arith.subf %212, %205 : vector<2x128xf32>
    %214 = arith.mulf %213, %211 : vector<2x128xf32>
    %215 = arith.mulf %205, %181 : vector<2x128xf32>
    %216 = arith.addf %214, %215 : vector<2x128xf32>
    %c6_i32 = arith.constant 6 : i32
    %217 = arith.index_cast %c6_i32 : i32 to index
    %c0_70 = arith.constant 0 : index
    %c0_71 = arith.constant 0 : index
    %218 = vector.load %arg2[%217, %c0_70, %c0_71] : memref<16x2x8xf32, #tpu.memory_space<vmem>>, vector<1x2x8xf32>
    %219 = vector.shape_cast %218 : vector<1x2x8xf32> to vector<2x8xf32>
    %c0_72 = arith.constant 0 : index
    %c0_73 = arith.constant 0 : index
    %220 = vector.load %arg3[%c0_72, %c0_73] : memref<8x384xf32, #tpu.memory_space<vmem>>, vector<8x384xf32>
    %cst_74 = arith.constant dense<0.000000e+00> : vector<2x384xf32>
    %221 = tpu.matmul %219, %220, %cst_74 {dimension_numbers = #tpu.dot_dimension_numbers<[1], [0], [0], [1], [0, 0, 1, 1], [], []>} : vector<2x8xf32>, vector<8x384xf32>, vector<2x384xf32> -> vector<2x384xf32>
    %222 = arith.truncf %216 : vector<2x128xf32> to vector<2x128xbf16>
    %c0_75 = arith.constant 0 : index
    %c0_76 = arith.constant 0 : index
    %223 = vector.load %arg4[%c0_75, %c0_76] : memref<128x384xbf16, #tpu.memory_space<vmem>>, vector<128x384xbf16>
    %cst_77 = arith.constant dense<0.000000e+00> : vector<2x384xf32>
    %224 = tpu.matmul %222, %223, %cst_77 {dimension_numbers = #tpu.dot_dimension_numbers<[1], [0], [0], [1], [0, 0, 1, 1], [], []>} : vector<2x128xbf16>, vector<128x384xbf16>, vector<2x384xf32> -> vector<2x384xf32>
    %225 = vector.extract_strided_slice %221 {offsets = [0, 0], sizes = [2, 128], strides = [1, 1]} : vector<2x384xf32> to vector<2x128xf32>
    %226 = vector.extract_strided_slice %224 {offsets = [0, 0], sizes = [2, 128], strides = [1, 1]} : vector<2x384xf32> to vector<2x128xf32>
    %227 = arith.addf %225, %226 : vector<2x128xf32>
    %228 = arith.negf %227 : vector<2x128xf32>
    %229 = math.exp %228 : vector<2x128xf32>
    %cst_78 = arith.constant 1.000000e+00 : f32
    %230 = vector.broadcast %cst_78 : f32 to vector<2x128xf32>
    %231 = arith.addf %230, %229 : vector<2x128xf32>
    %232 = arith.divf %230, %231 : vector<2x128xf32>
    %233 = vector.extract_strided_slice %221 {offsets = [0, 128], sizes = [2, 128], strides = [1, 1]} : vector<2x384xf32> to vector<2x128xf32>
    %234 = vector.extract_strided_slice %224 {offsets = [0, 128], sizes = [2, 128], strides = [1, 1]} : vector<2x384xf32> to vector<2x128xf32>
    %235 = arith.addf %233, %234 : vector<2x128xf32>
    %236 = arith.negf %235 : vector<2x128xf32>
    %237 = math.exp %236 : vector<2x128xf32>
    %cst_79 = arith.constant 1.000000e+00 : f32
    %238 = vector.broadcast %cst_79 : f32 to vector<2x128xf32>
    %239 = arith.addf %238, %237 : vector<2x128xf32>
    %240 = arith.divf %238, %239 : vector<2x128xf32>
    %241 = vector.extract_strided_slice %221 {offsets = [0, 256], sizes = [2, 128], strides = [1, 1]} : vector<2x384xf32> to vector<2x128xf32>
    %242 = vector.extract_strided_slice %224 {offsets = [0, 256], sizes = [2, 128], strides = [1, 1]} : vector<2x384xf32> to vector<2x128xf32>
    %243 = arith.addf %242, %5 : vector<2x128xf32>
    %244 = arith.mulf %232, %243 : vector<2x128xf32>
    %245 = arith.addf %241, %244 : vector<2x128xf32>
    %246 = math.tanh %245 : vector<2x128xf32>
    %cst_80 = arith.constant 1.000000e+00 : f32
    %247 = vector.broadcast %cst_80 : f32 to vector<2x128xf32>
    %248 = arith.subf %247, %240 : vector<2x128xf32>
    %249 = arith.mulf %248, %246 : vector<2x128xf32>
    %250 = arith.mulf %240, %216 : vector<2x128xf32>
    %251 = arith.addf %249, %250 : vector<2x128xf32>
    %c7_i32 = arith.constant 7 : i32
    %252 = arith.index_cast %c7_i32 : i32 to index
    %c0_81 = arith.constant 0 : index
    %c0_82 = arith.constant 0 : index
    %253 = vector.load %arg2[%252, %c0_81, %c0_82] : memref<16x2x8xf32, #tpu.memory_space<vmem>>, vector<1x2x8xf32>
    %254 = vector.shape_cast %253 : vector<1x2x8xf32> to vector<2x8xf32>
    %c0_83 = arith.constant 0 : index
    %c0_84 = arith.constant 0 : index
    %255 = vector.load %arg3[%c0_83, %c0_84] : memref<8x384xf32, #tpu.memory_space<vmem>>, vector<8x384xf32>
    %cst_85 = arith.constant dense<0.000000e+00> : vector<2x384xf32>
    %256 = tpu.matmul %254, %255, %cst_85 {dimension_numbers = #tpu.dot_dimension_numbers<[1], [0], [0], [1], [0, 0, 1, 1], [], []>} : vector<2x8xf32>, vector<8x384xf32>, vector<2x384xf32> -> vector<2x384xf32>
    %257 = arith.truncf %251 : vector<2x128xf32> to vector<2x128xbf16>
    %c0_86 = arith.constant 0 : index
    %c0_87 = arith.constant 0 : index
    %258 = vector.load %arg4[%c0_86, %c0_87] : memref<128x384xbf16, #tpu.memory_space<vmem>>, vector<128x384xbf16>
    %cst_88 = arith.constant dense<0.000000e+00> : vector<2x384xf32>
    %259 = tpu.matmul %257, %258, %cst_88 {dimension_numbers = #tpu.dot_dimension_numbers<[1], [0], [0], [1], [0, 0, 1, 1], [], []>} : vector<2x128xbf16>, vector<128x384xbf16>, vector<2x384xf32> -> vector<2x384xf32>
    %260 = vector.extract_strided_slice %256 {offsets = [0, 0], sizes = [2, 128], strides = [1, 1]} : vector<2x384xf32> to vector<2x128xf32>
    %261 = vector.extract_strided_slice %259 {offsets = [0, 0], sizes = [2, 128], strides = [1, 1]} : vector<2x384xf32> to vector<2x128xf32>
    %262 = arith.addf %260, %261 : vector<2x128xf32>
    %263 = arith.negf %262 : vector<2x128xf32>
    %264 = math.exp %263 : vector<2x128xf32>
    %cst_89 = arith.constant 1.000000e+00 : f32
    %265 = vector.broadcast %cst_89 : f32 to vector<2x128xf32>
    %266 = arith.addf %265, %264 : vector<2x128xf32>
    %267 = arith.divf %265, %266 : vector<2x128xf32>
    %268 = vector.extract_strided_slice %256 {offsets = [0, 128], sizes = [2, 128], strides = [1, 1]} : vector<2x384xf32> to vector<2x128xf32>
    %269 = vector.extract_strided_slice %259 {offsets = [0, 128], sizes = [2, 128], strides = [1, 1]} : vector<2x384xf32> to vector<2x128xf32>
    %270 = arith.addf %268, %269 : vector<2x128xf32>
    %271 = arith.negf %270 : vector<2x128xf32>
    %272 = math.exp %271 : vector<2x128xf32>
    %cst_90 = arith.constant 1.000000e+00 : f32
    %273 = vector.broadcast %cst_90 : f32 to vector<2x128xf32>
    %274 = arith.addf %273, %272 : vector<2x128xf32>
    %275 = arith.divf %273, %274 : vector<2x128xf32>
    %276 = vector.extract_strided_slice %256 {offsets = [0, 256], sizes = [2, 128], strides = [1, 1]} : vector<2x384xf32> to vector<2x128xf32>
    %277 = vector.extract_strided_slice %259 {offsets = [0, 256], sizes = [2, 128], strides = [1, 1]} : vector<2x384xf32> to vector<2x128xf32>
    %278 = arith.addf %277, %5 : vector<2x128xf32>
    %279 = arith.mulf %267, %278 : vector<2x128xf32>
    %280 = arith.addf %276, %279 : vector<2x128xf32>
    %281 = math.tanh %280 : vector<2x128xf32>
    %cst_91 = arith.constant 1.000000e+00 : f32
    %282 = vector.broadcast %cst_91 : f32 to vector<2x128xf32>
    %283 = arith.subf %282, %275 : vector<2x128xf32>
    %284 = arith.mulf %283, %281 : vector<2x128xf32>
    %285 = arith.mulf %275, %251 : vector<2x128xf32>
    %286 = arith.addf %284, %285 : vector<2x128xf32>
    %c8_i32 = arith.constant 8 : i32
    %287 = arith.index_cast %c8_i32 : i32 to index
    %c0_92 = arith.constant 0 : index
    %c0_93 = arith.constant 0 : index
    %288 = vector.load %arg2[%287, %c0_92, %c0_93] : memref<16x2x8xf32, #tpu.memory_space<vmem>>, vector<1x2x8xf32>
    %289 = vector.shape_cast %288 : vector<1x2x8xf32> to vector<2x8xf32>
    %c0_94 = arith.constant 0 : index
    %c0_95 = arith.constant 0 : index
    %290 = vector.load %arg3[%c0_94, %c0_95] : memref<8x384xf32, #tpu.memory_space<vmem>>, vector<8x384xf32>
    %cst_96 = arith.constant dense<0.000000e+00> : vector<2x384xf32>
    %291 = tpu.matmul %289, %290, %cst_96 {dimension_numbers = #tpu.dot_dimension_numbers<[1], [0], [0], [1], [0, 0, 1, 1], [], []>} : vector<2x8xf32>, vector<8x384xf32>, vector<2x384xf32> -> vector<2x384xf32>
    %292 = arith.truncf %286 : vector<2x128xf32> to vector<2x128xbf16>
    %c0_97 = arith.constant 0 : index
    %c0_98 = arith.constant 0 : index
    %293 = vector.load %arg4[%c0_97, %c0_98] : memref<128x384xbf16, #tpu.memory_space<vmem>>, vector<128x384xbf16>
    %cst_99 = arith.constant dense<0.000000e+00> : vector<2x384xf32>
    %294 = tpu.matmul %292, %293, %cst_99 {dimension_numbers = #tpu.dot_dimension_numbers<[1], [0], [0], [1], [0, 0, 1, 1], [], []>} : vector<2x128xbf16>, vector<128x384xbf16>, vector<2x384xf32> -> vector<2x384xf32>
    %295 = vector.extract_strided_slice %291 {offsets = [0, 0], sizes = [2, 128], strides = [1, 1]} : vector<2x384xf32> to vector<2x128xf32>
    %296 = vector.extract_strided_slice %294 {offsets = [0, 0], sizes = [2, 128], strides = [1, 1]} : vector<2x384xf32> to vector<2x128xf32>
    %297 = arith.addf %295, %296 : vector<2x128xf32>
    %298 = arith.negf %297 : vector<2x128xf32>
    %299 = math.exp %298 : vector<2x128xf32>
    %cst_100 = arith.constant 1.000000e+00 : f32
    %300 = vector.broadcast %cst_100 : f32 to vector<2x128xf32>
    %301 = arith.addf %300, %299 : vector<2x128xf32>
    %302 = arith.divf %300, %301 : vector<2x128xf32>
    %303 = vector.extract_strided_slice %291 {offsets = [0, 128], sizes = [2, 128], strides = [1, 1]} : vector<2x384xf32> to vector<2x128xf32>
    %304 = vector.extract_strided_slice %294 {offsets = [0, 128], sizes = [2, 128], strides = [1, 1]} : vector<2x384xf32> to vector<2x128xf32>
    %305 = arith.addf %303, %304 : vector<2x128xf32>
    %306 = arith.negf %305 : vector<2x128xf32>
    %307 = math.exp %306 : vector<2x128xf32>
    %cst_101 = arith.constant 1.000000e+00 : f32
    %308 = vector.broadcast %cst_101 : f32 to vector<2x128xf32>
    %309 = arith.addf %308, %307 : vector<2x128xf32>
    %310 = arith.divf %308, %309 : vector<2x128xf32>
    %311 = vector.extract_strided_slice %291 {offsets = [0, 256], sizes = [2, 128], strides = [1, 1]} : vector<2x384xf32> to vector<2x128xf32>
    %312 = vector.extract_strided_slice %294 {offsets = [0, 256], sizes = [2, 128], strides = [1, 1]} : vector<2x384xf32> to vector<2x128xf32>
    %313 = arith.addf %312, %5 : vector<2x128xf32>
    %314 = arith.mulf %302, %313 : vector<2x128xf32>
    %315 = arith.addf %311, %314 : vector<2x128xf32>
    %316 = math.tanh %315 : vector<2x128xf32>
    %cst_102 = arith.constant 1.000000e+00 : f32
    %317 = vector.broadcast %cst_102 : f32 to vector<2x128xf32>
    %318 = arith.subf %317, %310 : vector<2x128xf32>
    %319 = arith.mulf %318, %316 : vector<2x128xf32>
    %320 = arith.mulf %310, %286 : vector<2x128xf32>
    %321 = arith.addf %319, %320 : vector<2x128xf32>
    %c9_i32 = arith.constant 9 : i32
    %322 = arith.index_cast %c9_i32 : i32 to index
    %c0_103 = arith.constant 0 : index
    %c0_104 = arith.constant 0 : index
    %323 = vector.load %arg2[%322, %c0_103, %c0_104] : memref<16x2x8xf32, #tpu.memory_space<vmem>>, vector<1x2x8xf32>
    %324 = vector.shape_cast %323 : vector<1x2x8xf32> to vector<2x8xf32>
    %c0_105 = arith.constant 0 : index
    %c0_106 = arith.constant 0 : index
    %325 = vector.load %arg3[%c0_105, %c0_106] : memref<8x384xf32, #tpu.memory_space<vmem>>, vector<8x384xf32>
    %cst_107 = arith.constant dense<0.000000e+00> : vector<2x384xf32>
    %326 = tpu.matmul %324, %325, %cst_107 {dimension_numbers = #tpu.dot_dimension_numbers<[1], [0], [0], [1], [0, 0, 1, 1], [], []>} : vector<2x8xf32>, vector<8x384xf32>, vector<2x384xf32> -> vector<2x384xf32>
    %327 = arith.truncf %321 : vector<2x128xf32> to vector<2x128xbf16>
    %c0_108 = arith.constant 0 : index
    %c0_109 = arith.constant 0 : index
    %328 = vector.load %arg4[%c0_108, %c0_109] : memref<128x384xbf16, #tpu.memory_space<vmem>>, vector<128x384xbf16>
    %cst_110 = arith.constant dense<0.000000e+00> : vector<2x384xf32>
    %329 = tpu.matmul %327, %328, %cst_110 {dimension_numbers = #tpu.dot_dimension_numbers<[1], [0], [0], [1], [0, 0, 1, 1], [], []>} : vector<2x128xbf16>, vector<128x384xbf16>, vector<2x384xf32> -> vector<2x384xf32>
    %330 = vector.extract_strided_slice %326 {offsets = [0, 0], sizes = [2, 128], strides = [1, 1]} : vector<2x384xf32> to vector<2x128xf32>
    %331 = vector.extract_strided_slice %329 {offsets = [0, 0], sizes = [2, 128], strides = [1, 1]} : vector<2x384xf32> to vector<2x128xf32>
    %332 = arith.addf %330, %331 : vector<2x128xf32>
    %333 = arith.negf %332 : vector<2x128xf32>
    %334 = math.exp %333 : vector<2x128xf32>
    %cst_111 = arith.constant 1.000000e+00 : f32
    %335 = vector.broadcast %cst_111 : f32 to vector<2x128xf32>
    %336 = arith.addf %335, %334 : vector<2x128xf32>
    %337 = arith.divf %335, %336 : vector<2x128xf32>
    %338 = vector.extract_strided_slice %326 {offsets = [0, 128], sizes = [2, 128], strides = [1, 1]} : vector<2x384xf32> to vector<2x128xf32>
    %339 = vector.extract_strided_slice %329 {offsets = [0, 128], sizes = [2, 128], strides = [1, 1]} : vector<2x384xf32> to vector<2x128xf32>
    %340 = arith.addf %338, %339 : vector<2x128xf32>
    %341 = arith.negf %340 : vector<2x128xf32>
    %342 = math.exp %341 : vector<2x128xf32>
    %cst_112 = arith.constant 1.000000e+00 : f32
    %343 = vector.broadcast %cst_112 : f32 to vector<2x128xf32>
    %344 = arith.addf %343, %342 : vector<2x128xf32>
    %345 = arith.divf %343, %344 : vector<2x128xf32>
    %346 = vector.extract_strided_slice %326 {offsets = [0, 256], sizes = [2, 128], strides = [1, 1]} : vector<2x384xf32> to vector<2x128xf32>
    %347 = vector.extract_strided_slice %329 {offsets = [0, 256], sizes = [2, 128], strides = [1, 1]} : vector<2x384xf32> to vector<2x128xf32>
    %348 = arith.addf %347, %5 : vector<2x128xf32>
    %349 = arith.mulf %337, %348 : vector<2x128xf32>
    %350 = arith.addf %346, %349 : vector<2x128xf32>
    %351 = math.tanh %350 : vector<2x128xf32>
    %cst_113 = arith.constant 1.000000e+00 : f32
    %352 = vector.broadcast %cst_113 : f32 to vector<2x128xf32>
    %353 = arith.subf %352, %345 : vector<2x128xf32>
    %354 = arith.mulf %353, %351 : vector<2x128xf32>
    %355 = arith.mulf %345, %321 : vector<2x128xf32>
    %356 = arith.addf %354, %355 : vector<2x128xf32>
    %c10_i32 = arith.constant 10 : i32
    %357 = arith.index_cast %c10_i32 : i32 to index
    %c0_114 = arith.constant 0 : index
    %c0_115 = arith.constant 0 : index
    %358 = vector.load %arg2[%357, %c0_114, %c0_115] : memref<16x2x8xf32, #tpu.memory_space<vmem>>, vector<1x2x8xf32>
    %359 = vector.shape_cast %358 : vector<1x2x8xf32> to vector<2x8xf32>
    %c0_116 = arith.constant 0 : index
    %c0_117 = arith.constant 0 : index
    %360 = vector.load %arg3[%c0_116, %c0_117] : memref<8x384xf32, #tpu.memory_space<vmem>>, vector<8x384xf32>
    %cst_118 = arith.constant dense<0.000000e+00> : vector<2x384xf32>
    %361 = tpu.matmul %359, %360, %cst_118 {dimension_numbers = #tpu.dot_dimension_numbers<[1], [0], [0], [1], [0, 0, 1, 1], [], []>} : vector<2x8xf32>, vector<8x384xf32>, vector<2x384xf32> -> vector<2x384xf32>
    %362 = arith.truncf %356 : vector<2x128xf32> to vector<2x128xbf16>
    %c0_119 = arith.constant 0 : index
    %c0_120 = arith.constant 0 : index
    %363 = vector.load %arg4[%c0_119, %c0_120] : memref<128x384xbf16, #tpu.memory_space<vmem>>, vector<128x384xbf16>
    %cst_121 = arith.constant dense<0.000000e+00> : vector<2x384xf32>
    %364 = tpu.matmul %362, %363, %cst_121 {dimension_numbers = #tpu.dot_dimension_numbers<[1], [0], [0], [1], [0, 0, 1, 1], [], []>} : vector<2x128xbf16>, vector<128x384xbf16>, vector<2x384xf32> -> vector<2x384xf32>
    %365 = vector.extract_strided_slice %361 {offsets = [0, 0], sizes = [2, 128], strides = [1, 1]} : vector<2x384xf32> to vector<2x128xf32>
    %366 = vector.extract_strided_slice %364 {offsets = [0, 0], sizes = [2, 128], strides = [1, 1]} : vector<2x384xf32> to vector<2x128xf32>
    %367 = arith.addf %365, %366 : vector<2x128xf32>
    %368 = arith.negf %367 : vector<2x128xf32>
    %369 = math.exp %368 : vector<2x128xf32>
    %cst_122 = arith.constant 1.000000e+00 : f32
    %370 = vector.broadcast %cst_122 : f32 to vector<2x128xf32>
    %371 = arith.addf %370, %369 : vector<2x128xf32>
    %372 = arith.divf %370, %371 : vector<2x128xf32>
    %373 = vector.extract_strided_slice %361 {offsets = [0, 128], sizes = [2, 128], strides = [1, 1]} : vector<2x384xf32> to vector<2x128xf32>
    %374 = vector.extract_strided_slice %364 {offsets = [0, 128], sizes = [2, 128], strides = [1, 1]} : vector<2x384xf32> to vector<2x128xf32>
    %375 = arith.addf %373, %374 : vector<2x128xf32>
    %376 = arith.negf %375 : vector<2x128xf32>
    %377 = math.exp %376 : vector<2x128xf32>
    %cst_123 = arith.constant 1.000000e+00 : f32
    %378 = vector.broadcast %cst_123 : f32 to vector<2x128xf32>
    %379 = arith.addf %378, %377 : vector<2x128xf32>
    %380 = arith.divf %378, %379 : vector<2x128xf32>
    %381 = vector.extract_strided_slice %361 {offsets = [0, 256], sizes = [2, 128], strides = [1, 1]} : vector<2x384xf32> to vector<2x128xf32>
    %382 = vector.extract_strided_slice %364 {offsets = [0, 256], sizes = [2, 128], strides = [1, 1]} : vector<2x384xf32> to vector<2x128xf32>
    %383 = arith.addf %382, %5 : vector<2x128xf32>
    %384 = arith.mulf %372, %383 : vector<2x128xf32>
    %385 = arith.addf %381, %384 : vector<2x128xf32>
    %386 = math.tanh %385 : vector<2x128xf32>
    %cst_124 = arith.constant 1.000000e+00 : f32
    %387 = vector.broadcast %cst_124 : f32 to vector<2x128xf32>
    %388 = arith.subf %387, %380 : vector<2x128xf32>
    %389 = arith.mulf %388, %386 : vector<2x128xf32>
    %390 = arith.mulf %380, %356 : vector<2x128xf32>
    %391 = arith.addf %389, %390 : vector<2x128xf32>
    %c11_i32 = arith.constant 11 : i32
    %392 = arith.index_cast %c11_i32 : i32 to index
    %c0_125 = arith.constant 0 : index
    %c0_126 = arith.constant 0 : index
    %393 = vector.load %arg2[%392, %c0_125, %c0_126] : memref<16x2x8xf32, #tpu.memory_space<vmem>>, vector<1x2x8xf32>
    %394 = vector.shape_cast %393 : vector<1x2x8xf32> to vector<2x8xf32>
    %c0_127 = arith.constant 0 : index
    %c0_128 = arith.constant 0 : index
    %395 = vector.load %arg3[%c0_127, %c0_128] : memref<8x384xf32, #tpu.memory_space<vmem>>, vector<8x384xf32>
    %cst_129 = arith.constant dense<0.000000e+00> : vector<2x384xf32>
    %396 = tpu.matmul %394, %395, %cst_129 {dimension_numbers = #tpu.dot_dimension_numbers<[1], [0], [0], [1], [0, 0, 1, 1], [], []>} : vector<2x8xf32>, vector<8x384xf32>, vector<2x384xf32> -> vector<2x384xf32>
    %397 = arith.truncf %391 : vector<2x128xf32> to vector<2x128xbf16>
    %c0_130 = arith.constant 0 : index
    %c0_131 = arith.constant 0 : index
    %398 = vector.load %arg4[%c0_130, %c0_131] : memref<128x384xbf16, #tpu.memory_space<vmem>>, vector<128x384xbf16>
    %cst_132 = arith.constant dense<0.000000e+00> : vector<2x384xf32>
    %399 = tpu.matmul %397, %398, %cst_132 {dimension_numbers = #tpu.dot_dimension_numbers<[1], [0], [0], [1], [0, 0, 1, 1], [], []>} : vector<2x128xbf16>, vector<128x384xbf16>, vector<2x384xf32> -> vector<2x384xf32>
    %400 = vector.extract_strided_slice %396 {offsets = [0, 0], sizes = [2, 128], strides = [1, 1]} : vector<2x384xf32> to vector<2x128xf32>
    %401 = vector.extract_strided_slice %399 {offsets = [0, 0], sizes = [2, 128], strides = [1, 1]} : vector<2x384xf32> to vector<2x128xf32>
    %402 = arith.addf %400, %401 : vector<2x128xf32>
    %403 = arith.negf %402 : vector<2x128xf32>
    %404 = math.exp %403 : vector<2x128xf32>
    %cst_133 = arith.constant 1.000000e+00 : f32
    %405 = vector.broadcast %cst_133 : f32 to vector<2x128xf32>
    %406 = arith.addf %405, %404 : vector<2x128xf32>
    %407 = arith.divf %405, %406 : vector<2x128xf32>
    %408 = vector.extract_strided_slice %396 {offsets = [0, 128], sizes = [2, 128], strides = [1, 1]} : vector<2x384xf32> to vector<2x128xf32>
    %409 = vector.extract_strided_slice %399 {offsets = [0, 128], sizes = [2, 128], strides = [1, 1]} : vector<2x384xf32> to vector<2x128xf32>
    %410 = arith.addf %408, %409 : vector<2x128xf32>
    %411 = arith.negf %410 : vector<2x128xf32>
    %412 = math.exp %411 : vector<2x128xf32>
    %cst_134 = arith.constant 1.000000e+00 : f32
    %413 = vector.broadcast %cst_134 : f32 to vector<2x128xf32>
    %414 = arith.addf %413, %412 : vector<2x128xf32>
    %415 = arith.divf %413, %414 : vector<2x128xf32>
    %416 = vector.extract_strided_slice %396 {offsets = [0, 256], sizes = [2, 128], strides = [1, 1]} : vector<2x384xf32> to vector<2x128xf32>
    %417 = vector.extract_strided_slice %399 {offsets = [0, 256], sizes = [2, 128], strides = [1, 1]} : vector<2x384xf32> to vector<2x128xf32>
    %418 = arith.addf %417, %5 : vector<2x128xf32>
    %419 = arith.mulf %407, %418 : vector<2x128xf32>
    %420 = arith.addf %416, %419 : vector<2x128xf32>
    %421 = math.tanh %420 : vector<2x128xf32>
    %cst_135 = arith.constant 1.000000e+00 : f32
    %422 = vector.broadcast %cst_135 : f32 to vector<2x128xf32>
    %423 = arith.subf %422, %415 : vector<2x128xf32>
    %424 = arith.mulf %423, %421 : vector<2x128xf32>
    %425 = arith.mulf %415, %391 : vector<2x128xf32>
    %426 = arith.addf %424, %425 : vector<2x128xf32>
    %c12_i32 = arith.constant 12 : i32
    %427 = arith.index_cast %c12_i32 : i32 to index
    %c0_136 = arith.constant 0 : index
    %c0_137 = arith.constant 0 : index
    %428 = vector.load %arg2[%427, %c0_136, %c0_137] : memref<16x2x8xf32, #tpu.memory_space<vmem>>, vector<1x2x8xf32>
    %429 = vector.shape_cast %428 : vector<1x2x8xf32> to vector<2x8xf32>
    %c0_138 = arith.constant 0 : index
    %c0_139 = arith.constant 0 : index
    %430 = vector.load %arg3[%c0_138, %c0_139] : memref<8x384xf32, #tpu.memory_space<vmem>>, vector<8x384xf32>
    %cst_140 = arith.constant dense<0.000000e+00> : vector<2x384xf32>
    %431 = tpu.matmul %429, %430, %cst_140 {dimension_numbers = #tpu.dot_dimension_numbers<[1], [0], [0], [1], [0, 0, 1, 1], [], []>} : vector<2x8xf32>, vector<8x384xf32>, vector<2x384xf32> -> vector<2x384xf32>
    %432 = arith.truncf %426 : vector<2x128xf32> to vector<2x128xbf16>
    %c0_141 = arith.constant 0 : index
    %c0_142 = arith.constant 0 : index
    %433 = vector.load %arg4[%c0_141, %c0_142] : memref<128x384xbf16, #tpu.memory_space<vmem>>, vector<128x384xbf16>
    %cst_143 = arith.constant dense<0.000000e+00> : vector<2x384xf32>
    %434 = tpu.matmul %432, %433, %cst_143 {dimension_numbers = #tpu.dot_dimension_numbers<[1], [0], [0], [1], [0, 0, 1, 1], [], []>} : vector<2x128xbf16>, vector<128x384xbf16>, vector<2x384xf32> -> vector<2x384xf32>
    %435 = vector.extract_strided_slice %431 {offsets = [0, 0], sizes = [2, 128], strides = [1, 1]} : vector<2x384xf32> to vector<2x128xf32>
    %436 = vector.extract_strided_slice %434 {offsets = [0, 0], sizes = [2, 128], strides = [1, 1]} : vector<2x384xf32> to vector<2x128xf32>
    %437 = arith.addf %435, %436 : vector<2x128xf32>
    %438 = arith.negf %437 : vector<2x128xf32>
    %439 = math.exp %438 : vector<2x128xf32>
    %cst_144 = arith.constant 1.000000e+00 : f32
    %440 = vector.broadcast %cst_144 : f32 to vector<2x128xf32>
    %441 = arith.addf %440, %439 : vector<2x128xf32>
    %442 = arith.divf %440, %441 : vector<2x128xf32>
    %443 = vector.extract_strided_slice %431 {offsets = [0, 128], sizes = [2, 128], strides = [1, 1]} : vector<2x384xf32> to vector<2x128xf32>
    %444 = vector.extract_strided_slice %434 {offsets = [0, 128], sizes = [2, 128], strides = [1, 1]} : vector<2x384xf32> to vector<2x128xf32>
    %445 = arith.addf %443, %444 : vector<2x128xf32>
    %446 = arith.negf %445 : vector<2x128xf32>
    %447 = math.exp %446 : vector<2x128xf32>
    %cst_145 = arith.constant 1.000000e+00 : f32
    %448 = vector.broadcast %cst_145 : f32 to vector<2x128xf32>
    %449 = arith.addf %448, %447 : vector<2x128xf32>
    %450 = arith.divf %448, %449 : vector<2x128xf32>
    %451 = vector.extract_strided_slice %431 {offsets = [0, 256], sizes = [2, 128], strides = [1, 1]} : vector<2x384xf32> to vector<2x128xf32>
    %452 = vector.extract_strided_slice %434 {offsets = [0, 256], sizes = [2, 128], strides = [1, 1]} : vector<2x384xf32> to vector<2x128xf32>
    %453 = arith.addf %452, %5 : vector<2x128xf32>
    %454 = arith.mulf %442, %453 : vector<2x128xf32>
    %455 = arith.addf %451, %454 : vector<2x128xf32>
    %456 = math.tanh %455 : vector<2x128xf32>
    %cst_146 = arith.constant 1.000000e+00 : f32
    %457 = vector.broadcast %cst_146 : f32 to vector<2x128xf32>
    %458 = arith.subf %457, %450 : vector<2x128xf32>
    %459 = arith.mulf %458, %456 : vector<2x128xf32>
    %460 = arith.mulf %450, %426 : vector<2x128xf32>
    %461 = arith.addf %459, %460 : vector<2x128xf32>
    %c13_i32 = arith.constant 13 : i32
    %462 = arith.index_cast %c13_i32 : i32 to index
    %c0_147 = arith.constant 0 : index
    %c0_148 = arith.constant 0 : index
    %463 = vector.load %arg2[%462, %c0_147, %c0_148] : memref<16x2x8xf32, #tpu.memory_space<vmem>>, vector<1x2x8xf32>
    %464 = vector.shape_cast %463 : vector<1x2x8xf32> to vector<2x8xf32>
    %c0_149 = arith.constant 0 : index
    %c0_150 = arith.constant 0 : index
    %465 = vector.load %arg3[%c0_149, %c0_150] : memref<8x384xf32, #tpu.memory_space<vmem>>, vector<8x384xf32>
    %cst_151 = arith.constant dense<0.000000e+00> : vector<2x384xf32>
    %466 = tpu.matmul %464, %465, %cst_151 {dimension_numbers = #tpu.dot_dimension_numbers<[1], [0], [0], [1], [0, 0, 1, 1], [], []>} : vector<2x8xf32>, vector<8x384xf32>, vector<2x384xf32> -> vector<2x384xf32>
    %467 = arith.truncf %461 : vector<2x128xf32> to vector<2x128xbf16>
    %c0_152 = arith.constant 0 : index
    %c0_153 = arith.constant 0 : index
    %468 = vector.load %arg4[%c0_152, %c0_153] : memref<128x384xbf16, #tpu.memory_space<vmem>>, vector<128x384xbf16>
    %cst_154 = arith.constant dense<0.000000e+00> : vector<2x384xf32>
    %469 = tpu.matmul %467, %468, %cst_154 {dimension_numbers = #tpu.dot_dimension_numbers<[1], [0], [0], [1], [0, 0, 1, 1], [], []>} : vector<2x128xbf16>, vector<128x384xbf16>, vector<2x384xf32> -> vector<2x384xf32>
    %470 = vector.extract_strided_slice %466 {offsets = [0, 0], sizes = [2, 128], strides = [1, 1]} : vector<2x384xf32> to vector<2x128xf32>
    %471 = vector.extract_strided_slice %469 {offsets = [0, 0], sizes = [2, 128], strides = [1, 1]} : vector<2x384xf32> to vector<2x128xf32>
    %472 = arith.addf %470, %471 : vector<2x128xf32>
    %473 = arith.negf %472 : vector<2x128xf32>
    %474 = math.exp %473 : vector<2x128xf32>
    %cst_155 = arith.constant 1.000000e+00 : f32
    %475 = vector.broadcast %cst_155 : f32 to vector<2x128xf32>
    %476 = arith.addf %475, %474 : vector<2x128xf32>
    %477 = arith.divf %475, %476 : vector<2x128xf32>
    %478 = vector.extract_strided_slice %466 {offsets = [0, 128], sizes = [2, 128], strides = [1, 1]} : vector<2x384xf32> to vector<2x128xf32>
    %479 = vector.extract_strided_slice %469 {offsets = [0, 128], sizes = [2, 128], strides = [1, 1]} : vector<2x384xf32> to vector<2x128xf32>
    %480 = arith.addf %478, %479 : vector<2x128xf32>
    %481 = arith.negf %480 : vector<2x128xf32>
    %482 = math.exp %481 : vector<2x128xf32>
    %cst_156 = arith.constant 1.000000e+00 : f32
    %483 = vector.broadcast %cst_156 : f32 to vector<2x128xf32>
    %484 = arith.addf %483, %482 : vector<2x128xf32>
    %485 = arith.divf %483, %484 : vector<2x128xf32>
    %486 = vector.extract_strided_slice %466 {offsets = [0, 256], sizes = [2, 128], strides = [1, 1]} : vector<2x384xf32> to vector<2x128xf32>
    %487 = vector.extract_strided_slice %469 {offsets = [0, 256], sizes = [2, 128], strides = [1, 1]} : vector<2x384xf32> to vector<2x128xf32>
    %488 = arith.addf %487, %5 : vector<2x128xf32>
    %489 = arith.mulf %477, %488 : vector<2x128xf32>
    %490 = arith.addf %486, %489 : vector<2x128xf32>
    %491 = math.tanh %490 : vector<2x128xf32>
    %cst_157 = arith.constant 1.000000e+00 : f32
    %492 = vector.broadcast %cst_157 : f32 to vector<2x128xf32>
    %493 = arith.subf %492, %485 : vector<2x128xf32>
    %494 = arith.mulf %493, %491 : vector<2x128xf32>
    %495 = arith.mulf %485, %461 : vector<2x128xf32>
    %496 = arith.addf %494, %495 : vector<2x128xf32>
    %c14_i32 = arith.constant 14 : i32
    %497 = arith.index_cast %c14_i32 : i32 to index
    %c0_158 = arith.constant 0 : index
    %c0_159 = arith.constant 0 : index
    %498 = vector.load %arg2[%497, %c0_158, %c0_159] : memref<16x2x8xf32, #tpu.memory_space<vmem>>, vector<1x2x8xf32>
    %499 = vector.shape_cast %498 : vector<1x2x8xf32> to vector<2x8xf32>
    %c0_160 = arith.constant 0 : index
    %c0_161 = arith.constant 0 : index
    %500 = vector.load %arg3[%c0_160, %c0_161] : memref<8x384xf32, #tpu.memory_space<vmem>>, vector<8x384xf32>
    %cst_162 = arith.constant dense<0.000000e+00> : vector<2x384xf32>
    %501 = tpu.matmul %499, %500, %cst_162 {dimension_numbers = #tpu.dot_dimension_numbers<[1], [0], [0], [1], [0, 0, 1, 1], [], []>} : vector<2x8xf32>, vector<8x384xf32>, vector<2x384xf32> -> vector<2x384xf32>
    %502 = arith.truncf %496 : vector<2x128xf32> to vector<2x128xbf16>
    %c0_163 = arith.constant 0 : index
    %c0_164 = arith.constant 0 : index
    %503 = vector.load %arg4[%c0_163, %c0_164] : memref<128x384xbf16, #tpu.memory_space<vmem>>, vector<128x384xbf16>
    %cst_165 = arith.constant dense<0.000000e+00> : vector<2x384xf32>
    %504 = tpu.matmul %502, %503, %cst_165 {dimension_numbers = #tpu.dot_dimension_numbers<[1], [0], [0], [1], [0, 0, 1, 1], [], []>} : vector<2x128xbf16>, vector<128x384xbf16>, vector<2x384xf32> -> vector<2x384xf32>
    %505 = vector.extract_strided_slice %501 {offsets = [0, 0], sizes = [2, 128], strides = [1, 1]} : vector<2x384xf32> to vector<2x128xf32>
    %506 = vector.extract_strided_slice %504 {offsets = [0, 0], sizes = [2, 128], strides = [1, 1]} : vector<2x384xf32> to vector<2x128xf32>
    %507 = arith.addf %505, %506 : vector<2x128xf32>
    %508 = arith.negf %507 : vector<2x128xf32>
    %509 = math.exp %508 : vector<2x128xf32>
    %cst_166 = arith.constant 1.000000e+00 : f32
    %510 = vector.broadcast %cst_166 : f32 to vector<2x128xf32>
    %511 = arith.addf %510, %509 : vector<2x128xf32>
    %512 = arith.divf %510, %511 : vector<2x128xf32>
    %513 = vector.extract_strided_slice %501 {offsets = [0, 128], sizes = [2, 128], strides = [1, 1]} : vector<2x384xf32> to vector<2x128xf32>
    %514 = vector.extract_strided_slice %504 {offsets = [0, 128], sizes = [2, 128], strides = [1, 1]} : vector<2x384xf32> to vector<2x128xf32>
    %515 = arith.addf %513, %514 : vector<2x128xf32>
    %516 = arith.negf %515 : vector<2x128xf32>
    %517 = math.exp %516 : vector<2x128xf32>
    %cst_167 = arith.constant 1.000000e+00 : f32
    %518 = vector.broadcast %cst_167 : f32 to vector<2x128xf32>
    %519 = arith.addf %518, %517 : vector<2x128xf32>
    %520 = arith.divf %518, %519 : vector<2x128xf32>
    %521 = vector.extract_strided_slice %501 {offsets = [0, 256], sizes = [2, 128], strides = [1, 1]} : vector<2x384xf32> to vector<2x128xf32>
    %522 = vector.extract_strided_slice %504 {offsets = [0, 256], sizes = [2, 128], strides = [1, 1]} : vector<2x384xf32> to vector<2x128xf32>
    %523 = arith.addf %522, %5 : vector<2x128xf32>
    %524 = arith.mulf %512, %523 : vector<2x128xf32>
    %525 = arith.addf %521, %524 : vector<2x128xf32>
    %526 = math.tanh %525 : vector<2x128xf32>
    %cst_168 = arith.constant 1.000000e+00 : f32
    %527 = vector.broadcast %cst_168 : f32 to vector<2x128xf32>
    %528 = arith.subf %527, %520 : vector<2x128xf32>
    %529 = arith.mulf %528, %526 : vector<2x128xf32>
    %530 = arith.mulf %520, %496 : vector<2x128xf32>
    %531 = arith.addf %529, %530 : vector<2x128xf32>
    %c15_i32 = arith.constant 15 : i32
    %532 = arith.index_cast %c15_i32 : i32 to index
    %c0_169 = arith.constant 0 : index
    %c0_170 = arith.constant 0 : index
    %533 = vector.load %arg2[%532, %c0_169, %c0_170] : memref<16x2x8xf32, #tpu.memory_space<vmem>>, vector<1x2x8xf32>
    %534 = vector.shape_cast %533 : vector<1x2x8xf32> to vector<2x8xf32>
    %c0_171 = arith.constant 0 : index
    %c0_172 = arith.constant 0 : index
    %535 = vector.load %arg3[%c0_171, %c0_172] : memref<8x384xf32, #tpu.memory_space<vmem>>, vector<8x384xf32>
    %cst_173 = arith.constant dense<0.000000e+00> : vector<2x384xf32>
    %536 = tpu.matmul %534, %535, %cst_173 {dimension_numbers = #tpu.dot_dimension_numbers<[1], [0], [0], [1], [0, 0, 1, 1], [], []>} : vector<2x8xf32>, vector<8x384xf32>, vector<2x384xf32> -> vector<2x384xf32>
    %537 = arith.truncf %531 : vector<2x128xf32> to vector<2x128xbf16>
    %c0_174 = arith.constant 0 : index
    %c0_175 = arith.constant 0 : index
    %538 = vector.load %arg4[%c0_174, %c0_175] : memref<128x384xbf16, #tpu.memory_space<vmem>>, vector<128x384xbf16>
    %cst_176 = arith.constant dense<0.000000e+00> : vector<2x384xf32>
    %539 = tpu.matmul %537, %538, %cst_176 {dimension_numbers = #tpu.dot_dimension_numbers<[1], [0], [0], [1], [0, 0, 1, 1], [], []>} : vector<2x128xbf16>, vector<128x384xbf16>, vector<2x384xf32> -> vector<2x384xf32>
    %540 = vector.extract_strided_slice %536 {offsets = [0, 0], sizes = [2, 128], strides = [1, 1]} : vector<2x384xf32> to vector<2x128xf32>
    %541 = vector.extract_strided_slice %539 {offsets = [0, 0], sizes = [2, 128], strides = [1, 1]} : vector<2x384xf32> to vector<2x128xf32>
    %542 = arith.addf %540, %541 : vector<2x128xf32>
    %543 = arith.negf %542 : vector<2x128xf32>
    %544 = math.exp %543 : vector<2x128xf32>
    %cst_177 = arith.constant 1.000000e+00 : f32
    %545 = vector.broadcast %cst_177 : f32 to vector<2x128xf32>
    %546 = arith.addf %545, %544 : vector<2x128xf32>
    %547 = arith.divf %545, %546 : vector<2x128xf32>
    %548 = vector.extract_strided_slice %536 {offsets = [0, 128], sizes = [2, 128], strides = [1, 1]} : vector<2x384xf32> to vector<2x128xf32>
    %549 = vector.extract_strided_slice %539 {offsets = [0, 128], sizes = [2, 128], strides = [1, 1]} : vector<2x384xf32> to vector<2x128xf32>
    %550 = arith.addf %548, %549 : vector<2x128xf32>
    %551 = arith.negf %550 : vector<2x128xf32>
    %552 = math.exp %551 : vector<2x128xf32>
    %cst_178 = arith.constant 1.000000e+00 : f32
    %553 = vector.broadcast %cst_178 : f32 to vector<2x128xf32>
    %554 = arith.addf %553, %552 : vector<2x128xf32>
    %555 = arith.divf %553, %554 : vector<2x128xf32>
    %556 = vector.extract_strided_slice %536 {offsets = [0, 256], sizes = [2, 128], strides = [1, 1]} : vector<2x384xf32> to vector<2x128xf32>
    %557 = vector.extract_strided_slice %539 {offsets = [0, 256], sizes = [2, 128], strides = [1, 1]} : vector<2x384xf32> to vector<2x128xf32>
    %558 = arith.addf %557, %5 : vector<2x128xf32>
    %559 = arith.mulf %547, %558 : vector<2x128xf32>
    %560 = arith.addf %556, %559 : vector<2x128xf32>
    %561 = math.tanh %560 : vector<2x128xf32>
    %cst_179 = arith.constant 1.000000e+00 : f32
    %562 = vector.broadcast %cst_179 : f32 to vector<2x128xf32>
    %563 = arith.subf %562, %555 : vector<2x128xf32>
    %564 = arith.mulf %563, %561 : vector<2x128xf32>
    %565 = arith.mulf %555, %531 : vector<2x128xf32>
    %566 = arith.addf %564, %565 : vector<2x128xf32>
    %c16_i32 = arith.constant 16 : i32
    %c0_180 = arith.constant 0 : index
    %c0_181 = arith.constant 0 : index
    %567 = vector.load %arg7[%c0_180, %c0_181] : memref<2x128xf32, #tpu.memory_space<vmem>>, vector<2x128xf32>
    tpu.vector_store %arg7[%c0_180, %c0_181], %566 {strides = array<i32>} : memref<2x128xf32, #tpu.memory_space<vmem>>, vector<2x128xf32>,
    %c0_i32_182 = arith.constant 0 : i32
    %568 = arith.cmpi eq, %arg1, %c0_i32_182 : i32
    %569 = arith.extui %568 : i1 to i32
    %c0_i32_183 = arith.constant 0 : i32
    %570 = arith.cmpi ne, %569, %c0_i32_183 : i32
    scf.if %570 {
      %c0_184 = arith.constant 0 : index
      %c0_185 = arith.constant 0 : index
      %c0_186 = arith.constant 0 : index
      %571 = vector.load %arg6[%c0_184, %c0_185, %c0_186] : memref<1x2x128xf32, #tpu.memory_space<vmem>>, vector<1x2x128xf32>
      %572 = vector.shape_cast %571 : vector<1x2x128xf32> to vector<2x128xf32>
      %573 = vector.shape_cast %566 : vector<2x128xf32> to vector<1x2x128xf32>
      tpu.vector_store %arg6[%c0_184, %c0_185, %c0_186], %573 {strides = array<i32>} : memref<1x2x128xf32, #tpu.memory_space<vmem>>, vector<1x2x128xf32>,
    } else {
    }
    return
  }
  func.func @transform_0(%arg0: i32, %arg1: i32) -> (i32, i32, i32) {
    %c0_i32 = arith.constant 0 : i32
    %c0_i32_0 = arith.constant 0 : i32
    return %arg1, %arg0, %c0_i32 : i32, i32, i32
  }
  func.func @transform_1(%arg0: i32, %arg1: i32) -> (i32, i32) {
    %c0_i32 = arith.constant 0 : i32
    %c0_i32_0 = arith.constant 0 : i32
    %c0_i32_1 = arith.constant 0 : i32
    return %c0_i32, %c0_i32_0 : i32, i32
  }
  func.func @transform_2(%arg0: i32, %arg1: i32) -> (i32, i32) {
    %c0_i32 = arith.constant 0 : i32
    %c0_i32_0 = arith.constant 0 : i32
    %c0_i32_1 = arith.constant 0 : i32
    return %c0_i32, %c0_i32_0 : i32, i32
  }
  func.func @transform_3(%arg0: i32, %arg1: i32) -> (i32, i32) {
    %c0_i32 = arith.constant 0 : i32
    %c0_i32_0 = arith.constant 0 : i32
    %c0_i32_1 = arith.constant 0 : i32
    return %c0_i32, %c0_i32_0 : i32, i32
  }
  func.func @transform_4(%arg0: i32, %arg1: i32) -> (i32, i32, i32) {
    %c0_i32 = arith.constant 0 : i32
    %c0_i32_0 = arith.constant 0 : i32
    %c0_i32_1 = arith.constant 0 : i32
    return %c0_i32, %arg0, %c0_i32_0 : i32, i32, i32
  }
}

</mosaic_0001>

<llo_original>
// kernel: rnn_block_forward.1
$region0: #{rnn_block_forward.1}
  #allocation0 [shape = 'u32[]', space=smem, size = 0x4, offset = 0x4, fixed_abs, tag = 'smem constant byte address 0x4 - core index']
  #allocation1 [shape = 'u32[72,128]{1,0:T(1,128)}', space=vmem, size = 0x9000, scoped, tag = 'internal scratch']
  #allocation2 [shape = 'f32[2,128]{1,0:T(2,128)}', space=vmem, size = 0x400, scoped, tag = 'scratch operand']
  %s0 = inlined_call_operand.vmem [shape: f32[16,2,8], index: 0, kind: input, shape index: {}]
  %s1 = inlined_call_operand.vmem [shape: f32[8,384], index: 1, kind: input, shape index: {}]
  %s2 = inlined_call_operand.vmem [shape: bf16[128,384], index: 2, kind: input, shape index: {}]
  %s3 = inlined_call_operand.vmem [shape: f32[1,128], index: 3, kind: input, shape index: {}]
  %s4 = inlined_call_operand.hbm [shape: f32[1,2,128], index: 4, kind: output, shape index: {}]
  %s5 = sld [smem:[#allocation0]]
  $region34: #{rnn_block_forward.1} parent=0
    _
  %s7 = ssub.s32 1, %s5
  %s8 = scalar_select 0, %s7, %s5
  $region1: #{rnn_block_forward.1} parent=0
    #allocation3 [shape = 'u8[1024]{0}', space=vmem, size = 0x400, scoped, tag = 'output window, operand 0, single buffered']
    #allocation4 [shape = 's32[1]{0}', space=sflag, size = 0x4, scoped, tag = 'scoped memory for rnn_block_forward.1']
    %9 = vsyncpa [#allocation4], 0
    // Predicated region
    $region2: #{rnn_block_forward.1} parent=1 // pred_check
      _
    $region3: #{rnn_block_forward.1} parent=1 // pred_check_branch
      %11 = sbr.rel (0) target = $region5
    $region4: #{rnn_block_forward.1} parent=1 // pred_region
      _
    $region5: #{rnn_block_forward.1} parent=1 // pred_fallthru
      _
    // Predicated region
    $region6: #{rnn_block_forward.1} parent=1 // pred_check
      _
    $region7: #{rnn_block_forward.1} parent=1 // pred_check_branch
      %13 = sbr.rel (0) target = $region9
    $region8: #{rnn_block_forward.1} parent=1 // pred_region
      _
    $region9: #{rnn_block_forward.1} parent=1 // pred_fallthru
      _
    // Predicated region
    $region10: #{rnn_block_forward.1} parent=1 // pred_check
      _
    $region11: #{rnn_block_forward.1} parent=1 // pred_check_branch
      %15 = sbr.rel (0) target = $region13
    $region12: #{rnn_block_forward.1} parent=1 // pred_region
      _
    $region13: #{rnn_block_forward.1} parent=1 // pred_fallthru
      _
    // Predicated region
    $region14: #{rnn_block_forward.1} parent=1 // pred_check
      _
    $region15: #{rnn_block_forward.1} parent=1 // pred_check_branch
      %17 = sbr.rel (0) target = $region17
    $region16: #{rnn_block_forward.1} parent=1 // pred_region
      _
    $region17: #{rnn_block_forward.1} parent=1 // pred_fallthru
      _
    %p18 = scmp.eq.s32.totalorder 0, 0
    // Predicated region
    $region18: #{rnn_block_forward.1} parent=1 // pred_check
      %p19 = pneg %p18
    $region19: #{rnn_block_forward.1} parent=1 // pred_check_branch
      %21 = sbr.rel (%p19) target = $region21
    $region20: #{rnn_block_forward.1} parent=1 // pred_region
      %22 = vst [vmem:[#allocation2] sm:$0x3] 0.0
    $region21: #{rnn_block_forward.1} parent=1 // pred_fallthru
      _
    %v23 = vld [vmem:[%s3] sm:$0x1]
    %v25 = vperm.slane %v23, 0
    %v27 = vld [vmem:[#allocation2] sm:$0x3]
    %v28 = vld [vmem:[%s0] sm:$0x3]
    %v29 = vld [vmem:[%s1] sm:$0xff]
    %v30 = vld [vmem:[%s1 + $0x8] sm:$0xff]
    %v31 = vld [vmem:[%s1 + $0x10] sm:$0xff]
    %vm32 = vcmask 64512
    %v34 = vsel %vm32, %v28, 0
    %36 = vmatpush.msra.mxu0 0.0
    %37 = vmatpush.msra.mxu0 0.0
    %38 = vmatpush.msra.mxu0 0.0
    %39 = vmatpush.msra.mxu0 0.0
    %40 = vmatpush.msra.mxu0 0.0
    %41 = vmatpush.msra.mxu0 0.0
    %42 = vmatpush.msra.mxu0 0.0
    %43 = vmatpush.msra.mxu0 0.0
    %44 = vmatpush.msra.mxu0 0.0
    %45 = vmatpush.msra.mxu0 0.0
    %46 = vmatpush.msra.mxu0 0.0
    %47 = vmatpush.msra.mxu0 0.0
    %48 = vmatpush.msra.mxu0 0.0
    %49 = vmatpush.msra.mxu0 0.0
    %50 = vmatpush.msra.mxu0 0.0
    %51 = vmatpush.msra.mxu0 %v29
    %52 = vmatmul.f32.gmra.mxu0 %v34
    %v53 = vpop.f32.mrf.mxu0
    %v54 = vadd.f32 0.0, %v53
    %55 = vdwg.mxu0
    %56 = vmatpush.msra.mxu0 0.0
    %57 = vmatpush.msra.mxu0 0.0
    %58 = vmatpush.msra.mxu0 0.0
    %59 = vmatpush.msra.mxu0 0.0
    %60 = vmatpush.msra.mxu0 0.0
    %61 = vmatpush.msra.mxu0 0.0
    %62 = vmatpush.msra.mxu0 0.0
    %63 = vmatpush.msra.mxu0 0.0
    %64 = vmatpush.msra.mxu0 0.0
    %65 = vmatpush.msra.mxu0 0.0
    %66 = vmatpush.msra.mxu0 0.0
    %67 = vmatpush.msra.mxu0 0.0
    %68 = vmatpush.msra.mxu0 0.0
    %69 = vmatpush.msra.mxu0 0.0
    %70 = vmatpush.msra.mxu0 0.0
    %71 = vmatpush.msra.mxu0 %v30
    %72 = vmatmul.f32.gmra.mxu0 %v34
    %v73 = vpop.f32.mrf.mxu0
    %v74 = vadd.f32 0.0, %v73
    %75 = vdwg.mxu0
    %76 = vmatpush.msra.mxu0 0.0
    %77 = vmatpush.msra.mxu0 0.0
    %78 = vmatpush.msra.mxu0 0.0
    %79 = vmatpush.msra.mxu0 0.0
    %80 = vmatpush.msra.mxu0 0.0
    %81 = vmatpush.msra.mxu0 0.0
    %82 = vmatpush.msra.mxu0 0.0
    %83 = vmatpush.msra.mxu0 0.0
    %84 = vmatpush.msra.mxu0 0.0
    %85 = vmatpush.msra.mxu0 0.0
    %86 = vmatpush.msra.mxu0 0.0
    %87 = vmatpush.msra.mxu0 0.0
    %88 = vmatpush.msra.mxu0 0.0
    %89 = vmatpush.msra.mxu0 0.0
    %90 = vmatpush.msra.mxu0 0.0
    %91 = vmatpush.msra.mxu0 %v31
    %92 = vmatmul.f32.gmra.mxu0 %v34
    %v93 = vpop.f32.mrf.mxu0
    %v94 = vadd.f32 0.0, %v93
    %95 = vdwg.mxu0
    %v96 = vpack.c.bf16 %v27, %v27
    %v97 = vld [vmem:[%s2] sm:$0xff]
    %v98 = vld [vmem:[%s2 + $0x8] sm:$0xf]
    %v99 = vld [vmem:[%s2 + $0xc] sm:$0xff]
    %v100 = vld [vmem:[%s2 + $0x14] sm:$0xf]
    %v101 = vld [vmem:[%s2 + $0x18] sm:$0xff]
    %v102 = vld [vmem:[%s2 + $0x20] sm:$0xf]
    %v103 = vld [vmem:[%s2 + $0x24] sm:$0xff]
    %v104 = vld [vmem:[%s2 + $0x2c] sm:$0xf]
    %v105 = vld [vmem:[%s2 + $0x30] sm:$0xff]
    %v106 = vld [vmem:[%s2 + $0x38] sm:$0xf]
    %v107 = vld [vmem:[%s2 + $0x3c] sm:$0xff]
    %v108 = vld [vmem:[%s2 + $0x44] sm:$0xf]
    %v109 = vld [vmem:[%s2 + $0x48] sm:$0xff]
    %v110 = vld [vmem:[%s2 + $0x50] sm:$0xf]
    %v111 = vld [vmem:[%s2 + $0x54] sm:$0xff]
    %v112 = vld [vmem:[%s2 + $0x5c] sm:$0xf]
    %v113 = vld [vmem:[%s2 + $0x60] sm:$0xff]
    %v114 = vld [vmem:[%s2 + $0x68] sm:$0xf]
    %v115 = vld [vmem:[%s2 + $0x6c] sm:$0xff]
    %v116 = vld [vmem:[%s2 + $0x74] sm:$0xf]
    %v117 = vld [vmem:[%s2 + $0x78] sm:$0xff]
    %v118 = vld [vmem:[%s2 + $0x80] sm:$0xf]
    %v119 = vld [vmem:[%s2 + $0x84] sm:$0xff]
    %v120 = vld [vmem:[%s2 + $0x8c] sm:$0xf]
    %v121 = vld [vmem:[%s2 + $0x90] sm:$0xff]
    %v122 = vld [vmem:[%s2 + $0x98] sm:$0xf]
    %v123 = vld [vmem:[%s2 + $0x9c] sm:$0xff]
    %v124 = vld [vmem:[%s2 + $0xa4] sm:$0xf]
    %v125 = vld [vmem:[%s2 + $0xa8] sm:$0xff]
    %v126 = vld [vmem:[%s2 + $0xb0] sm:$0xf]
    %v127 = vld [vmem:[%s2 + $0xb4] sm:$0xff]
    %v128 = vld [vmem:[%s2 + $0xbc] sm:$0xf]
    %v161 = vunpack.c.l.b16 %v97
    %v162 = vunpack.c.h.b16 %v97
    %v163 = vunpack.c.l.b16 %v98
    %v164 = vunpack.c.l.b16 %v99
    %v165 = vunpack.c.h.b16 %v99
    %v166 = vunpack.c.l.b16 %v100
    %v167 = vunpack.c.l.b16 %v101
    %v168 = vunpack.c.h.b16 %v101
    %v169 = vunpack.c.l.b16 %v102
    %v170 = vunpack.c.l.b16 %v103
    %v171 = vunpack.c.h.b16 %v103
    %v172 = vunpack.c.l.b16 %v104
    %v173 = vunpack.c.l.b16 %v105
    %v174 = vunpack.c.h.b16 %v105
    %v175 = vunpack.c.l.b16 %v106
    %v176 = vunpack.c.l.b16 %v107
    %v177 = vunpack.c.h.b16 %v107
    %v178 = vunpack.c.l.b16 %v108
    %v179 = vunpack.c.l.b16 %v109
    %v180 = vunpack.c.h.b16 %v109
    %v181 = vunpack.c.l.b16 %v110
    %v182 = vunpack.c.l.b16 %v111
    %v183 = vunpack.c.h.b16 %v111
    %v184 = vunpack.c.l.b16 %v112
    %v185 = vunpack.c.l.b16 %v113
    %v186 = vunpack.c.h.b16 %v113
    %v187 = vunpack.c.l.b16 %v114
    %v188 = vunpack.c.l.b16 %v115
    %v189 = vunpack.c.h.b16 %v115
    %v190 = vunpack.c.l.b16 %v116
    %v191 = vunpack.c.l.b16 %v117
    %v192 = vunpack.c.h.b16 %v117
    %v193 = vunpack.c.l.b16 %v118
    %v194 = vunpack.c.l.b16 %v119
    %v195 = vunpack.c.h.b16 %v119
    %v196 = vunpack.c.l.b16 %v120
    %v197 = vunpack.c.l.b16 %v121
    %v198 = vunpack.c.h.b16 %v121
    %v199 = vunpack.c.l.b16 %v122
    %v200 = vunpack.c.l.b16 %v123
    %v201 = vunpack.c.h.b16 %v123
    %v202 = vunpack.c.l.b16 %v124
    %v203 = vunpack.c.l.b16 %v125
    %v204 = vunpack.c.h.b16 %v125
    %v205 = vunpack.c.l.b16 %v126
    %v206 = vunpack.c.l.b16 %v127
    %v207 = vunpack.c.h.b16 %v127
    %v208 = vunpack.c.l.b16 %v128
    %v209 = vpack.c.b16 %v164, %v161
    %v210 = vpack.c.b16 %v165, %v162
    %v211 = vpack.c.b16 %v166, %v163
    %v212 = vpack.c.b16 %v170, %v167
    %v213 = vpack.c.b16 %v171, %v168
    %v214 = vpack.c.b16 %v172, %v169
    %v215 = vpack.c.b16 %v176, %v173
    %v216 = vpack.c.b16 %v177, %v174
    %v217 = vpack.c.b16 %v178, %v175
    %v218 = vpack.c.b16 %v182, %v179
    %v219 = vpack.c.b16 %v183, %v180
    %v220 = vpack.c.b16 %v184, %v181
    %v221 = vpack.c.b16 %v188, %v185
    %v222 = vpack.c.b16 %v189, %v186
    %v223 = vpack.c.b16 %v190, %v187
    %v224 = vpack.c.b16 %v194, %v191
    %v225 = vpack.c.b16 %v195, %v192
    %v226 = vpack.c.b16 %v196, %v193
    %v227 = vpack.c.b16 %v200, %v197
    %v228 = vpack.c.b16 %v201, %v198
    %v229 = vpack.c.b16 %v202, %v199
    %v230 = vpack.c.b16 %v206, %v203
    %v231 = vpack.c.b16 %v207, %v204
    %v232 = vpack.c.b16 %v208, %v205
    %257 = vmatpush.bf16.msra.mxu0 %v230
    %258 = vmatpush.bf16.msra.mxu0 %v227
    %259 = vmatpush.bf16.msra.mxu0 %v224
    %260 = vmatpush.bf16.msra.mxu0 %v221
    %261 = vmatpush.bf16.msra.mxu0 %v218
    %262 = vmatpush.bf16.msra.mxu0 %v215
    %263 = vmatpush.bf16.msra.mxu0 %v212
    %264 = vmatpush.bf16.msra.mxu0 %v209
    %265 = vmatmul.bf16.gmra.mxu0 %v96
    %v266 = vpop.f32.mrf.mxu0
    %v267 = vadd.f32 0.0, %v266
    %v268 = vpop.f32.mrf.mxu0
    %269 = vdwg.mxu0
    %270 = vmatpush.bf16.msra.mxu0 %v231
    %271 = vmatpush.bf16.msra.mxu0 %v228
    %272 = vmatpush.bf16.msra.mxu0 %v225
    %273 = vmatpush.bf16.msra.mxu0 %v222
    %274 = vmatpush.bf16.msra.mxu0 %v219
    %275 = vmatpush.bf16.msra.mxu0 %v216
    %276 = vmatpush.bf16.msra.mxu0 %v213
    %277 = vmatpush.bf16.msra.mxu0 %v210
    %278 = vmatmul.bf16.gmra.mxu0 %v96
    %v279 = vpop.f32.mrf.mxu0
    %v280 = vadd.f32 0.0, %v279
    %v281 = vpop.f32.mrf.mxu0
    %282 = vdwg.mxu0
    %283 = vmatpush.bf16.msra.mxu0 %v232
    %284 = vmatpush.bf16.msra.mxu0 %v229
    %285 = vmatpush.bf16.msra.mxu0 %v226
    %286 = vmatpush.bf16.msra.mxu0 %v223
    %287 = vmatpush.bf16.msra.mxu0 %v220
    %288 = vmatpush.bf16.msra.mxu0 %v217
    %289 = vmatpush.bf16.msra.mxu0 %v214
    %290 = vmatpush.bf16.msra.mxu0 %v211
    %291 = vmatmul.bf16.gmra.mxu0 %v96
    %v292 = vpop.f32.mrf.mxu0
    %v293 = vadd.f32 0.0, %v292
    %v294 = vpop.f32.mrf.mxu0
    %295 = vdwg.mxu0
    %v296 = vadd.f32 %v54, %v267
    %v297 = vxor.u32 %v296, 2147483648
    %v298 = vmul.f32 %v297, 1.442695
    %v299 = vpow.pop %v298
    %v300 = vadd.f32 %v299, 1.0
    %v301 = vrcp.pop %v300
    %v302 = vmul.f32 %v300, %v301
    %v303 = vsub.f32 1.0, %v302
    %v304 = vmul.f32 %v301, %v303
    %v305 = vadd.f32 %v301, %v304
    %vm306 = vweird.f32 %v300
    %vm307 = vweird.f32 %v301
    %vm308 = vmor %vm306, %vm307
    %v309 = vsel %vm308, %v301, %v305
    %v310 = vand.u32 2147483647, %v300
    %vm311 = vcmp.eq.f32.partialorder %v310, 8.507059e+37
    %v312 = vand.u32 %v300, 2147483648
    %v313 = vor.u32 1.1754944e-38, %v312
    %v314 = vsel %vm311, %v313, %v309
    %v315 = vmul.f32 1.0, %v314
    %v316 = vadd.f32 %v74, %v280
    %v317 = vxor.u32 %v316, 2147483648
    %v318 = vmul.f32 %v317, 1.442695
    %v319 = vpow.pop %v318
    %v320 = vadd.f32 %v319, 1.0
    %v321 = vrcp.pop %v320
    %v322 = vmul.f32 %v320, %v321
    %v323 = vsub.f32 1.0, %v322
    %v324 = vmul.f32 %v321, %v323
    %v325 = vadd.f32 %v321, %v324
    %vm326 = vweird.f32 %v320
    %vm327 = vweird.f32 %v321
    %vm328 = vmor %vm326, %vm327
    %v329 = vsel %vm328, %v321, %v325
    %v330 = vand.u32 2147483647, %v320
    %vm331 = vcmp.eq.f32.partialorder %v330, 8.507059e+37
    %v332 = vand.u32 %v320, 2147483648
    %v333 = vor.u32 1.1754944e-38, %v332
    %v334 = vsel %vm331, %v333, %v329
    %v335 = vmul.f32 1.0, %v334
    %v336 = vadd.f32 %v293, %v25
    %v337 = vmul.f32 %v315, %v336
    %v338 = vadd.f32 %v94, %v337
    %v339 = vtanh.pop %v338
    %v340 = vsub.f32 1.0, %v335
    %v341 = vmul.f32 %v340, %v339
    %v342 = vmul.f32 %v335, %v27
    %v343 = vadd.f32 %v341, %v342
    %s344 = scalar_lea.vmem %s0, 2
    %v345 = vld [vmem:[%s344] sm:$0x3]
    %v347 = vsel %vm32, %v345, 0
    %349 = vmatpush.msra.mxu0 0.0
    %350 = vmatpush.msra.mxu0 0.0
    %351 = vmatpush.msra.mxu0 0.0
    %352 = vmatpush.msra.mxu0 0.0
    %353 = vmatpush.msra.mxu0 0.0
    %354 = vmatpush.msra.mxu0 0.0
    %355 = vmatpush.msra.mxu0 0.0
    %356 = vmatpush.msra.mxu0 0.0
    %357 = vmatpush.msra.mxu0 0.0
    %358 = vmatpush.msra.mxu0 0.0
    %359 = vmatpush.msra.mxu0 0.0
    %360 = vmatpush.msra.mxu0 0.0
    %361 = vmatpush.msra.mxu0 0.0
    %362 = vmatpush.msra.mxu0 0.0
    %363 = vmatpush.msra.mxu0 0.0
    %364 = vmatpush.msra.mxu0 %v29
    %365 = vmatmul.f32.gmra.mxu0 %v347
    %v366 = vpop.f32.mrf.mxu0
    %v367 = vadd.f32 0.0, %v366
    %368 = vdwg.mxu0
    %369 = vmatpush.msra.mxu0 0.0
    %370 = vmatpush.msra.mxu0 0.0
    %371 = vmatpush.msra.mxu0 0.0
    %372 = vmatpush.msra.mxu0 0.0
    %373 = vmatpush.msra.mxu0 0.0
    %374 = vmatpush.msra.mxu0 0.0
    %375 = vmatpush.msra.mxu0 0.0
    %376 = vmatpush.msra.mxu0 0.0
    %377 = vmatpush.msra.mxu0 0.0
    %378 = vmatpush.msra.mxu0 0.0
    %379 = vmatpush.msra.mxu0 0.0
    %380 = vmatpush.msra.mxu0 0.0
    %381 = vmatpush.msra.mxu0 0.0
    %382 = vmatpush.msra.mxu0 0.0
    %383 = vmatpush.msra.mxu0 0.0
    %384 = vmatpush.msra.mxu0 %v30
    %385 = vmatmul.f32.gmra.mxu0 %v347
    %v386 = vpop.f32.mrf.mxu0
    %v387 = vadd.f32 0.0, %v386
    %388 = vdwg.mxu0
    %389 = vmatpush.msra.mxu0 0.0
    %390 = vmatpush.msra.mxu0 0.0
    %391 = vmatpush.msra.mxu0 0.0
    %392 = vmatpush.msra.mxu0 0.0
    %393 = vmatpush.msra.mxu0 0.0
    %394 = vmatpush.msra.mxu0 0.0
    %395 = vmatpush.msra.mxu0 0.0
    %396 = vmatpush.msra.mxu0 0.0
    %397 = vmatpush.msra.mxu0 0.0
    %398 = vmatpush.msra.mxu0 0.0
    %399 = vmatpush.msra.mxu0 0.0
    %400 = vmatpush.msra.mxu0 0.0
    %401 = vmatpush.msra.mxu0 0.0
    %402 = vmatpush.msra.mxu0 0.0
    %403 = vmatpush.msra.mxu0 0.0
    %404 = vmatpush.msra.mxu0 %v31
    %405 = vmatmul.f32.gmra.mxu0 %v347
    %v406 = vpop.f32.mrf.mxu0
    %v407 = vadd.f32 0.0, %v406
    %408 = vdwg.mxu0
    %v409 = vpack.c.bf16 %v343, %v343
    %410 = vmatpush.bf16.msra.mxu0 %v230
    %411 = vmatpush.bf16.msra.mxu0 %v227
    %412 = vmatpush.bf16.msra.mxu0 %v224
    %413 = vmatpush.bf16.msra.mxu0 %v221
    %414 = vmatpush.bf16.msra.mxu0 %v218
    %415 = vmatpush.bf16.msra.mxu0 %v215
    %416 = vmatpush.bf16.msra.mxu0 %v212
    %417 = vmatpush.bf16.msra.mxu0 %v209
    %418 = vmatmul.bf16.gmra.mxu0 %v409
    %v419 = vpop.f32.mrf.mxu0
    %v420 = vadd.f32 0.0, %v419
    %v421 = vpop.f32.mrf.mxu0
    %422 = vdwg.mxu0
    %423 = vmatpush.bf16.msra.mxu0 %v231
    %424 = vmatpush.bf16.msra.mxu0 %v228
    %425 = vmatpush.bf16.msra.mxu0 %v225
    %426 = vmatpush.bf16.msra.mxu0 %v222
    %427 = vmatpush.bf16.msra.mxu0 %v219
    %428 = vmatpush.bf16.msra.mxu0 %v216
    %429 = vmatpush.bf16.msra.mxu0 %v213
    %430 = vmatpush.bf16.msra.mxu0 %v210
    %431 = vmatmul.bf16.gmra.mxu0 %v409
    %v432 = vpop.f32.mrf.mxu0
    %v433 = vadd.f32 0.0, %v432
    %v434 = vpop.f32.mrf.mxu0
    %435 = vdwg.mxu0
    %436 = vmatpush.bf16.msra.mxu0 %v232
    %437 = vmatpush.bf16.msra.mxu0 %v229
    %438 = vmatpush.bf16.msra.mxu0 %v226
    %439 = vmatpush.bf16.msra.mxu0 %v223
    %440 = vmatpush.bf16.msra.mxu0 %v220
    %441 = vmatpush.bf16.msra.mxu0 %v217
    %442 = vmatpush.bf16.msra.mxu0 %v214
    %443 = vmatpush.bf16.msra.mxu0 %v211
    %444 = vmatmul.bf16.gmra.mxu0 %v409
    %v445 = vpop.f32.mrf.mxu0
    %v446 = vadd.f32 0.0, %v445
    %v447 = vpop.f32.mrf.mxu0
    %448 = vdwg.mxu0
    %v449 = vadd.f32 %v367, %v420
    %v450 = vxor.u32 %v449, 2147483648
    %v451 = vmul.f32 %v450, 1.442695
    %v452 = vpow.pop %v451
    %v453 = vadd.f32 %v452, 1.0
    %v454 = vrcp.pop %v453
    %v455 = vmul.f32 %v453, %v454
    %v456 = vsub.f32 1.0, %v455
    %v457 = vmul.f32 %v454, %v456
    %v458 = vadd.f32 %v454, %v457
    %vm459 = vweird.f32 %v453
    %vm460 = vweird.f32 %v454
    %vm461 = vmor %vm459, %vm460
    %v462 = vsel %vm461, %v454, %v458
    %v463 = vand.u32 2147483647, %v453
    %vm464 = vcmp.eq.f32.partialorder %v463, 8.507059e+37
    %v465 = vand.u32 %v453, 2147483648
    %v466 = vor.u32 1.1754944e-38, %v465
    %v467 = vsel %vm464, %v466, %v462
    %v468 = vmul.f32 1.0, %v467
    %v469 = vadd.f32 %v387, %v433
    %v470 = vxor.u32 %v469, 2147483648
    %v471 = vmul.f32 %v470, 1.442695
    %v472 = vpow.pop %v471
    %v473 = vadd.f32 %v472, 1.0
    %v474 = vrcp.pop %v473
    %v475 = vmul.f32 %v473, %v474
    %v476 = vsub.f32 1.0, %v475
    %v477 = vmul.f32 %v474, %v476
    %v478 = vadd.f32 %v474, %v477
    %vm479 = vweird.f32 %v473
    %vm480 = vweird.f32 %v474
    %vm481 = vmor %vm479, %vm480
    %v482 = vsel %vm481, %v474, %v478
    %v483 = vand.u32 2147483647, %v473
    %vm484 = vcmp.eq.f32.partialorder %v483, 8.507059e+37
    %v485 = vand.u32 %v473, 2147483648
    %v486 = vor.u32 1.1754944e-38, %v485
    %v487 = vsel %vm484, %v486, %v482
    %v488 = vmul.f32 1.0, %v487
    %v489 = vadd.f32 %v446, %v25
    %v490 = vmul.f32 %v468, %v489
    %v491 = vadd.f32 %v407, %v490
    %v492 = vtanh.pop %v491
    %v493 = vsub.f32 1.0, %v488
    %v494 = vmul.f32 %v493, %v492
    %v495 = vmul.f32 %v488, %v343
    %v496 = vadd.f32 %v494, %v495
    %s497 = scalar_lea.vmem %s0, 4
    %v498 = vld [vmem:[%s497] sm:$0x3]
    %v500 = vsel %vm32, %v498, 0
    %502 = vmatpush.msra.mxu0 0.0
    %503 = vmatpush.msra.mxu0 0.0
    %504 = vmatpush.msra.mxu0 0.0
    %505 = vmatpush.msra.mxu0 0.0
    %506 = vmatpush.msra.mxu0 0.0
    %507 = vmatpush.msra.mxu0 0.0
    %508 = vmatpush.msra.mxu0 0.0
    %509 = vmatpush.msra.mxu0 0.0
    %510 = vmatpush.msra.mxu0 0.0
    %511 = vmatpush.msra.mxu0 0.0
    %512 = vmatpush.msra.mxu0 0.0
    %513 = vmatpush.msra.mxu0 0.0
    %514 = vmatpush.msra.mxu0 0.0
    %515 = vmatpush.msra.mxu0 0.0
    %516 = vmatpush.msra.mxu0 0.0
    %517 = vmatpush.msra.mxu0 %v29
    %518 = vmatmul.f32.gmra.mxu0 %v500
    %v519 = vpop.f32.mrf.mxu0
    %v520 = vadd.f32 0.0, %v519
    %521 = vdwg.mxu0
    %522 = vmatpush.msra.mxu0 0.0
    %523 = vmatpush.msra.mxu0 0.0
    %524 = vmatpush.msra.mxu0 0.0
    %525 = vmatpush.msra.mxu0 0.0
    %526 = vmatpush.msra.mxu0 0.0
    %527 = vmatpush.msra.mxu0 0.0
    %528 = vmatpush.msra.mxu0 0.0
    %529 = vmatpush.msra.mxu0 0.0
    %530 = vmatpush.msra.mxu0 0.0
    %531 = vmatpush.msra.mxu0 0.0
    %532 = vmatpush.msra.mxu0 0.0
    %533 = vmatpush.msra.mxu0 0.0
    %534 = vmatpush.msra.mxu0 0.0
    %535 = vmatpush.msra.mxu0 0.0
    %536 = vmatpush.msra.mxu0 0.0
    %537 = vmatpush.msra.mxu0 %v30
    %538 = vmatmul.f32.gmra.mxu0 %v500
    %v539 = vpop.f32.mrf.mxu0
    %v540 = vadd.f32 0.0, %v539
    %541 = vdwg.mxu0
    %542 = vmatpush.msra.mxu0 0.0
    %543 = vmatpush.msra.mxu0 0.0
    %544 = vmatpush.msra.mxu0 0.0
    %545 = vmatpush.msra.mxu0 0.0
    %546 = vmatpush.msra.mxu0 0.0
    %547 = vmatpush.msra.mxu0 0.0
    %548 = vmatpush.msra.mxu0 0.0
    %549 = vmatpush.msra.mxu0 0.0
    %550 = vmatpush.msra.mxu0 0.0
    %551 = vmatpush.msra.mxu0 0.0
    %552 = vmatpush.msra.mxu0 0.0
    %553 = vmatpush.msra.mxu0 0.0
    %554 = vmatpush.msra.mxu0 0.0
    %555 = vmatpush.msra.mxu0 0.0
    %556 = vmatpush.msra.mxu0 0.0
    %557 = vmatpush.msra.mxu0 %v31
    %558 = vmatmul.f32.gmra.mxu0 %v500
    %v559 = vpop.f32.mrf.mxu0
    %v560 = vadd.f32 0.0, %v559
    %561 = vdwg.mxu0
    %v562 = vpack.c.bf16 %v496, %v496
    %563 = vmatpush.bf16.msra.mxu0 %v230
    %564 = vmatpush.bf16.msra.mxu0 %v227
    %565 = vmatpush.bf16.msra.mxu0 %v224
    %566 = vmatpush.bf16.msra.mxu0 %v221
    %567 = vmatpush.bf16.msra.mxu0 %v218
    %568 = vmatpush.bf16.msra.mxu0 %v215
    %569 = vmatpush.bf16.msra.mxu0 %v212
    %570 = vmatpush.bf16.msra.mxu0 %v209
    %571 = vmatmul.bf16.gmra.mxu0 %v562
    %v572 = vpop.f32.mrf.mxu0
    %v573 = vadd.f32 0.0, %v572
    %v574 = vpop.f32.mrf.mxu0
    %575 = vdwg.mxu0
    %576 = vmatpush.bf16.msra.mxu0 %v231
    %577 = vmatpush.bf16.msra.mxu0 %v228
    %578 = vmatpush.bf16.msra.mxu0 %v225
    %579 = vmatpush.bf16.msra.mxu0 %v222
    %580 = vmatpush.bf16.msra.mxu0 %v219
    %581 = vmatpush.bf16.msra.mxu0 %v216
    %582 = vmatpush.bf16.msra.mxu0 %v213
    %583 = vmatpush.bf16.msra.mxu0 %v210
    %584 = vmatmul.bf16.gmra.mxu0 %v562
    %v585 = vpop.f32.mrf.mxu0
    %v586 = vadd.f32 0.0, %v585
    %v587 = vpop.f32.mrf.mxu0
    %588 = vdwg.mxu0
    %589 = vmatpush.bf16.msra.mxu0 %v232
    %590 = vmatpush.bf16.msra.mxu0 %v229
    %591 = vmatpush.bf16.msra.mxu0 %v226
    %592 = vmatpush.bf16.msra.mxu0 %v223
    %593 = vmatpush.bf16.msra.mxu0 %v220
    %594 = vmatpush.bf16.msra.mxu0 %v217
    %595 = vmatpush.bf16.msra.mxu0 %v214
    %596 = vmatpush.bf16.msra.mxu0 %v211
    %597 = vmatmul.bf16.gmra.mxu0 %v562
    %v598 = vpop.f32.mrf.mxu0
    %v599 = vadd.f32 0.0, %v598
    %v600 = vpop.f32.mrf.mxu0
    %601 = vdwg.mxu0
    %v602 = vadd.f32 %v520, %v573
    %v603 = vxor.u32 %v602, 2147483648
    %v604 = vmul.f32 %v603, 1.442695
    %v605 = vpow.pop %v604
    %v606 = vadd.f32 %v605, 1.0
    %v607 = vrcp.pop %v606
    %v608 = vmul.f32 %v606, %v607
    %v609 = vsub.f32 1.0, %v608
    %v610 = vmul.f32 %v607, %v609
    %v611 = vadd.f32 %v607, %v610
    %vm612 = vweird.f32 %v606
    %vm613 = vweird.f32 %v607
    %vm614 = vmor %vm612, %vm613
    %v615 = vsel %vm614, %v607, %v611
    %v616 = vand.u32 2147483647, %v606
    %vm617 = vcmp.eq.f32.partialorder %v616, 8.507059e+37
    %v618 = vand.u32 %v606, 2147483648
    %v619 = vor.u32 1.1754944e-38, %v618
    %v620 = vsel %vm617, %v619, %v615
    %v621 = vmul.f32 1.0, %v620
    %v622 = vadd.f32 %v540, %v586
    %v623 = vxor.u32 %v622, 2147483648
    %v624 = vmul.f32 %v623, 1.442695
    %v625 = vpow.pop %v624
    %v626 = vadd.f32 %v625, 1.0
    %v627 = vrcp.pop %v626
    %v628 = vmul.f32 %v626, %v627
    %v629 = vsub.f32 1.0, %v628
    %v630 = vmul.f32 %v627, %v629
    %v631 = vadd.f32 %v627, %v630
    %vm632 = vweird.f32 %v626
    %vm633 = vweird.f32 %v627
    %vm634 = vmor %vm632, %vm633
    %v635 = vsel %vm634, %v627, %v631
    %v636 = vand.u32 2147483647, %v626
    %vm637 = vcmp.eq.f32.partialorder %v636, 8.507059e+37
    %v638 = vand.u32 %v626, 2147483648
    %v639 = vor.u32 1.1754944e-38, %v638
    %v640 = vsel %vm637, %v639, %v635
    %v641 = vmul.f32 1.0, %v640
    %v642 = vadd.f32 %v599, %v25
    %v643 = vmul.f32 %v621, %v642
    %v644 = vadd.f32 %v560, %v643
    %v645 = vtanh.pop %v644
    %v646 = vsub.f32 1.0, %v641
    %v647 = vmul.f32 %v646, %v645
    %v648 = vmul.f32 %v641, %v496
    %v649 = vadd.f32 %v647, %v648
    %s650 = scalar_lea.vmem %s0, 6
    %v651 = vld [vmem:[%s650] sm:$0x3]
    %v653 = vsel %vm32, %v651, 0
    %655 = vmatpush.msra.mxu0 0.0
    %656 = vmatpush.msra.mxu0 0.0
    %657 = vmatpush.msra.mxu0 0.0
    %658 = vmatpush.msra.mxu0 0.0
    %659 = vmatpush.msra.mxu0 0.0
    %660 = vmatpush.msra.mxu0 0.0
    %661 = vmatpush.msra.mxu0 0.0
    %662 = vmatpush.msra.mxu0 0.0
    %663 = vmatpush.msra.mxu0 0.0
    %664 = vmatpush.msra.mxu0 0.0
    %665 = vmatpush.msra.mxu0 0.0
    %666 = vmatpush.msra.mxu0 0.0
    %667 = vmatpush.msra.mxu0 0.0
    %668 = vmatpush.msra.mxu0 0.0
    %669 = vmatpush.msra.mxu0 0.0
    %670 = vmatpush.msra.mxu0 %v29
    %671 = vmatmul.f32.gmra.mxu0 %v653
    %v672 = vpop.f32.mrf.mxu0
    %v673 = vadd.f32 0.0, %v672
    %674 = vdwg.mxu0
    %675 = vmatpush.msra.mxu0 0.0
    %676 = vmatpush.msra.mxu0 0.0
    %677 = vmatpush.msra.mxu0 0.0
    %678 = vmatpush.msra.mxu0 0.0
    %679 = vmatpush.msra.mxu0 0.0
    %680 = vmatpush.msra.mxu0 0.0
    %681 = vmatpush.msra.mxu0 0.0
    %682 = vmatpush.msra.mxu0 0.0
    %683 = vmatpush.msra.mxu0 0.0
    %684 = vmatpush.msra.mxu0 0.0
    %685 = vmatpush.msra.mxu0 0.0
    %686 = vmatpush.msra.mxu0 0.0
    %687 = vmatpush.msra.mxu0 0.0
    %688 = vmatpush.msra.mxu0 0.0
    %689 = vmatpush.msra.mxu0 0.0
    %690 = vmatpush.msra.mxu0 %v30
    %691 = vmatmul.f32.gmra.mxu0 %v653
    %v692 = vpop.f32.mrf.mxu0
    %v693 = vadd.f32 0.0, %v692
    %694 = vdwg.mxu0
    %695 = vmatpush.msra.mxu0 0.0
    %696 = vmatpush.msra.mxu0 0.0
    %697 = vmatpush.msra.mxu0 0.0
    %698 = vmatpush.msra.mxu0 0.0
    %699 = vmatpush.msra.mxu0 0.0
    %700 = vmatpush.msra.mxu0 0.0
    %701 = vmatpush.msra.mxu0 0.0
    %702 = vmatpush.msra.mxu0 0.0
    %703 = vmatpush.msra.mxu0 0.0
    %704 = vmatpush.msra.mxu0 0.0
    %705 = vmatpush.msra.mxu0 0.0
    %706 = vmatpush.msra.mxu0 0.0
    %707 = vmatpush.msra.mxu0 0.0
    %708 = vmatpush.msra.mxu0 0.0
    %709 = vmatpush.msra.mxu0 0.0
    %710 = vmatpush.msra.mxu0 %v31
    %711 = vmatmul.f32.gmra.mxu0 %v653
    %v712 = vpop.f32.mrf.mxu0
    %v713 = vadd.f32 0.0, %v712
    %714 = vdwg.mxu0
    %v715 = vpack.c.bf16 %v649, %v649
    %716 = vmatpush.bf16.msra.mxu0 %v230
    %717 = vmatpush.bf16.msra.mxu0 %v227
    %718 = vmatpush.bf16.msra.mxu0 %v224
    %719 = vmatpush.bf16.msra.mxu0 %v221
    %720 = vmatpush.bf16.msra.mxu0 %v218
    %721 = vmatpush.bf16.msra.mxu0 %v215
    %722 = vmatpush.bf16.msra.mxu0 %v212
    %723 = vmatpush.bf16.msra.mxu0 %v209
    %724 = vmatmul.bf16.gmra.mxu0 %v715
    %v725 = vpop.f32.mrf.mxu0
    %v726 = vadd.f32 0.0, %v725
    %v727 = vpop.f32.mrf.mxu0
    %728 = vdwg.mxu0
    %729 = vmatpush.bf16.msra.mxu0 %v231
    %730 = vmatpush.bf16.msra.mxu0 %v228
    %731 = vmatpush.bf16.msra.mxu0 %v225
    %732 = vmatpush.bf16.msra.mxu0 %v222
    %733 = vmatpush.bf16.msra.mxu0 %v219
    %734 = vmatpush.bf16.msra.mxu0 %v216
    %735 = vmatpush.bf16.msra.mxu0 %v213
    %736 = vmatpush.bf16.msra.mxu0 %v210
    %737 = vmatmul.bf16.gmra.mxu0 %v715
    %v738 = vpop.f32.mrf.mxu0
    %v739 = vadd.f32 0.0, %v738
    %v740 = vpop.f32.mrf.mxu0
    %741 = vdwg.mxu0
    %742 = vmatpush.bf16.msra.mxu0 %v232
    %743 = vmatpush.bf16.msra.mxu0 %v229
    %744 = vmatpush.bf16.msra.mxu0 %v226
    %745 = vmatpush.bf16.msra.mxu0 %v223
    %746 = vmatpush.bf16.msra.mxu0 %v220
    %747 = vmatpush.bf16.msra.mxu0 %v217
    %748 = vmatpush.bf16.msra.mxu0 %v214
    %749 = vmatpush.bf16.msra.mxu0 %v211
    %750 = vmatmul.bf16.gmra.mxu0 %v715
    %v751 = vpop.f32.mrf.mxu0
    %v752 = vadd.f32 0.0, %v751
    %v753 = vpop.f32.mrf.mxu0
    %754 = vdwg.mxu0
    %v755 = vadd.f32 %v673, %v726
    %v756 = vxor.u32 %v755, 2147483648
    %v757 = vmul.f32 %v756, 1.442695
    %v758 = vpow.pop %v757
    %v759 = vadd.f32 %v758, 1.0
    %v760 = vrcp.pop %v759
    %v761 = vmul.f32 %v759, %v760
    %v762 = vsub.f32 1.0, %v761
    %v763 = vmul.f32 %v760, %v762
    %v764 = vadd.f32 %v760, %v763
    %vm765 = vweird.f32 %v759
    %vm766 = vweird.f32 %v760
    %vm767 = vmor %vm765, %vm766
    %v768 = vsel %vm767, %v760, %v764
    %v769 = vand.u32 2147483647, %v759
    %vm770 = vcmp.eq.f32.partialorder %v769, 8.507059e+37
    %v771 = vand.u32 %v759, 2147483648
    %v772 = vor.u32 1.1754944e-38, %v771
    %v773 = vsel %vm770, %v772, %v768
    %v774 = vmul.f32 1.0, %v773
    %v775 = vadd.f32 %v693, %v739
    %v776 = vxor.u32 %v775, 2147483648
    %v777 = vmul.f32 %v776, 1.442695
    %v778 = vpow.pop %v777
    %v779 = vadd.f32 %v778, 1.0
    %v780 = vrcp.pop %v779
    %v781 = vmul.f32 %v779, %v780
    %v782 = vsub.f32 1.0, %v781
    %v783 = vmul.f32 %v780, %v782
    %v784 = vadd.f32 %v780, %v783
    %vm785 = vweird.f32 %v779
    %vm786 = vweird.f32 %v780
    %vm787 = vmor %vm785, %vm786
    %v788 = vsel %vm787, %v780, %v784
    %v789 = vand.u32 2147483647, %v779
    %vm790 = vcmp.eq.f32.partialorder %v789, 8.507059e+37
    %v791 = vand.u32 %v779, 2147483648
    %v792 = vor.u32 1.1754944e-38, %v791
    %v793 = vsel %vm790, %v792, %v788
    %v794 = vmul.f32 1.0, %v793
    %v795 = vadd.f32 %v752, %v25
    %v796 = vmul.f32 %v774, %v795
    %v797 = vadd.f32 %v713, %v796
    %v798 = vtanh.pop %v797
    %v799 = vsub.f32 1.0, %v794
    %v800 = vmul.f32 %v799, %v798
    %v801 = vmul.f32 %v794, %v649
    %v802 = vadd.f32 %v800, %v801
    %s803 = scalar_lea.vmem %s0, 8
    %v804 = vld [vmem:[%s803] sm:$0x3]
    %v806 = vsel %vm32, %v804, 0
    %808 = vmatpush.msra.mxu0 0.0
    %809 = vmatpush.msra.mxu0 0.0
    %810 = vmatpush.msra.mxu0 0.0
    %811 = vmatpush.msra.mxu0 0.0
    %812 = vmatpush.msra.mxu0 0.0
    %813 = vmatpush.msra.mxu0 0.0
    %814 = vmatpush.msra.mxu0 0.0
    %815 = vmatpush.msra.mxu0 0.0
    %816 = vmatpush.msra.mxu0 0.0
    %817 = vmatpush.msra.mxu0 0.0
    %818 = vmatpush.msra.mxu0 0.0
    %819 = vmatpush.msra.mxu0 0.0
    %820 = vmatpush.msra.mxu0 0.0
    %821 = vmatpush.msra.mxu0 0.0
    %822 = vmatpush.msra.mxu0 0.0
    %823 = vmatpush.msra.mxu0 %v29
    %824 = vmatmul.f32.gmra.mxu0 %v806
    %v825 = vpop.f32.mrf.mxu0
    %v826 = vadd.f32 0.0, %v825
    %827 = vdwg.mxu0
    %828 = vmatpush.msra.mxu0 0.0
    %829 = vmatpush.msra.mxu0 0.0
    %830 = vmatpush.msra.mxu0 0.0
    %831 = vmatpush.msra.mxu0 0.0
    %832 = vmatpush.msra.mxu0 0.0
    %833 = vmatpush.msra.mxu0 0.0
    %834 = vmatpush.msra.mxu0 0.0
    %835 = vmatpush.msra.mxu0 0.0
    %836 = vmatpush.msra.mxu0 0.0
    %837 = vmatpush.msra.mxu0 0.0
    %838 = vmatpush.msra.mxu0 0.0
    %839 = vmatpush.msra.mxu0 0.0
    %840 = vmatpush.msra.mxu0 0.0
    %841 = vmatpush.msra.mxu0 0.0
    %842 = vmatpush.msra.mxu0 0.0
    %843 = vmatpush.msra.mxu0 %v30
    %844 = vmatmul.f32.gmra.mxu0 %v806
    %v845 = vpop.f32.mrf.mxu0
    %v846 = vadd.f32 0.0, %v845
    %847 = vdwg.mxu0
    %848 = vmatpush.msra.mxu0 0.0
    %849 = vmatpush.msra.mxu0 0.0
    %850 = vmatpush.msra.mxu0 0.0
    %851 = vmatpush.msra.mxu0 0.0
    %852 = vmatpush.msra.mxu0 0.0
    %853 = vmatpush.msra.mxu0 0.0
    %854 = vmatpush.msra.mxu0 0.0
    %855 = vmatpush.msra.mxu0 0.0
    %856 = vmatpush.msra.mxu0 0.0
    %857 = vmatpush.msra.mxu0 0.0
    %858 = vmatpush.msra.mxu0 0.0
    %859 = vmatpush.msra.mxu0 0.0
    %860 = vmatpush.msra.mxu0 0.0
    %861 = vmatpush.msra.mxu0 0.0
    %862 = vmatpush.msra.mxu0 0.0
    %863 = vmatpush.msra.mxu0 %v31
    %864 = vmatmul.f32.gmra.mxu0 %v806
    %v865 = vpop.f32.mrf.mxu0
    %v866 = vadd.f32 0.0, %v865
    %867 = vdwg.mxu0
    %v868 = vpack.c.bf16 %v802, %v802
    %869 = vmatpush.bf16.msra.mxu0 %v230
    %870 = vmatpush.bf16.msra.mxu0 %v227
    %871 = vmatpush.bf16.msra.mxu0 %v224
    %872 = vmatpush.bf16.msra.mxu0 %v221
    %873 = vmatpush.bf16.msra.mxu0 %v218
    %874 = vmatpush.bf16.msra.mxu0 %v215
    %875 = vmatpush.bf16.msra.mxu0 %v212
    %876 = vmatpush.bf16.msra.mxu0 %v209
    %877 = vmatmul.bf16.gmra.mxu0 %v868
    %v878 = vpop.f32.mrf.mxu0
    %v879 = vadd.f32 0.0, %v878
    %v880 = vpop.f32.mrf.mxu0
    %881 = vdwg.mxu0
    %882 = vmatpush.bf16.msra.mxu0 %v231
    %883 = vmatpush.bf16.msra.mxu0 %v228
    %884 = vmatpush.bf16.msra.mxu0 %v225
    %885 = vmatpush.bf16.msra.mxu0 %v222
    %886 = vmatpush.bf16.msra.mxu0 %v219
    %887 = vmatpush.bf16.msra.mxu0 %v216
    %888 = vmatpush.bf16.msra.mxu0 %v213
    %889 = vmatpush.bf16.msra.mxu0 %v210
    %890 = vmatmul.bf16.gmra.mxu0 %v868
    %v891 = vpop.f32.mrf.mxu0
    %v892 = vadd.f32 0.0, %v891
    %v893 = vpop.f32.mrf.mxu0
    %894 = vdwg.mxu0
    %895 = vmatpush.bf16.msra.mxu0 %v232
    %896 = vmatpush.bf16.msra.mxu0 %v229
    %897 = vmatpush.bf16.msra.mxu0 %v226
    %898 = vmatpush.bf16.msra.mxu0 %v223
    %899 = vmatpush.bf16.msra.mxu0 %v220
    %900 = vmatpush.bf16.msra.mxu0 %v217
    %901 = vmatpush.bf16.msra.mxu0 %v214
    %902 = vmatpush.bf16.msra.mxu0 %v211
    %903 = vmatmul.bf16.gmra.mxu0 %v868
    %v904 = vpop.f32.mrf.mxu0
    %v905 = vadd.f32 0.0, %v904
    %v906 = vpop.f32.mrf.mxu0
    %907 = vdwg.mxu0
    %v908 = vadd.f32 %v826, %v879
    %v909 = vxor.u32 %v908, 2147483648
    %v910 = vmul.f32 %v909, 1.442695
    %v911 = vpow.pop %v910
    %v912 = vadd.f32 %v911, 1.0
    %v913 = vrcp.pop %v912
    %v914 = vmul.f32 %v912, %v913
    %v915 = vsub.f32 1.0, %v914
    %v916 = vmul.f32 %v913, %v915
    %v917 = vadd.f32 %v913, %v916
    %vm918 = vweird.f32 %v912
    %vm919 = vweird.f32 %v913
    %vm920 = vmor %vm918, %vm919
    %v921 = vsel %vm920, %v913, %v917
    %v922 = vand.u32 2147483647, %v912
    %vm923 = vcmp.eq.f32.partialorder %v922, 8.507059e+37
    %v924 = vand.u32 %v912, 2147483648
    %v925 = vor.u32 1.1754944e-38, %v924
    %v926 = vsel %vm923, %v925, %v921
    %v927 = vmul.f32 1.0, %v926
    %v928 = vadd.f32 %v846, %v892
    %v929 = vxor.u32 %v928, 2147483648
    %v930 = vmul.f32 %v929, 1.442695
    %v931 = vpow.pop %v930
    %v932 = vadd.f32 %v931, 1.0
    %v933 = vrcp.pop %v932
    %v934 = vmul.f32 %v932, %v933
    %v935 = vsub.f32 1.0, %v934
    %v936 = vmul.f32 %v933, %v935
    %v937 = vadd.f32 %v933, %v936
    %vm938 = vweird.f32 %v932
    %vm939 = vweird.f32 %v933
    %vm940 = vmor %vm938, %vm939
    %v941 = vsel %vm940, %v933, %v937
    %v942 = vand.u32 2147483647, %v932
    %vm943 = vcmp.eq.f32.partialorder %v942, 8.507059e+37
    %v944 = vand.u32 %v932, 2147483648
    %v945 = vor.u32 1.1754944e-38, %v944
    %v946 = vsel %vm943, %v945, %v941
    %v947 = vmul.f32 1.0, %v946
    %v948 = vadd.f32 %v905, %v25
    %v949 = vmul.f32 %v927, %v948
    %v950 = vadd.f32 %v866, %v949
    %v951 = vtanh.pop %v950
    %v952 = vsub.f32 1.0, %v947
    %v953 = vmul.f32 %v952, %v951
    %v954 = vmul.f32 %v947, %v802
    %v955 = vadd.f32 %v953, %v954
    %s956 = scalar_lea.vmem %s0, 10
    %v957 = vld [vmem:[%s956] sm:$0x3]
    %v959 = vsel %vm32, %v957, 0
    %961 = vmatpush.msra.mxu0 0.0
    %962 = vmatpush.msra.mxu0 0.0
    %963 = vmatpush.msra.mxu0 0.0
    %964 = vmatpush.msra.mxu0 0.0
    %965 = vmatpush.msra.mxu0 0.0
    %966 = vmatpush.msra.mxu0 0.0
    %967 = vmatpush.msra.mxu0 0.0
    %968 = vmatpush.msra.mxu0 0.0
    %969 = vmatpush.msra.mxu0 0.0
    %970 = vmatpush.msra.mxu0 0.0
    %971 = vmatpush.msra.mxu0 0.0
    %972 = vmatpush.msra.mxu0 0.0
    %973 = vmatpush.msra.mxu0 0.0
    %974 = vmatpush.msra.mxu0 0.0
    %975 = vmatpush.msra.mxu0 0.0
    %976 = vmatpush.msra.mxu0 %v29
    %977 = vmatmul.f32.gmra.mxu0 %v959
    %v978 = vpop.f32.mrf.mxu0
    %v979 = vadd.f32 0.0, %v978
    %980 = vdwg.mxu0
    %981 = vmatpush.msra.mxu0 0.0
    %982 = vmatpush.msra.mxu0 0.0
    %983 = vmatpush.msra.mxu0 0.0
    %984 = vmatpush.msra.mxu0 0.0
    %985 = vmatpush.msra.mxu0 0.0
    %986 = vmatpush.msra.mxu0 0.0
    %987 = vmatpush.msra.mxu0 0.0
    %988 = vmatpush.msra.mxu0 0.0
    %989 = vmatpush.msra.mxu0 0.0
    %990 = vmatpush.msra.mxu0 0.0
    %991 = vmatpush.msra.mxu0 0.0
    %992 = vmatpush.msra.mxu0 0.0
    %993 = vmatpush.msra.mxu0 0.0
    %994 = vmatpush.msra.mxu0 0.0
    %995 = vmatpush.msra.mxu0 0.0
    %996 = vmatpush.msra.mxu0 %v30
    %997 = vmatmul.f32.gmra.mxu0 %v959
    %v998 = vpop.f32.mrf.mxu0
    %v999 = vadd.f32 0.0, %v998
    %1000 = vdwg.mxu0
    %1001 = vmatpush.msra.mxu0 0.0
    %1002 = vmatpush.msra.mxu0 0.0
    %1003 = vmatpush.msra.mxu0 0.0
    %1004 = vmatpush.msra.mxu0 0.0
    %1005 = vmatpush.msra.mxu0 0.0
    %1006 = vmatpush.msra.mxu0 0.0
    %1007 = vmatpush.msra.mxu0 0.0
    %1008 = vmatpush.msra.mxu0 0.0
    %1009 = vmatpush.msra.mxu0 0.0
    %1010 = vmatpush.msra.mxu0 0.0
    %1011 = vmatpush.msra.mxu0 0.0
    %1012 = vmatpush.msra.mxu0 0.0
    %1013 = vmatpush.msra.mxu0 0.0
    %1014 = vmatpush.msra.mxu0 0.0
    %1015 = vmatpush.msra.mxu0 0.0
    %1016 = vmatpush.msra.mxu0 %v31
    %1017 = vmatmul.f32.gmra.mxu0 %v959
    %v1018 = vpop.f32.mrf.mxu0
    %v1019 = vadd.f32 0.0, %v1018
    %1020 = vdwg.mxu0
    %v1021 = vpack.c.bf16 %v955, %v955
    %1022 = vmatpush.bf16.msra.mxu0 %v230
    %1023 = vmatpush.bf16.msra.mxu0 %v227
    %1024 = vmatpush.bf16.msra.mxu0 %v224
    %1025 = vmatpush.bf16.msra.mxu0 %v221
    %1026 = vmatpush.bf16.msra.mxu0 %v218
    %1027 = vmatpush.bf16.msra.mxu0 %v215
    %1028 = vmatpush.bf16.msra.mxu0 %v212
    %1029 = vmatpush.bf16.msra.mxu0 %v209
    %1030 = vmatmul.bf16.gmra.mxu0 %v1021
    %v1031 = vpop.f32.mrf.mxu0
    %v1032 = vadd.f32 0.0, %v1031
    %v1033 = vpop.f32.mrf.mxu0
    %1034 = vdwg.mxu0
    %1035 = vmatpush.bf16.msra.mxu0 %v231
    %1036 = vmatpush.bf16.msra.mxu0 %v228
    %1037 = vmatpush.bf16.msra.mxu0 %v225
    %1038 = vmatpush.bf16.msra.mxu0 %v222
    %1039 = vmatpush.bf16.msra.mxu0 %v219
    %1040 = vmatpush.bf16.msra.mxu0 %v216
    %1041 = vmatpush.bf16.msra.mxu0 %v213
    %1042 = vmatpush.bf16.msra.mxu0 %v210
    %1043 = vmatmul.bf16.gmra.mxu0 %v1021
    %v1044 = vpop.f32.mrf.mxu0
    %v1045 = vadd.f32 0.0, %v1044
    %v1046 = vpop.f32.mrf.mxu0
    %1047 = vdwg.mxu0
    %1048 = vmatpush.bf16.msra.mxu0 %v232
    %1049 = vmatpush.bf16.msra.mxu0 %v229
    %1050 = vmatpush.bf16.msra.mxu0 %v226
    %1051 = vmatpush.bf16.msra.mxu0 %v223
    %1052 = vmatpush.bf16.msra.mxu0 %v220
    %1053 = vmatpush.bf16.msra.mxu0 %v217
    %1054 = vmatpush.bf16.msra.mxu0 %v214
    %1055 = vmatpush.bf16.msra.mxu0 %v211
    %1056 = vmatmul.bf16.gmra.mxu0 %v1021
    %v1057 = vpop.f32.mrf.mxu0
    %v1058 = vadd.f32 0.0, %v1057
    %v1059 = vpop.f32.mrf.mxu0
    %1060 = vdwg.mxu0
    %v1061 = vadd.f32 %v979, %v1032
    %v1062 = vxor.u32 %v1061, 2147483648
    %v1063 = vmul.f32 %v1062, 1.442695
    %v1064 = vpow.pop %v1063
    %v1065 = vadd.f32 %v1064, 1.0
    %v1066 = vrcp.pop %v1065
    %v1067 = vmul.f32 %v1065, %v1066
    %v1068 = vsub.f32 1.0, %v1067
    %v1069 = vmul.f32 %v1066, %v1068
    %v1070 = vadd.f32 %v1066, %v1069
    %vm1071 = vweird.f32 %v1065
    %vm1072 = vweird.f32 %v1066
    %vm1073 = vmor %vm1071, %vm1072
    %v1074 = vsel %vm1073, %v1066, %v1070
    %v1075 = vand.u32 2147483647, %v1065
    %vm1076 = vcmp.eq.f32.partialorder %v1075, 8.507059e+37
    %v1077 = vand.u32 %v1065, 2147483648
    %v1078 = vor.u32 1.1754944e-38, %v1077
    %v1079 = vsel %vm1076, %v1078, %v1074
    %v1080 = vmul.f32 1.0, %v1079
    %v1081 = vadd.f32 %v999, %v1045
    %v1082 = vxor.u32 %v1081, 2147483648
    %v1083 = vmul.f32 %v1082, 1.442695
    %v1084 = vpow.pop %v1083
    %v1085 = vadd.f32 %v1084, 1.0
    %v1086 = vrcp.pop %v1085
    %v1087 = vmul.f32 %v1085, %v1086
    %v1088 = vsub.f32 1.0, %v1087
    %v1089 = vmul.f32 %v1086, %v1088
    %v1090 = vadd.f32 %v1086, %v1089
    %vm1091 = vweird.f32 %v1085
    %vm1092 = vweird.f32 %v1086
    %vm1093 = vmor %vm1091, %vm1092
    %v1094 = vsel %vm1093, %v1086, %v1090
    %v1095 = vand.u32 2147483647, %v1085
    %vm1096 = vcmp.eq.f32.partialorder %v1095, 8.507059e+37
    %v1097 = vand.u32 %v1085, 2147483648
    %v1098 = vor.u32 1.1754944e-38, %v1097
    %v1099 = vsel %vm1096, %v1098, %v1094
    %v1100 = vmul.f32 1.0, %v1099
    %v1101 = vadd.f32 %v1058, %v25
    %v1102 = vmul.f32 %v1080, %v1101
    %v1103 = vadd.f32 %v1019, %v1102
    %v1104 = vtanh.pop %v1103
    %v1105 = vsub.f32 1.0, %v1100
    %v1106 = vmul.f32 %v1105, %v1104
    %v1107 = vmul.f32 %v1100, %v955
    %v1108 = vadd.f32 %v1106, %v1107
    %s1109 = scalar_lea.vmem %s0, 12
    %v1110 = vld [vmem:[%s1109] sm:$0x3]
    %v1112 = vsel %vm32, %v1110, 0
    %1114 = vmatpush.msra.mxu0 0.0
    %1115 = vmatpush.msra.mxu0 0.0
    %1116 = vmatpush.msra.mxu0 0.0
    %1117 = vmatpush.msra.mxu0 0.0
    %1118 = vmatpush.msra.mxu0 0.0
    %1119 = vmatpush.msra.mxu0 0.0
    %1120 = vmatpush.msra.mxu0 0.0
    %1121 = vmatpush.msra.mxu0 0.0
    %1122 = vmatpush.msra.mxu0 0.0
    %1123 = vmatpush.msra.mxu0 0.0
    %1124 = vmatpush.msra.mxu0 0.0
    %1125 = vmatpush.msra.mxu0 0.0
    %1126 = vmatpush.msra.mxu0 0.0
    %1127 = vmatpush.msra.mxu0 0.0
    %1128 = vmatpush.msra.mxu0 0.0
    %1129 = vmatpush.msra.mxu0 %v29
    %1130 = vmatmul.f32.gmra.mxu0 %v1112
    %v1131 = vpop.f32.mrf.mxu0
    %v1132 = vadd.f32 0.0, %v1131
    %1133 = vdwg.mxu0
    %1134 = vmatpush.msra.mxu0 0.0
    %1135 = vmatpush.msra.mxu0 0.0
    %1136 = vmatpush.msra.mxu0 0.0
    %1137 = vmatpush.msra.mxu0 0.0
    %1138 = vmatpush.msra.mxu0 0.0
    %1139 = vmatpush.msra.mxu0 0.0
    %1140 = vmatpush.msra.mxu0 0.0
    %1141 = vmatpush.msra.mxu0 0.0
    %1142 = vmatpush.msra.mxu0 0.0
    %1143 = vmatpush.msra.mxu0 0.0
    %1144 = vmatpush.msra.mxu0 0.0
    %1145 = vmatpush.msra.mxu0 0.0
    %1146 = vmatpush.msra.mxu0 0.0
    %1147 = vmatpush.msra.mxu0 0.0
    %1148 = vmatpush.msra.mxu0 0.0
    %1149 = vmatpush.msra.mxu0 %v30
    %1150 = vmatmul.f32.gmra.mxu0 %v1112
    %v1151 = vpop.f32.mrf.mxu0
    %v1152 = vadd.f32 0.0, %v1151
    %1153 = vdwg.mxu0
    %1154 = vmatpush.msra.mxu0 0.0
    %1155 = vmatpush.msra.mxu0 0.0
    %1156 = vmatpush.msra.mxu0 0.0
    %1157 = vmatpush.msra.mxu0 0.0
    %1158 = vmatpush.msra.mxu0 0.0
    %1159 = vmatpush.msra.mxu0 0.0
    %1160 = vmatpush.msra.mxu0 0.0
    %1161 = vmatpush.msra.mxu0 0.0
    %1162 = vmatpush.msra.mxu0 0.0
    %1163 = vmatpush.msra.mxu0 0.0
    %1164 = vmatpush.msra.mxu0 0.0
    %1165 = vmatpush.msra.mxu0 0.0
    %1166 = vmatpush.msra.mxu0 0.0
    %1167 = vmatpush.msra.mxu0 0.0
    %1168 = vmatpush.msra.mxu0 0.0
    %1169 = vmatpush.msra.mxu0 %v31
    %1170 = vmatmul.f32.gmra.mxu0 %v1112
    %v1171 = vpop.f32.mrf.mxu0
    %v1172 = vadd.f32 0.0, %v1171
    %1173 = vdwg.mxu0
    %v1174 = vpack.c.bf16 %v1108, %v1108
    %1175 = vmatpush.bf16.msra.mxu0 %v230
    %1176 = vmatpush.bf16.msra.mxu0 %v227
    %1177 = vmatpush.bf16.msra.mxu0 %v224
    %1178 = vmatpush.bf16.msra.mxu0 %v221
    %1179 = vmatpush.bf16.msra.mxu0 %v218
    %1180 = vmatpush.bf16.msra.mxu0 %v215
    %1181 = vmatpush.bf16.msra.mxu0 %v212
    %1182 = vmatpush.bf16.msra.mxu0 %v209
    %1183 = vmatmul.bf16.gmra.mxu0 %v1174
    %v1184 = vpop.f32.mrf.mxu0
    %v1185 = vadd.f32 0.0, %v1184
    %v1186 = vpop.f32.mrf.mxu0
    %1187 = vdwg.mxu0
    %1188 = vmatpush.bf16.msra.mxu0 %v231
    %1189 = vmatpush.bf16.msra.mxu0 %v228
    %1190 = vmatpush.bf16.msra.mxu0 %v225
    %1191 = vmatpush.bf16.msra.mxu0 %v222
    %1192 = vmatpush.bf16.msra.mxu0 %v219
    %1193 = vmatpush.bf16.msra.mxu0 %v216
    %1194 = vmatpush.bf16.msra.mxu0 %v213
    %1195 = vmatpush.bf16.msra.mxu0 %v210
    %1196 = vmatmul.bf16.gmra.mxu0 %v1174
    %v1197 = vpop.f32.mrf.mxu0
    %v1198 = vadd.f32 0.0, %v1197
    %v1199 = vpop.f32.mrf.mxu0
    %1200 = vdwg.mxu0
    %1201 = vmatpush.bf16.msra.mxu0 %v232
    %1202 = vmatpush.bf16.msra.mxu0 %v229
    %1203 = vmatpush.bf16.msra.mxu0 %v226
    %1204 = vmatpush.bf16.msra.mxu0 %v223
    %1205 = vmatpush.bf16.msra.mxu0 %v220
    %1206 = vmatpush.bf16.msra.mxu0 %v217
    %1207 = vmatpush.bf16.msra.mxu0 %v214
    %1208 = vmatpush.bf16.msra.mxu0 %v211
    %1209 = vmatmul.bf16.gmra.mxu0 %v1174
    %v1210 = vpop.f32.mrf.mxu0
    %v1211 = vadd.f32 0.0, %v1210
    %v1212 = vpop.f32.mrf.mxu0
    %1213 = vdwg.mxu0
    %v1214 = vadd.f32 %v1132, %v1185
    %v1215 = vxor.u32 %v1214, 2147483648
    %v1216 = vmul.f32 %v1215, 1.442695
    %v1217 = vpow.pop %v1216
    %v1218 = vadd.f32 %v1217, 1.0
    %v1219 = vrcp.pop %v1218
    %v1220 = vmul.f32 %v1218, %v1219
    %v1221 = vsub.f32 1.0, %v1220
    %v1222 = vmul.f32 %v1219, %v1221
    %v1223 = vadd.f32 %v1219, %v1222
    %vm1224 = vweird.f32 %v1218
    %vm1225 = vweird.f32 %v1219
    %vm1226 = vmor %vm1224, %vm1225
    %v1227 = vsel %vm1226, %v1219, %v1223
    %v1228 = vand.u32 2147483647, %v1218
    %vm1229 = vcmp.eq.f32.partialorder %v1228, 8.507059e+37
    %v1230 = vand.u32 %v1218, 2147483648
    %v1231 = vor.u32 1.1754944e-38, %v1230
    %v1232 = vsel %vm1229, %v1231, %v1227
    %v1233 = vmul.f32 1.0, %v1232
    %v1234 = vadd.f32 %v1152, %v1198
    %v1235 = vxor.u32 %v1234, 2147483648
    %v1236 = vmul.f32 %v1235, 1.442695
    %v1237 = vpow.pop %v1236
    %v1238 = vadd.f32 %v1237, 1.0
    %v1239 = vrcp.pop %v1238
    %v1240 = vmul.f32 %v1238, %v1239
    %v1241 = vsub.f32 1.0, %v1240
    %v1242 = vmul.f32 %v1239, %v1241
    %v1243 = vadd.f32 %v1239, %v1242
    %vm1244 = vweird.f32 %v1238
    %vm1245 = vweird.f32 %v1239
    %vm1246 = vmor %vm1244, %vm1245
    %v1247 = vsel %vm1246, %v1239, %v1243
    %v1248 = vand.u32 2147483647, %v1238
    %vm1249 = vcmp.eq.f32.partialorder %v1248, 8.507059e+37
    %v1250 = vand.u32 %v1238, 2147483648
    %v1251 = vor.u32 1.1754944e-38, %v1250
    %v1252 = vsel %vm1249, %v1251, %v1247
    %v1253 = vmul.f32 1.0, %v1252
    %v1254 = vadd.f32 %v1211, %v25
    %v1255 = vmul.f32 %v1233, %v1254
    %v1256 = vadd.f32 %v1172, %v1255
    %v1257 = vtanh.pop %v1256
    %v1258 = vsub.f32 1.0, %v1253
    %v1259 = vmul.f32 %v1258, %v1257
    %v1260 = vmul.f32 %v1253, %v1108
    %v1261 = vadd.f32 %v1259, %v1260
    %s1262 = scalar_lea.vmem %s0, 14
    %v1263 = vld [vmem:[%s1262] sm:$0x3]
    %v1265 = vsel %vm32, %v1263, 0
    %1267 = vmatpush.msra.mxu0 0.0
    %1268 = vmatpush.msra.mxu0 0.0
    %1269 = vmatpush.msra.mxu0 0.0
    %1270 = vmatpush.msra.mxu0 0.0
    %1271 = vmatpush.msra.mxu0 0.0
    %1272 = vmatpush.msra.mxu0 0.0
    %1273 = vmatpush.msra.mxu0 0.0
    %1274 = vmatpush.msra.mxu0 0.0
    %1275 = vmatpush.msra.mxu0 0.0
    %1276 = vmatpush.msra.mxu0 0.0
    %1277 = vmatpush.msra.mxu0 0.0
    %1278 = vmatpush.msra.mxu0 0.0
    %1279 = vmatpush.msra.mxu0 0.0
    %1280 = vmatpush.msra.mxu0 0.0
    %1281 = vmatpush.msra.mxu0 0.0
    %1282 = vmatpush.msra.mxu0 %v29
    %1283 = vmatmul.f32.gmra.mxu0 %v1265
    %v1284 = vpop.f32.mrf.mxu0
    %v1285 = vadd.f32 0.0, %v1284
    %1286 = vdwg.mxu0
    %1287 = vmatpush.msra.mxu0 0.0
    %1288 = vmatpush.msra.mxu0 0.0
    %1289 = vmatpush.msra.mxu0 0.0
    %1290 = vmatpush.msra.mxu0 0.0
    %1291 = vmatpush.msra.mxu0 0.0
    %1292 = vmatpush.msra.mxu0 0.0
    %1293 = vmatpush.msra.mxu0 0.0
    %1294 = vmatpush.msra.mxu0 0.0
    %1295 = vmatpush.msra.mxu0 0.0
    %1296 = vmatpush.msra.mxu0 0.0
    %1297 = vmatpush.msra.mxu0 0.0
    %1298 = vmatpush.msra.mxu0 0.0
    %1299 = vmatpush.msra.mxu0 0.0
    %1300 = vmatpush.msra.mxu0 0.0
    %1301 = vmatpush.msra.mxu0 0.0
    %1302 = vmatpush.msra.mxu0 %v30
    %1303 = vmatmul.f32.gmra.mxu0 %v1265
    %v1304 = vpop.f32.mrf.mxu0
    %v1305 = vadd.f32 0.0, %v1304
    %1306 = vdwg.mxu0
    %1307 = vmatpush.msra.mxu0 0.0
    %1308 = vmatpush.msra.mxu0 0.0
    %1309 = vmatpush.msra.mxu0 0.0
    %1310 = vmatpush.msra.mxu0 0.0
    %1311 = vmatpush.msra.mxu0 0.0
    %1312 = vmatpush.msra.mxu0 0.0
    %1313 = vmatpush.msra.mxu0 0.0
    %1314 = vmatpush.msra.mxu0 0.0
    %1315 = vmatpush.msra.mxu0 0.0
    %1316 = vmatpush.msra.mxu0 0.0
    %1317 = vmatpush.msra.mxu0 0.0
    %1318 = vmatpush.msra.mxu0 0.0
    %1319 = vmatpush.msra.mxu0 0.0
    %1320 = vmatpush.msra.mxu0 0.0
    %1321 = vmatpush.msra.mxu0 0.0
    %1322 = vmatpush.msra.mxu0 %v31
    %1323 = vmatmul.f32.gmra.mxu0 %v1265
    %v1324 = vpop.f32.mrf.mxu0
    %v1325 = vadd.f32 0.0, %v1324
    %1326 = vdwg.mxu0
    %v1327 = vpack.c.bf16 %v1261, %v1261
    %1328 = vmatpush.bf16.msra.mxu0 %v230
    %1329 = vmatpush.bf16.msra.mxu0 %v227
    %1330 = vmatpush.bf16.msra.mxu0 %v224
    %1331 = vmatpush.bf16.msra.mxu0 %v221
    %1332 = vmatpush.bf16.msra.mxu0 %v218
    %1333 = vmatpush.bf16.msra.mxu0 %v215
    %1334 = vmatpush.bf16.msra.mxu0 %v212
    %1335 = vmatpush.bf16.msra.mxu0 %v209
    %1336 = vmatmul.bf16.gmra.mxu0 %v1327
    %v1337 = vpop.f32.mrf.mxu0
    %v1338 = vadd.f32 0.0, %v1337
    %v1339 = vpop.f32.mrf.mxu0
    %1340 = vdwg.mxu0
    %1341 = vmatpush.bf16.msra.mxu0 %v231
    %1342 = vmatpush.bf16.msra.mxu0 %v228
    %1343 = vmatpush.bf16.msra.mxu0 %v225
    %1344 = vmatpush.bf16.msra.mxu0 %v222
    %1345 = vmatpush.bf16.msra.mxu0 %v219
    %1346 = vmatpush.bf16.msra.mxu0 %v216
    %1347 = vmatpush.bf16.msra.mxu0 %v213
    %1348 = vmatpush.bf16.msra.mxu0 %v210
    %1349 = vmatmul.bf16.gmra.mxu0 %v1327
    %v1350 = vpop.f32.mrf.mxu0
    %v1351 = vadd.f32 0.0, %v1350
    %v1352 = vpop.f32.mrf.mxu0
    %1353 = vdwg.mxu0
    %1354 = vmatpush.bf16.msra.mxu0 %v232
    %1355 = vmatpush.bf16.msra.mxu0 %v229
    %1356 = vmatpush.bf16.msra.mxu0 %v226
    %1357 = vmatpush.bf16.msra.mxu0 %v223
    %1358 = vmatpush.bf16.msra.mxu0 %v220
    %1359 = vmatpush.bf16.msra.mxu0 %v217
    %1360 = vmatpush.bf16.msra.mxu0 %v214
    %1361 = vmatpush.bf16.msra.mxu0 %v211
    %1362 = vmatmul.bf16.gmra.mxu0 %v1327
    %v1363 = vpop.f32.mrf.mxu0
    %v1364 = vadd.f32 0.0, %v1363
    %v1365 = vpop.f32.mrf.mxu0
    %1366 = vdwg.mxu0
    %v1367 = vadd.f32 %v1285, %v1338
    %v1368 = vxor.u32 %v1367, 2147483648
    %v1369 = vmul.f32 %v1368, 1.442695
    %v1370 = vpow.pop %v1369
    %v1371 = vadd.f32 %v1370, 1.0
    %v1372 = vrcp.pop %v1371
    %v1373 = vmul.f32 %v1371, %v1372
    %v1374 = vsub.f32 1.0, %v1373
    %v1375 = vmul.f32 %v1372, %v1374
    %v1376 = vadd.f32 %v1372, %v1375
    %vm1377 = vweird.f32 %v1371
    %vm1378 = vweird.f32 %v1372
    %vm1379 = vmor %vm1377, %vm1378
    %v1380 = vsel %vm1379, %v1372, %v1376
    %v1381 = vand.u32 2147483647, %v1371
    %vm1382 = vcmp.eq.f32.partialorder %v1381, 8.507059e+37
    %v1383 = vand.u32 %v1371, 2147483648
    %v1384 = vor.u32 1.1754944e-38, %v1383
    %v1385 = vsel %vm1382, %v1384, %v1380
    %v1386 = vmul.f32 1.0, %v1385
    %v1387 = vadd.f32 %v1305, %v1351
    %v1388 = vxor.u32 %v1387, 2147483648
    %v1389 = vmul.f32 %v1388, 1.442695
    %v1390 = vpow.pop %v1389
    %v1391 = vadd.f32 %v1390, 1.0
    %v1392 = vrcp.pop %v1391
    %v1393 = vmul.f32 %v1391, %v1392
    %v1394 = vsub.f32 1.0, %v1393
    %v1395 = vmul.f32 %v1392, %v1394
    %v1396 = vadd.f32 %v1392, %v1395
    %vm1397 = vweird.f32 %v1391
    %vm1398 = vweird.f32 %v1392
    %vm1399 = vmor %vm1397, %vm1398
    %v1400 = vsel %vm1399, %v1392, %v1396
    %v1401 = vand.u32 2147483647, %v1391
    %vm1402 = vcmp.eq.f32.partialorder %v1401, 8.507059e+37
    %v1403 = vand.u32 %v1391, 2147483648
    %v1404 = vor.u32 1.1754944e-38, %v1403
    %v1405 = vsel %vm1402, %v1404, %v1400
    %v1406 = vmul.f32 1.0, %v1405
    %v1407 = vadd.f32 %v1364, %v25
    %v1408 = vmul.f32 %v1386, %v1407
    %v1409 = vadd.f32 %v1325, %v1408
    %v1410 = vtanh.pop %v1409
    %v1411 = vsub.f32 1.0, %v1406
    %v1412 = vmul.f32 %v1411, %v1410
    %v1413 = vmul.f32 %v1406, %v1261
    %v1414 = vadd.f32 %v1412, %v1413
    %s1415 = scalar_lea.vmem %s0, 16
    %v1416 = vld [vmem:[%s1415] sm:$0x3]
    %v1418 = vsel %vm32, %v1416, 0
    %1420 = vmatpush.msra.mxu0 0.0
    %1421 = vmatpush.msra.mxu0 0.0
    %1422 = vmatpush.msra.mxu0 0.0
    %1423 = vmatpush.msra.mxu0 0.0
    %1424 = vmatpush.msra.mxu0 0.0
    %1425 = vmatpush.msra.mxu0 0.0
    %1426 = vmatpush.msra.mxu0 0.0
    %1427 = vmatpush.msra.mxu0 0.0
    %1428 = vmatpush.msra.mxu0 0.0
    %1429 = vmatpush.msra.mxu0 0.0
    %1430 = vmatpush.msra.mxu0 0.0
    %1431 = vmatpush.msra.mxu0 0.0
    %1432 = vmatpush.msra.mxu0 0.0
    %1433 = vmatpush.msra.mxu0 0.0
    %1434 = vmatpush.msra.mxu0 0.0
    %1435 = vmatpush.msra.mxu0 %v29
    %1436 = vmatmul.f32.gmra.mxu0 %v1418
    %v1437 = vpop.f32.mrf.mxu0
    %v1438 = vadd.f32 0.0, %v1437
    %1439 = vdwg.mxu0
    %1440 = vmatpush.msra.mxu0 0.0
    %1441 = vmatpush.msra.mxu0 0.0
    %1442 = vmatpush.msra.mxu0 0.0
    %1443 = vmatpush.msra.mxu0 0.0
    %1444 = vmatpush.msra.mxu0 0.0
    %1445 = vmatpush.msra.mxu0 0.0
    %1446 = vmatpush.msra.mxu0 0.0
    %1447 = vmatpush.msra.mxu0 0.0
    %1448 = vmatpush.msra.mxu0 0.0
    %1449 = vmatpush.msra.mxu0 0.0
    %1450 = vmatpush.msra.mxu0 0.0
    %1451 = vmatpush.msra.mxu0 0.0
    %1452 = vmatpush.msra.mxu0 0.0
    %1453 = vmatpush.msra.mxu0 0.0
    %1454 = vmatpush.msra.mxu0 0.0
    %1455 = vmatpush.msra.mxu0 %v30
    %1456 = vmatmul.f32.gmra.mxu0 %v1418
    %v1457 = vpop.f32.mrf.mxu0
    %v1458 = vadd.f32 0.0, %v1457
    %1459 = vdwg.mxu0
    %1460 = vmatpush.msra.mxu0 0.0
    %1461 = vmatpush.msra.mxu0 0.0
    %1462 = vmatpush.msra.mxu0 0.0
    %1463 = vmatpush.msra.mxu0 0.0
    %1464 = vmatpush.msra.mxu0 0.0
    %1465 = vmatpush.msra.mxu0 0.0
    %1466 = vmatpush.msra.mxu0 0.0
    %1467 = vmatpush.msra.mxu0 0.0
    %1468 = vmatpush.msra.mxu0 0.0
    %1469 = vmatpush.msra.mxu0 0.0
    %1470 = vmatpush.msra.mxu0 0.0
    %1471 = vmatpush.msra.mxu0 0.0
    %1472 = vmatpush.msra.mxu0 0.0
    %1473 = vmatpush.msra.mxu0 0.0
    %1474 = vmatpush.msra.mxu0 0.0
    %1475 = vmatpush.msra.mxu0 %v31
    %1476 = vmatmul.f32.gmra.mxu0 %v1418
    %v1477 = vpop.f32.mrf.mxu0
    %v1478 = vadd.f32 0.0, %v1477
    %1479 = vdwg.mxu0
    %v1480 = vpack.c.bf16 %v1414, %v1414
    %1481 = vmatpush.bf16.msra.mxu0 %v230
    %1482 = vmatpush.bf16.msra.mxu0 %v227
    %1483 = vmatpush.bf16.msra.mxu0 %v224
    %1484 = vmatpush.bf16.msra.mxu0 %v221
    %1485 = vmatpush.bf16.msra.mxu0 %v218
    %1486 = vmatpush.bf16.msra.mxu0 %v215
    %1487 = vmatpush.bf16.msra.mxu0 %v212
    %1488 = vmatpush.bf16.msra.mxu0 %v209
    %1489 = vmatmul.bf16.gmra.mxu0 %v1480
    %v1490 = vpop.f32.mrf.mxu0
    %v1491 = vadd.f32 0.0, %v1490
    %v1492 = vpop.f32.mrf.mxu0
    %1493 = vdwg.mxu0
    %1494 = vmatpush.bf16.msra.mxu0 %v231
    %1495 = vmatpush.bf16.msra.mxu0 %v228
    %1496 = vmatpush.bf16.msra.mxu0 %v225
    %1497 = vmatpush.bf16.msra.mxu0 %v222
    %1498 = vmatpush.bf16.msra.mxu0 %v219
    %1499 = vmatpush.bf16.msra.mxu0 %v216
    %1500 = vmatpush.bf16.msra.mxu0 %v213
    %1501 = vmatpush.bf16.msra.mxu0 %v210
    %1502 = vmatmul.bf16.gmra.mxu0 %v1480
    %v1503 = vpop.f32.mrf.mxu0
    %v1504 = vadd.f32 0.0, %v1503
    %v1505 = vpop.f32.mrf.mxu0
    %1506 = vdwg.mxu0
    %1507 = vmatpush.bf16.msra.mxu0 %v232
    %1508 = vmatpush.bf16.msra.mxu0 %v229
    %1509 = vmatpush.bf16.msra.mxu0 %v226
    %1510 = vmatpush.bf16.msra.mxu0 %v223
    %1511 = vmatpush.bf16.msra.mxu0 %v220
    %1512 = vmatpush.bf16.msra.mxu0 %v217
    %1513 = vmatpush.bf16.msra.mxu0 %v214
    %1514 = vmatpush.bf16.msra.mxu0 %v211
    %1515 = vmatmul.bf16.gmra.mxu0 %v1480
    %v1516 = vpop.f32.mrf.mxu0
    %v1517 = vadd.f32 0.0, %v1516
    %v1518 = vpop.f32.mrf.mxu0
    %1519 = vdwg.mxu0
    %v1520 = vadd.f32 %v1438, %v1491
    %v1521 = vxor.u32 %v1520, 2147483648
    %v1522 = vmul.f32 %v1521, 1.442695
    %v1523 = vpow.pop %v1522
    %v1524 = vadd.f32 %v1523, 1.0
    %v1525 = vrcp.pop %v1524
    %v1526 = vmul.f32 %v1524, %v1525
    %v1527 = vsub.f32 1.0, %v1526
    %v1528 = vmul.f32 %v1525, %v1527
    %v1529 = vadd.f32 %v1525, %v1528
    %vm1530 = vweird.f32 %v1524
    %vm1531 = vweird.f32 %v1525
    %vm1532 = vmor %vm1530, %vm1531
    %v1533 = vsel %vm1532, %v1525, %v1529
    %v1534 = vand.u32 2147483647, %v1524
    %vm1535 = vcmp.eq.f32.partialorder %v1534, 8.507059e+37
    %v1536 = vand.u32 %v1524, 2147483648
    %v1537 = vor.u32 1.1754944e-38, %v1536
    %v1538 = vsel %vm1535, %v1537, %v1533
    %v1539 = vmul.f32 1.0, %v1538
    %v1540 = vadd.f32 %v1458, %v1504
    %v1541 = vxor.u32 %v1540, 2147483648
    %v1542 = vmul.f32 %v1541, 1.442695
    %v1543 = vpow.pop %v1542
    %v1544 = vadd.f32 %v1543, 1.0
    %v1545 = vrcp.pop %v1544
    %v1546 = vmul.f32 %v1544, %v1545
    %v1547 = vsub.f32 1.0, %v1546
    %v1548 = vmul.f32 %v1545, %v1547
    %v1549 = vadd.f32 %v1545, %v1548
    %vm1550 = vweird.f32 %v1544
    %vm1551 = vweird.f32 %v1545
    %vm1552 = vmor %vm1550, %vm1551
    %v1553 = vsel %vm1552, %v1545, %v1549
    %v1554 = vand.u32 2147483647, %v1544
    %vm1555 = vcmp.eq.f32.partialorder %v1554, 8.507059e+37
    %v1556 = vand.u32 %v1544, 2147483648
    %v1557 = vor.u32 1.1754944e-38, %v1556
    %v1558 = vsel %vm1555, %v1557, %v1553
    %v1559 = vmul.f32 1.0, %v1558
    %v1560 = vadd.f32 %v1517, %v25
    %v1561 = vmul.f32 %v1539, %v1560
    %v1562 = vadd.f32 %v1478, %v1561
    %v1563 = vtanh.pop %v1562
    %v1564 = vsub.f32 1.0, %v1559
    %v1565 = vmul.f32 %v1564, %v1563
    %v1566 = vmul.f32 %v1559, %v1414
    %v1567 = vadd.f32 %v1565, %v1566
    %s1568 = scalar_lea.vmem %s0, 18
    %v1569 = vld [vmem:[%s1568] sm:$0x3]
    %v1571 = vsel %vm32, %v1569, 0
    %1573 = vmatpush.msra.mxu0 0.0
    %1574 = vmatpush.msra.mxu0 0.0
    %1575 = vmatpush.msra.mxu0 0.0
    %1576 = vmatpush.msra.mxu0 0.0
    %1577 = vmatpush.msra.mxu0 0.0
    %1578 = vmatpush.msra.mxu0 0.0
    %1579 = vmatpush.msra.mxu0 0.0
    %1580 = vmatpush.msra.mxu0 0.0
    %1581 = vmatpush.msra.mxu0 0.0
    %1582 = vmatpush.msra.mxu0 0.0
    %1583 = vmatpush.msra.mxu0 0.0
    %1584 = vmatpush.msra.mxu0 0.0
    %1585 = vmatpush.msra.mxu0 0.0
    %1586 = vmatpush.msra.mxu0 0.0
    %1587 = vmatpush.msra.mxu0 0.0
    %1588 = vmatpush.msra.mxu0 %v29
    %1589 = vmatmul.f32.gmra.mxu0 %v1571
    %v1590 = vpop.f32.mrf.mxu0
    %v1591 = vadd.f32 0.0, %v1590
    %1592 = vdwg.mxu0
    %1593 = vmatpush.msra.mxu0 0.0
    %1594 = vmatpush.msra.mxu0 0.0
    %1595 = vmatpush.msra.mxu0 0.0
    %1596 = vmatpush.msra.mxu0 0.0
    %1597 = vmatpush.msra.mxu0 0.0
    %1598 = vmatpush.msra.mxu0 0.0
    %1599 = vmatpush.msra.mxu0 0.0
    %1600 = vmatpush.msra.mxu0 0.0
    %1601 = vmatpush.msra.mxu0 0.0
    %1602 = vmatpush.msra.mxu0 0.0
    %1603 = vmatpush.msra.mxu0 0.0
    %1604 = vmatpush.msra.mxu0 0.0
    %1605 = vmatpush.msra.mxu0 0.0
    %1606 = vmatpush.msra.mxu0 0.0
    %1607 = vmatpush.msra.mxu0 0.0
    %1608 = vmatpush.msra.mxu0 %v30
    %1609 = vmatmul.f32.gmra.mxu0 %v1571
    %v1610 = vpop.f32.mrf.mxu0
    %v1611 = vadd.f32 0.0, %v1610
    %1612 = vdwg.mxu0
    %1613 = vmatpush.msra.mxu0 0.0
    %1614 = vmatpush.msra.mxu0 0.0
    %1615 = vmatpush.msra.mxu0 0.0
    %1616 = vmatpush.msra.mxu0 0.0
    %1617 = vmatpush.msra.mxu0 0.0
    %1618 = vmatpush.msra.mxu0 0.0
    %1619 = vmatpush.msra.mxu0 0.0
    %1620 = vmatpush.msra.mxu0 0.0
    %1621 = vmatpush.msra.mxu0 0.0
    %1622 = vmatpush.msra.mxu0 0.0
    %1623 = vmatpush.msra.mxu0 0.0
    %1624 = vmatpush.msra.mxu0 0.0
    %1625 = vmatpush.msra.mxu0 0.0
    %1626 = vmatpush.msra.mxu0 0.0
    %1627 = vmatpush.msra.mxu0 0.0
    %1628 = vmatpush.msra.mxu0 %v31
    %1629 = vmatmul.f32.gmra.mxu0 %v1571
    %v1630 = vpop.f32.mrf.mxu0
    %v1631 = vadd.f32 0.0, %v1630
    %1632 = vdwg.mxu0
    %v1633 = vpack.c.bf16 %v1567, %v1567
    %1634 = vmatpush.bf16.msra.mxu0 %v230
    %1635 = vmatpush.bf16.msra.mxu0 %v227
    %1636 = vmatpush.bf16.msra.mxu0 %v224
    %1637 = vmatpush.bf16.msra.mxu0 %v221
    %1638 = vmatpush.bf16.msra.mxu0 %v218
    %1639 = vmatpush.bf16.msra.mxu0 %v215
    %1640 = vmatpush.bf16.msra.mxu0 %v212
    %1641 = vmatpush.bf16.msra.mxu0 %v209
    %1642 = vmatmul.bf16.gmra.mxu0 %v1633
    %v1643 = vpop.f32.mrf.mxu0
    %v1644 = vadd.f32 0.0, %v1643
    %v1645 = vpop.f32.mrf.mxu0
    %1646 = vdwg.mxu0
    %1647 = vmatpush.bf16.msra.mxu0 %v231
    %1648 = vmatpush.bf16.msra.mxu0 %v228
    %1649 = vmatpush.bf16.msra.mxu0 %v225
    %1650 = vmatpush.bf16.msra.mxu0 %v222
    %1651 = vmatpush.bf16.msra.mxu0 %v219
    %1652 = vmatpush.bf16.msra.mxu0 %v216
    %1653 = vmatpush.bf16.msra.mxu0 %v213
    %1654 = vmatpush.bf16.msra.mxu0 %v210
    %1655 = vmatmul.bf16.gmra.mxu0 %v1633
    %v1656 = vpop.f32.mrf.mxu0
    %v1657 = vadd.f32 0.0, %v1656
    %v1658 = vpop.f32.mrf.mxu0
    %1659 = vdwg.mxu0
    %1660 = vmatpush.bf16.msra.mxu0 %v232
    %1661 = vmatpush.bf16.msra.mxu0 %v229
    %1662 = vmatpush.bf16.msra.mxu0 %v226
    %1663 = vmatpush.bf16.msra.mxu0 %v223
    %1664 = vmatpush.bf16.msra.mxu0 %v220
    %1665 = vmatpush.bf16.msra.mxu0 %v217
    %1666 = vmatpush.bf16.msra.mxu0 %v214
    %1667 = vmatpush.bf16.msra.mxu0 %v211
    %1668 = vmatmul.bf16.gmra.mxu0 %v1633
    %v1669 = vpop.f32.mrf.mxu0
    %v1670 = vadd.f32 0.0, %v1669
    %v1671 = vpop.f32.mrf.mxu0
    %1672 = vdwg.mxu0
    %v1673 = vadd.f32 %v1591, %v1644
    %v1674 = vxor.u32 %v1673, 2147483648
    %v1675 = vmul.f32 %v1674, 1.442695
    %v1676 = vpow.pop %v1675
    %v1677 = vadd.f32 %v1676, 1.0
    %v1678 = vrcp.pop %v1677
    %v1679 = vmul.f32 %v1677, %v1678
    %v1680 = vsub.f32 1.0, %v1679
    %v1681 = vmul.f32 %v1678, %v1680
    %v1682 = vadd.f32 %v1678, %v1681
    %vm1683 = vweird.f32 %v1677
    %vm1684 = vweird.f32 %v1678
    %vm1685 = vmor %vm1683, %vm1684
    %v1686 = vsel %vm1685, %v1678, %v1682
    %v1687 = vand.u32 2147483647, %v1677
    %vm1688 = vcmp.eq.f32.partialorder %v1687, 8.507059e+37
    %v1689 = vand.u32 %v1677, 2147483648
    %v1690 = vor.u32 1.1754944e-38, %v1689
    %v1691 = vsel %vm1688, %v1690, %v1686
    %v1692 = vmul.f32 1.0, %v1691
    %v1693 = vadd.f32 %v1611, %v1657
    %v1694 = vxor.u32 %v1693, 2147483648
    %v1695 = vmul.f32 %v1694, 1.442695
    %v1696 = vpow.pop %v1695
    %v1697 = vadd.f32 %v1696, 1.0
    %v1698 = vrcp.pop %v1697
    %v1699 = vmul.f32 %v1697, %v1698
    %v1700 = vsub.f32 1.0, %v1699
    %v1701 = vmul.f32 %v1698, %v1700
    %v1702 = vadd.f32 %v1698, %v1701
    %vm1703 = vweird.f32 %v1697
    %vm1704 = vweird.f32 %v1698
    %vm1705 = vmor %vm1703, %vm1704
    %v1706 = vsel %vm1705, %v1698, %v1702
    %v1707 = vand.u32 2147483647, %v1697
    %vm1708 = vcmp.eq.f32.partialorder %v1707, 8.507059e+37
    %v1709 = vand.u32 %v1697, 2147483648
    %v1710 = vor.u32 1.1754944e-38, %v1709
    %v1711 = vsel %vm1708, %v1710, %v1706
    %v1712 = vmul.f32 1.0, %v1711
    %v1713 = vadd.f32 %v1670, %v25
    %v1714 = vmul.f32 %v1692, %v1713
    %v1715 = vadd.f32 %v1631, %v1714
    %v1716 = vtanh.pop %v1715
    %v1717 = vsub.f32 1.0, %v1712
    %v1718 = vmul.f32 %v1717, %v1716
    %v1719 = vmul.f32 %v1712, %v1567
    %v1720 = vadd.f32 %v1718, %v1719
    %s1721 = scalar_lea.vmem %s0, 20
    %v1722 = vld [vmem:[%s1721] sm:$0x3]
    %v1724 = vsel %vm32, %v1722, 0
    %1726 = vmatpush.msra.mxu0 0.0
    %1727 = vmatpush.msra.mxu0 0.0
    %1728 = vmatpush.msra.mxu0 0.0
    %1729 = vmatpush.msra.mxu0 0.0
    %1730 = vmatpush.msra.mxu0 0.0
    %1731 = vmatpush.msra.mxu0 0.0
    %1732 = vmatpush.msra.mxu0 0.0
    %1733 = vmatpush.msra.mxu0 0.0
    %1734 = vmatpush.msra.mxu0 0.0
    %1735 = vmatpush.msra.mxu0 0.0
    %1736 = vmatpush.msra.mxu0 0.0
    %1737 = vmatpush.msra.mxu0 0.0
    %1738 = vmatpush.msra.mxu0 0.0
    %1739 = vmatpush.msra.mxu0 0.0
    %1740 = vmatpush.msra.mxu0 0.0
    %1741 = vmatpush.msra.mxu0 %v29
    %1742 = vmatmul.f32.gmra.mxu0 %v1724
    %v1743 = vpop.f32.mrf.mxu0
    %v1744 = vadd.f32 0.0, %v1743
    %1745 = vdwg.mxu0
    %1746 = vmatpush.msra.mxu0 0.0
    %1747 = vmatpush.msra.mxu0 0.0
    %1748 = vmatpush.msra.mxu0 0.0
    %1749 = vmatpush.msra.mxu0 0.0
    %1750 = vmatpush.msra.mxu0 0.0
    %1751 = vmatpush.msra.mxu0 0.0
    %1752 = vmatpush.msra.mxu0 0.0
    %1753 = vmatpush.msra.mxu0 0.0
    %1754 = vmatpush.msra.mxu0 0.0
    %1755 = vmatpush.msra.mxu0 0.0
    %1756 = vmatpush.msra.mxu0 0.0
    %1757 = vmatpush.msra.mxu0 0.0
    %1758 = vmatpush.msra.mxu0 0.0
    %1759 = vmatpush.msra.mxu0 0.0
    %1760 = vmatpush.msra.mxu0 0.0
    %1761 = vmatpush.msra.mxu0 %v30
    %1762 = vmatmul.f32.gmra.mxu0 %v1724
    %v1763 = vpop.f32.mrf.mxu0
    %v1764 = vadd.f32 0.0, %v1763
    %1765 = vdwg.mxu0
    %1766 = vmatpush.msra.mxu0 0.0
    %1767 = vmatpush.msra.mxu0 0.0
    %1768 = vmatpush.msra.mxu0 0.0
    %1769 = vmatpush.msra.mxu0 0.0
    %1770 = vmatpush.msra.mxu0 0.0
    %1771 = vmatpush.msra.mxu0 0.0
    %1772 = vmatpush.msra.mxu0 0.0
    %1773 = vmatpush.msra.mxu0 0.0
    %1774 = vmatpush.msra.mxu0 0.0
    %1775 = vmatpush.msra.mxu0 0.0
    %1776 = vmatpush.msra.mxu0 0.0
    %1777 = vmatpush.msra.mxu0 0.0
    %1778 = vmatpush.msra.mxu0 0.0
    %1779 = vmatpush.msra.mxu0 0.0
    %1780 = vmatpush.msra.mxu0 0.0
    %1781 = vmatpush.msra.mxu0 %v31
    %1782 = vmatmul.f32.gmra.mxu0 %v1724
    %v1783 = vpop.f32.mrf.mxu0
    %v1784 = vadd.f32 0.0, %v1783
    %1785 = vdwg.mxu0
    %v1786 = vpack.c.bf16 %v1720, %v1720
    %1787 = vmatpush.bf16.msra.mxu0 %v230
    %1788 = vmatpush.bf16.msra.mxu0 %v227
    %1789 = vmatpush.bf16.msra.mxu0 %v224
    %1790 = vmatpush.bf16.msra.mxu0 %v221
    %1791 = vmatpush.bf16.msra.mxu0 %v218
    %1792 = vmatpush.bf16.msra.mxu0 %v215
    %1793 = vmatpush.bf16.msra.mxu0 %v212
    %1794 = vmatpush.bf16.msra.mxu0 %v209
    %1795 = vmatmul.bf16.gmra.mxu0 %v1786
    %v1796 = vpop.f32.mrf.mxu0
    %v1797 = vadd.f32 0.0, %v1796
    %v1798 = vpop.f32.mrf.mxu0
    %1799 = vdwg.mxu0
    %1800 = vmatpush.bf16.msra.mxu0 %v231
    %1801 = vmatpush.bf16.msra.mxu0 %v228
    %1802 = vmatpush.bf16.msra.mxu0 %v225
    %1803 = vmatpush.bf16.msra.mxu0 %v222
    %1804 = vmatpush.bf16.msra.mxu0 %v219
    %1805 = vmatpush.bf16.msra.mxu0 %v216
    %1806 = vmatpush.bf16.msra.mxu0 %v213
    %1807 = vmatpush.bf16.msra.mxu0 %v210
    %1808 = vmatmul.bf16.gmra.mxu0 %v1786
    %v1809 = vpop.f32.mrf.mxu0
    %v1810 = vadd.f32 0.0, %v1809
    %v1811 = vpop.f32.mrf.mxu0
    %1812 = vdwg.mxu0
    %1813 = vmatpush.bf16.msra.mxu0 %v232
    %1814 = vmatpush.bf16.msra.mxu0 %v229
    %1815 = vmatpush.bf16.msra.mxu0 %v226
    %1816 = vmatpush.bf16.msra.mxu0 %v223
    %1817 = vmatpush.bf16.msra.mxu0 %v220
    %1818 = vmatpush.bf16.msra.mxu0 %v217
    %1819 = vmatpush.bf16.msra.mxu0 %v214
    %1820 = vmatpush.bf16.msra.mxu0 %v211
    %1821 = vmatmul.bf16.gmra.mxu0 %v1786
    %v1822 = vpop.f32.mrf.mxu0
    %v1823 = vadd.f32 0.0, %v1822
    %v1824 = vpop.f32.mrf.mxu0
    %1825 = vdwg.mxu0
    %v1826 = vadd.f32 %v1744, %v1797
    %v1827 = vxor.u32 %v1826, 2147483648
    %v1828 = vmul.f32 %v1827, 1.442695
    %v1829 = vpow.pop %v1828
    %v1830 = vadd.f32 %v1829, 1.0
    %v1831 = vrcp.pop %v1830
    %v1832 = vmul.f32 %v1830, %v1831
    %v1833 = vsub.f32 1.0, %v1832
    %v1834 = vmul.f32 %v1831, %v1833
    %v1835 = vadd.f32 %v1831, %v1834
    %vm1836 = vweird.f32 %v1830
    %vm1837 = vweird.f32 %v1831
    %vm1838 = vmor %vm1836, %vm1837
    %v1839 = vsel %vm1838, %v1831, %v1835
    %v1840 = vand.u32 2147483647, %v1830
    %vm1841 = vcmp.eq.f32.partialorder %v1840, 8.507059e+37
    %v1842 = vand.u32 %v1830, 2147483648
    %v1843 = vor.u32 1.1754944e-38, %v1842
    %v1844 = vsel %vm1841, %v1843, %v1839
    %v1845 = vmul.f32 1.0, %v1844
    %v1846 = vadd.f32 %v1764, %v1810
    %v1847 = vxor.u32 %v1846, 2147483648
    %v1848 = vmul.f32 %v1847, 1.442695
    %v1849 = vpow.pop %v1848
    %v1850 = vadd.f32 %v1849, 1.0
    %v1851 = vrcp.pop %v1850
    %v1852 = vmul.f32 %v1850, %v1851
    %v1853 = vsub.f32 1.0, %v1852
    %v1854 = vmul.f32 %v1851, %v1853
    %v1855 = vadd.f32 %v1851, %v1854
    %vm1856 = vweird.f32 %v1850
    %vm1857 = vweird.f32 %v1851
    %vm1858 = vmor %vm1856, %vm1857
    %v1859 = vsel %vm1858, %v1851, %v1855
    %v1860 = vand.u32 2147483647, %v1850
    %vm1861 = vcmp.eq.f32.partialorder %v1860, 8.507059e+37
    %v1862 = vand.u32 %v1850, 2147483648
    %v1863 = vor.u32 1.1754944e-38, %v1862
    %v1864 = vsel %vm1861, %v1863, %v1859
    %v1865 = vmul.f32 1.0, %v1864
    %v1866 = vadd.f32 %v1823, %v25
    %v1867 = vmul.f32 %v1845, %v1866
    %v1868 = vadd.f32 %v1784, %v1867
    %v1869 = vtanh.pop %v1868
    %v1870 = vsub.f32 1.0, %v1865
    %v1871 = vmul.f32 %v1870, %v1869
    %v1872 = vmul.f32 %v1865, %v1720
    %v1873 = vadd.f32 %v1871, %v1872
    %s1874 = scalar_lea.vmem %s0, 22
    %v1875 = vld [vmem:[%s1874] sm:$0x3]
    %v1877 = vsel %vm32, %v1875, 0
    %1879 = vmatpush.msra.mxu0 0.0
    %1880 = vmatpush.msra.mxu0 0.0
    %1881 = vmatpush.msra.mxu0 0.0
    %1882 = vmatpush.msra.mxu0 0.0
    %1883 = vmatpush.msra.mxu0 0.0
    %1884 = vmatpush.msra.mxu0 0.0
    %1885 = vmatpush.msra.mxu0 0.0
    %1886 = vmatpush.msra.mxu0 0.0
    %1887 = vmatpush.msra.mxu0 0.0
    %1888 = vmatpush.msra.mxu0 0.0
    %1889 = vmatpush.msra.mxu0 0.0
    %1890 = vmatpush.msra.mxu0 0.0
    %1891 = vmatpush.msra.mxu0 0.0
    %1892 = vmatpush.msra.mxu0 0.0
    %1893 = vmatpush.msra.mxu0 0.0
    %1894 = vmatpush.msra.mxu0 %v29
    %1895 = vmatmul.f32.gmra.mxu0 %v1877
    %v1896 = vpop.f32.mrf.mxu0
    %v1897 = vadd.f32 0.0, %v1896
    %1898 = vdwg.mxu0
    %1899 = vmatpush.msra.mxu0 0.0
    %1900 = vmatpush.msra.mxu0 0.0
    %1901 = vmatpush.msra.mxu0 0.0
    %1902 = vmatpush.msra.mxu0 0.0
    %1903 = vmatpush.msra.mxu0 0.0
    %1904 = vmatpush.msra.mxu0 0.0
    %1905 = vmatpush.msra.mxu0 0.0
    %1906 = vmatpush.msra.mxu0 0.0
    %1907 = vmatpush.msra.mxu0 0.0
    %1908 = vmatpush.msra.mxu0 0.0
    %1909 = vmatpush.msra.mxu0 0.0
    %1910 = vmatpush.msra.mxu0 0.0
    %1911 = vmatpush.msra.mxu0 0.0
    %1912 = vmatpush.msra.mxu0 0.0
    %1913 = vmatpush.msra.mxu0 0.0
    %1914 = vmatpush.msra.mxu0 %v30
    %1915 = vmatmul.f32.gmra.mxu0 %v1877
    %v1916 = vpop.f32.mrf.mxu0
    %v1917 = vadd.f32 0.0, %v1916
    %1918 = vdwg.mxu0
    %1919 = vmatpush.msra.mxu0 0.0
    %1920 = vmatpush.msra.mxu0 0.0
    %1921 = vmatpush.msra.mxu0 0.0
    %1922 = vmatpush.msra.mxu0 0.0
    %1923 = vmatpush.msra.mxu0 0.0
    %1924 = vmatpush.msra.mxu0 0.0
    %1925 = vmatpush.msra.mxu0 0.0
    %1926 = vmatpush.msra.mxu0 0.0
    %1927 = vmatpush.msra.mxu0 0.0
    %1928 = vmatpush.msra.mxu0 0.0
    %1929 = vmatpush.msra.mxu0 0.0
    %1930 = vmatpush.msra.mxu0 0.0
    %1931 = vmatpush.msra.mxu0 0.0
    %1932 = vmatpush.msra.mxu0 0.0
    %1933 = vmatpush.msra.mxu0 0.0
    %1934 = vmatpush.msra.mxu0 %v31
    %1935 = vmatmul.f32.gmra.mxu0 %v1877
    %v1936 = vpop.f32.mrf.mxu0
    %v1937 = vadd.f32 0.0, %v1936
    %1938 = vdwg.mxu0
    %v1939 = vpack.c.bf16 %v1873, %v1873
    %1940 = vmatpush.bf16.msra.mxu0 %v230
    %1941 = vmatpush.bf16.msra.mxu0 %v227
    %1942 = vmatpush.bf16.msra.mxu0 %v224
    %1943 = vmatpush.bf16.msra.mxu0 %v221
    %1944 = vmatpush.bf16.msra.mxu0 %v218
    %1945 = vmatpush.bf16.msra.mxu0 %v215
    %1946 = vmatpush.bf16.msra.mxu0 %v212
    %1947 = vmatpush.bf16.msra.mxu0 %v209
    %1948 = vmatmul.bf16.gmra.mxu0 %v1939
    %v1949 = vpop.f32.mrf.mxu0
    %v1950 = vadd.f32 0.0, %v1949
    %v1951 = vpop.f32.mrf.mxu0
    %1952 = vdwg.mxu0
    %1953 = vmatpush.bf16.msra.mxu0 %v231
    %1954 = vmatpush.bf16.msra.mxu0 %v228
    %1955 = vmatpush.bf16.msra.mxu0 %v225
    %1956 = vmatpush.bf16.msra.mxu0 %v222
    %1957 = vmatpush.bf16.msra.mxu0 %v219
    %1958 = vmatpush.bf16.msra.mxu0 %v216
    %1959 = vmatpush.bf16.msra.mxu0 %v213
    %1960 = vmatpush.bf16.msra.mxu0 %v210
    %1961 = vmatmul.bf16.gmra.mxu0 %v1939
    %v1962 = vpop.f32.mrf.mxu0
    %v1963 = vadd.f32 0.0, %v1962
    %v1964 = vpop.f32.mrf.mxu0
    %1965 = vdwg.mxu0
    %1966 = vmatpush.bf16.msra.mxu0 %v232
    %1967 = vmatpush.bf16.msra.mxu0 %v229
    %1968 = vmatpush.bf16.msra.mxu0 %v226
    %1969 = vmatpush.bf16.msra.mxu0 %v223
    %1970 = vmatpush.bf16.msra.mxu0 %v220
    %1971 = vmatpush.bf16.msra.mxu0 %v217
    %1972 = vmatpush.bf16.msra.mxu0 %v214
    %1973 = vmatpush.bf16.msra.mxu0 %v211
    %1974 = vmatmul.bf16.gmra.mxu0 %v1939
    %v1975 = vpop.f32.mrf.mxu0
    %v1976 = vadd.f32 0.0, %v1975
    %v1977 = vpop.f32.mrf.mxu0
    %1978 = vdwg.mxu0
    %v1979 = vadd.f32 %v1897, %v1950
    %v1980 = vxor.u32 %v1979, 2147483648
    %v1981 = vmul.f32 %v1980, 1.442695
    %v1982 = vpow.pop %v1981
    %v1983 = vadd.f32 %v1982, 1.0
    %v1984 = vrcp.pop %v1983
    %v1985 = vmul.f32 %v1983, %v1984
    %v1986 = vsub.f32 1.0, %v1985
    %v1987 = vmul.f32 %v1984, %v1986
    %v1988 = vadd.f32 %v1984, %v1987
    %vm1989 = vweird.f32 %v1983
    %vm1990 = vweird.f32 %v1984
    %vm1991 = vmor %vm1989, %vm1990
    %v1992 = vsel %vm1991, %v1984, %v1988
    %v1993 = vand.u32 2147483647, %v1983
    %vm1994 = vcmp.eq.f32.partialorder %v1993, 8.507059e+37
    %v1995 = vand.u32 %v1983, 2147483648
    %v1996 = vor.u32 1.1754944e-38, %v1995
    %v1997 = vsel %vm1994, %v1996, %v1992
    %v1998 = vmul.f32 1.0, %v1997
    %v1999 = vadd.f32 %v1917, %v1963
    %v2000 = vxor.u32 %v1999, 2147483648
    %v2001 = vmul.f32 %v2000, 1.442695
    %v2002 = vpow.pop %v2001
    %v2003 = vadd.f32 %v2002, 1.0
    %v2004 = vrcp.pop %v2003
    %v2005 = vmul.f32 %v2003, %v2004
    %v2006 = vsub.f32 1.0, %v2005
    %v2007 = vmul.f32 %v2004, %v2006
    %v2008 = vadd.f32 %v2004, %v2007
    %vm2009 = vweird.f32 %v2003
    %vm2010 = vweird.f32 %v2004
    %vm2011 = vmor %vm2009, %vm2010
    %v2012 = vsel %vm2011, %v2004, %v2008
    %v2013 = vand.u32 2147483647, %v2003
    %vm2014 = vcmp.eq.f32.partialorder %v2013, 8.507059e+37
    %v2015 = vand.u32 %v2003, 2147483648
    %v2016 = vor.u32 1.1754944e-38, %v2015
    %v2017 = vsel %vm2014, %v2016, %v2012
    %v2018 = vmul.f32 1.0, %v2017
    %v2019 = vadd.f32 %v1976, %v25
    %v2020 = vmul.f32 %v1998, %v2019
    %v2021 = vadd.f32 %v1937, %v2020
    %v2022 = vtanh.pop %v2021
    %v2023 = vsub.f32 1.0, %v2018
    %v2024 = vmul.f32 %v2023, %v2022
    %v2025 = vmul.f32 %v2018, %v1873
    %v2026 = vadd.f32 %v2024, %v2025
    %s2027 = scalar_lea.vmem %s0, 24
    %v2028 = vld [vmem:[%s2027] sm:$0x3]
    %v2030 = vsel %vm32, %v2028, 0
    %2032 = vmatpush.msra.mxu0 0.0
    %2033 = vmatpush.msra.mxu0 0.0
    %2034 = vmatpush.msra.mxu0 0.0
    %2035 = vmatpush.msra.mxu0 0.0
    %2036 = vmatpush.msra.mxu0 0.0
    %2037 = vmatpush.msra.mxu0 0.0
    %2038 = vmatpush.msra.mxu0 0.0
    %2039 = vmatpush.msra.mxu0 0.0
    %2040 = vmatpush.msra.mxu0 0.0
    %2041 = vmatpush.msra.mxu0 0.0
    %2042 = vmatpush.msra.mxu0 0.0
    %2043 = vmatpush.msra.mxu0 0.0
    %2044 = vmatpush.msra.mxu0 0.0
    %2045 = vmatpush.msra.mxu0 0.0
    %2046 = vmatpush.msra.mxu0 0.0
    %2047 = vmatpush.msra.mxu0 %v29
    %2048 = vmatmul.f32.gmra.mxu0 %v2030
    %v2049 = vpop.f32.mrf.mxu0
    %v2050 = vadd.f32 0.0, %v2049
    %2051 = vdwg.mxu0
    %2052 = vmatpush.msra.mxu0 0.0
    %2053 = vmatpush.msra.mxu0 0.0
    %2054 = vmatpush.msra.mxu0 0.0
    %2055 = vmatpush.msra.mxu0 0.0
    %2056 = vmatpush.msra.mxu0 0.0
    %2057 = vmatpush.msra.mxu0 0.0
    %2058 = vmatpush.msra.mxu0 0.0
    %2059 = vmatpush.msra.mxu0 0.0
    %2060 = vmatpush.msra.mxu0 0.0
    %2061 = vmatpush.msra.mxu0 0.0
    %2062 = vmatpush.msra.mxu0 0.0
    %2063 = vmatpush.msra.mxu0 0.0
    %2064 = vmatpush.msra.mxu0 0.0
    %2065 = vmatpush.msra.mxu0 0.0
    %2066 = vmatpush.msra.mxu0 0.0
    %2067 = vmatpush.msra.mxu0 %v30
    %2068 = vmatmul.f32.gmra.mxu0 %v2030
    %v2069 = vpop.f32.mrf.mxu0
    %v2070 = vadd.f32 0.0, %v2069
    %2071 = vdwg.mxu0
    %2072 = vmatpush.msra.mxu0 0.0
    %2073 = vmatpush.msra.mxu0 0.0
    %2074 = vmatpush.msra.mxu0 0.0
    %2075 = vmatpush.msra.mxu0 0.0
    %2076 = vmatpush.msra.mxu0 0.0
    %2077 = vmatpush.msra.mxu0 0.0
    %2078 = vmatpush.msra.mxu0 0.0
    %2079 = vmatpush.msra.mxu0 0.0
    %2080 = vmatpush.msra.mxu0 0.0
    %2081 = vmatpush.msra.mxu0 0.0
    %2082 = vmatpush.msra.mxu0 0.0
    %2083 = vmatpush.msra.mxu0 0.0
    %2084 = vmatpush.msra.mxu0 0.0
    %2085 = vmatpush.msra.mxu0 0.0
    %2086 = vmatpush.msra.mxu0 0.0
    %2087 = vmatpush.msra.mxu0 %v31
    %2088 = vmatmul.f32.gmra.mxu0 %v2030
    %v2089 = vpop.f32.mrf.mxu0
    %v2090 = vadd.f32 0.0, %v2089
    %2091 = vdwg.mxu0
    %v2092 = vpack.c.bf16 %v2026, %v2026
    %2093 = vmatpush.bf16.msra.mxu0 %v230
    %2094 = vmatpush.bf16.msra.mxu0 %v227
    %2095 = vmatpush.bf16.msra.mxu0 %v224
    %2096 = vmatpush.bf16.msra.mxu0 %v221
    %2097 = vmatpush.bf16.msra.mxu0 %v218
    %2098 = vmatpush.bf16.msra.mxu0 %v215
    %2099 = vmatpush.bf16.msra.mxu0 %v212
    %2100 = vmatpush.bf16.msra.mxu0 %v209
    %2101 = vmatmul.bf16.gmra.mxu0 %v2092
    %v2102 = vpop.f32.mrf.mxu0
    %v2103 = vadd.f32 0.0, %v2102
    %v2104 = vpop.f32.mrf.mxu0
    %2105 = vdwg.mxu0
    %2106 = vmatpush.bf16.msra.mxu0 %v231
    %2107 = vmatpush.bf16.msra.mxu0 %v228
    %2108 = vmatpush.bf16.msra.mxu0 %v225
    %2109 = vmatpush.bf16.msra.mxu0 %v222
    %2110 = vmatpush.bf16.msra.mxu0 %v219
    %2111 = vmatpush.bf16.msra.mxu0 %v216
    %2112 = vmatpush.bf16.msra.mxu0 %v213
    %2113 = vmatpush.bf16.msra.mxu0 %v210
    %2114 = vmatmul.bf16.gmra.mxu0 %v2092
    %v2115 = vpop.f32.mrf.mxu0
    %v2116 = vadd.f32 0.0, %v2115
    %v2117 = vpop.f32.mrf.mxu0
    %2118 = vdwg.mxu0
    %2119 = vmatpush.bf16.msra.mxu0 %v232
    %2120 = vmatpush.bf16.msra.mxu0 %v229
    %2121 = vmatpush.bf16.msra.mxu0 %v226
    %2122 = vmatpush.bf16.msra.mxu0 %v223
    %2123 = vmatpush.bf16.msra.mxu0 %v220
    %2124 = vmatpush.bf16.msra.mxu0 %v217
    %2125 = vmatpush.bf16.msra.mxu0 %v214
    %2126 = vmatpush.bf16.msra.mxu0 %v211
    %2127 = vmatmul.bf16.gmra.mxu0 %v2092
    %v2128 = vpop.f32.mrf.mxu0
    %v2129 = vadd.f32 0.0, %v2128
    %v2130 = vpop.f32.mrf.mxu0
    %2131 = vdwg.mxu0
    %v2132 = vadd.f32 %v2050, %v2103
    %v2133 = vxor.u32 %v2132, 2147483648
    %v2134 = vmul.f32 %v2133, 1.442695
    %v2135 = vpow.pop %v2134
    %v2136 = vadd.f32 %v2135, 1.0
    %v2137 = vrcp.pop %v2136
    %v2138 = vmul.f32 %v2136, %v2137
    %v2139 = vsub.f32 1.0, %v2138
    %v2140 = vmul.f32 %v2137, %v2139
    %v2141 = vadd.f32 %v2137, %v2140
    %vm2142 = vweird.f32 %v2136
    %vm2143 = vweird.f32 %v2137
    %vm2144 = vmor %vm2142, %vm2143
    %v2145 = vsel %vm2144, %v2137, %v2141
    %v2146 = vand.u32 2147483647, %v2136
    %vm2147 = vcmp.eq.f32.partialorder %v2146, 8.507059e+37
    %v2148 = vand.u32 %v2136, 2147483648
    %v2149 = vor.u32 1.1754944e-38, %v2148
    %v2150 = vsel %vm2147, %v2149, %v2145
    %v2151 = vmul.f32 1.0, %v2150
    %v2152 = vadd.f32 %v2070, %v2116
    %v2153 = vxor.u32 %v2152, 2147483648
    %v2154 = vmul.f32 %v2153, 1.442695
    %v2155 = vpow.pop %v2154
    %v2156 = vadd.f32 %v2155, 1.0
    %v2157 = vrcp.pop %v2156
    %v2158 = vmul.f32 %v2156, %v2157
    %v2159 = vsub.f32 1.0, %v2158
    %v2160 = vmul.f32 %v2157, %v2159
    %v2161 = vadd.f32 %v2157, %v2160
    %vm2162 = vweird.f32 %v2156
    %vm2163 = vweird.f32 %v2157
    %vm2164 = vmor %vm2162, %vm2163
    %v2165 = vsel %vm2164, %v2157, %v2161
    %v2166 = vand.u32 2147483647, %v2156
    %vm2167 = vcmp.eq.f32.partialorder %v2166, 8.507059e+37
    %v2168 = vand.u32 %v2156, 2147483648
    %v2169 = vor.u32 1.1754944e-38, %v2168
    %v2170 = vsel %vm2167, %v2169, %v2165
    %v2171 = vmul.f32 1.0, %v2170
    %v2172 = vadd.f32 %v2129, %v25
    %v2173 = vmul.f32 %v2151, %v2172
    %v2174 = vadd.f32 %v2090, %v2173
    %v2175 = vtanh.pop %v2174
    %v2176 = vsub.f32 1.0, %v2171
    %v2177 = vmul.f32 %v2176, %v2175
    %v2178 = vmul.f32 %v2171, %v2026
    %v2179 = vadd.f32 %v2177, %v2178
    %s2180 = scalar_lea.vmem %s0, 26
    %v2181 = vld [vmem:[%s2180] sm:$0x3]
    %v2183 = vsel %vm32, %v2181, 0
    %2185 = vmatpush.msra.mxu0 0.0
    %2186 = vmatpush.msra.mxu0 0.0
    %2187 = vmatpush.msra.mxu0 0.0
    %2188 = vmatpush.msra.mxu0 0.0
    %2189 = vmatpush.msra.mxu0 0.0
    %2190 = vmatpush.msra.mxu0 0.0
    %2191 = vmatpush.msra.mxu0 0.0
    %2192 = vmatpush.msra.mxu0 0.0
    %2193 = vmatpush.msra.mxu0 0.0
    %2194 = vmatpush.msra.mxu0 0.0
    %2195 = vmatpush.msra.mxu0 0.0
    %2196 = vmatpush.msra.mxu0 0.0
    %2197 = vmatpush.msra.mxu0 0.0
    %2198 = vmatpush.msra.mxu0 0.0
    %2199 = vmatpush.msra.mxu0 0.0
    %2200 = vmatpush.msra.mxu0 %v29
    %2201 = vmatmul.f32.gmra.mxu0 %v2183
    %v2202 = vpop.f32.mrf.mxu0
    %v2203 = vadd.f32 0.0, %v2202
    %2204 = vdwg.mxu0
    %2205 = vmatpush.msra.mxu0 0.0
    %2206 = vmatpush.msra.mxu0 0.0
    %2207 = vmatpush.msra.mxu0 0.0
    %2208 = vmatpush.msra.mxu0 0.0
    %2209 = vmatpush.msra.mxu0 0.0
    %2210 = vmatpush.msra.mxu0 0.0
    %2211 = vmatpush.msra.mxu0 0.0
    %2212 = vmatpush.msra.mxu0 0.0
    %2213 = vmatpush.msra.mxu0 0.0
    %2214 = vmatpush.msra.mxu0 0.0
    %2215 = vmatpush.msra.mxu0 0.0
    %2216 = vmatpush.msra.mxu0 0.0
    %2217 = vmatpush.msra.mxu0 0.0
    %2218 = vmatpush.msra.mxu0 0.0
    %2219 = vmatpush.msra.mxu0 0.0
    %2220 = vmatpush.msra.mxu0 %v30
    %2221 = vmatmul.f32.gmra.mxu0 %v2183
    %v2222 = vpop.f32.mrf.mxu0
    %v2223 = vadd.f32 0.0, %v2222
    %2224 = vdwg.mxu0
    %2225 = vmatpush.msra.mxu0 0.0
    %2226 = vmatpush.msra.mxu0 0.0
    %2227 = vmatpush.msra.mxu0 0.0
    %2228 = vmatpush.msra.mxu0 0.0
    %2229 = vmatpush.msra.mxu0 0.0
    %2230 = vmatpush.msra.mxu0 0.0
    %2231 = vmatpush.msra.mxu0 0.0
    %2232 = vmatpush.msra.mxu0 0.0
    %2233 = vmatpush.msra.mxu0 0.0
    %2234 = vmatpush.msra.mxu0 0.0
    %2235 = vmatpush.msra.mxu0 0.0
    %2236 = vmatpush.msra.mxu0 0.0
    %2237 = vmatpush.msra.mxu0 0.0
    %2238 = vmatpush.msra.mxu0 0.0
    %2239 = vmatpush.msra.mxu0 0.0
    %2240 = vmatpush.msra.mxu0 %v31
    %2241 = vmatmul.f32.gmra.mxu0 %v2183
    %v2242 = vpop.f32.mrf.mxu0
    %v2243 = vadd.f32 0.0, %v2242
    %2244 = vdwg.mxu0
    %v2245 = vpack.c.bf16 %v2179, %v2179
    %2246 = vmatpush.bf16.msra.mxu0 %v230
    %2247 = vmatpush.bf16.msra.mxu0 %v227
    %2248 = vmatpush.bf16.msra.mxu0 %v224
    %2249 = vmatpush.bf16.msra.mxu0 %v221
    %2250 = vmatpush.bf16.msra.mxu0 %v218
    %2251 = vmatpush.bf16.msra.mxu0 %v215
    %2252 = vmatpush.bf16.msra.mxu0 %v212
    %2253 = vmatpush.bf16.msra.mxu0 %v209
    %2254 = vmatmul.bf16.gmra.mxu0 %v2245
    %v2255 = vpop.f32.mrf.mxu0
    %v2256 = vadd.f32 0.0, %v2255
    %v2257 = vpop.f32.mrf.mxu0
    %2258 = vdwg.mxu0
    %2259 = vmatpush.bf16.msra.mxu0 %v231
    %2260 = vmatpush.bf16.msra.mxu0 %v228
    %2261 = vmatpush.bf16.msra.mxu0 %v225
    %2262 = vmatpush.bf16.msra.mxu0 %v222
    %2263 = vmatpush.bf16.msra.mxu0 %v219
    %2264 = vmatpush.bf16.msra.mxu0 %v216
    %2265 = vmatpush.bf16.msra.mxu0 %v213
    %2266 = vmatpush.bf16.msra.mxu0 %v210
    %2267 = vmatmul.bf16.gmra.mxu0 %v2245
    %v2268 = vpop.f32.mrf.mxu0
    %v2269 = vadd.f32 0.0, %v2268
    %v2270 = vpop.f32.mrf.mxu0
    %2271 = vdwg.mxu0
    %2272 = vmatpush.bf16.msra.mxu0 %v232
    %2273 = vmatpush.bf16.msra.mxu0 %v229
    %2274 = vmatpush.bf16.msra.mxu0 %v226
    %2275 = vmatpush.bf16.msra.mxu0 %v223
    %2276 = vmatpush.bf16.msra.mxu0 %v220
    %2277 = vmatpush.bf16.msra.mxu0 %v217
    %2278 = vmatpush.bf16.msra.mxu0 %v214
    %2279 = vmatpush.bf16.msra.mxu0 %v211
    %2280 = vmatmul.bf16.gmra.mxu0 %v2245
    %v2281 = vpop.f32.mrf.mxu0
    %v2282 = vadd.f32 0.0, %v2281
    %v2283 = vpop.f32.mrf.mxu0
    %2284 = vdwg.mxu0
    %v2285 = vadd.f32 %v2203, %v2256
    %v2286 = vxor.u32 %v2285, 2147483648
    %v2287 = vmul.f32 %v2286, 1.442695
    %v2288 = vpow.pop %v2287
    %v2289 = vadd.f32 %v2288, 1.0
    %v2290 = vrcp.pop %v2289
    %v2291 = vmul.f32 %v2289, %v2290
    %v2292 = vsub.f32 1.0, %v2291
    %v2293 = vmul.f32 %v2290, %v2292
    %v2294 = vadd.f32 %v2290, %v2293
    %vm2295 = vweird.f32 %v2289
    %vm2296 = vweird.f32 %v2290
    %vm2297 = vmor %vm2295, %vm2296
    %v2298 = vsel %vm2297, %v2290, %v2294
    %v2299 = vand.u32 2147483647, %v2289
    %vm2300 = vcmp.eq.f32.partialorder %v2299, 8.507059e+37
    %v2301 = vand.u32 %v2289, 2147483648
    %v2302 = vor.u32 1.1754944e-38, %v2301
    %v2303 = vsel %vm2300, %v2302, %v2298
    %v2304 = vmul.f32 1.0, %v2303
    %v2305 = vadd.f32 %v2223, %v2269
    %v2306 = vxor.u32 %v2305, 2147483648
    %v2307 = vmul.f32 %v2306, 1.442695
    %v2308 = vpow.pop %v2307
    %v2309 = vadd.f32 %v2308, 1.0
    %v2310 = vrcp.pop %v2309
    %v2311 = vmul.f32 %v2309, %v2310
    %v2312 = vsub.f32 1.0, %v2311
    %v2313 = vmul.f32 %v2310, %v2312
    %v2314 = vadd.f32 %v2310, %v2313
    %vm2315 = vweird.f32 %v2309
    %vm2316 = vweird.f32 %v2310
    %vm2317 = vmor %vm2315, %vm2316
    %v2318 = vsel %vm2317, %v2310, %v2314
    %v2319 = vand.u32 2147483647, %v2309
    %vm2320 = vcmp.eq.f32.partialorder %v2319, 8.507059e+37
    %v2321 = vand.u32 %v2309, 2147483648
    %v2322 = vor.u32 1.1754944e-38, %v2321
    %v2323 = vsel %vm2320, %v2322, %v2318
    %v2324 = vmul.f32 1.0, %v2323
    %v2325 = vadd.f32 %v2282, %v25
    %v2326 = vmul.f32 %v2304, %v2325
    %v2327 = vadd.f32 %v2243, %v2326
    %v2328 = vtanh.pop %v2327
    %v2329 = vsub.f32 1.0, %v2324
    %v2330 = vmul.f32 %v2329, %v2328
    %v2331 = vmul.f32 %v2324, %v2179
    %v2332 = vadd.f32 %v2330, %v2331
    %s2333 = scalar_lea.vmem %s0, 28
    %v2334 = vld [vmem:[%s2333] sm:$0x3]
    %v2336 = vsel %vm32, %v2334, 0
    %2338 = vmatpush.msra.mxu0 0.0
    %2339 = vmatpush.msra.mxu0 0.0
    %2340 = vmatpush.msra.mxu0 0.0
    %2341 = vmatpush.msra.mxu0 0.0
    %2342 = vmatpush.msra.mxu0 0.0
    %2343 = vmatpush.msra.mxu0 0.0
    %2344 = vmatpush.msra.mxu0 0.0
    %2345 = vmatpush.msra.mxu0 0.0
    %2346 = vmatpush.msra.mxu0 0.0
    %2347 = vmatpush.msra.mxu0 0.0
    %2348 = vmatpush.msra.mxu0 0.0
    %2349 = vmatpush.msra.mxu0 0.0
    %2350 = vmatpush.msra.mxu0 0.0
    %2351 = vmatpush.msra.mxu0 0.0
    %2352 = vmatpush.msra.mxu0 0.0
    %2353 = vmatpush.msra.mxu0 %v29
    %2354 = vmatmul.f32.gmra.mxu0 %v2336
    %v2355 = vpop.f32.mrf.mxu0
    %v2356 = vadd.f32 0.0, %v2355
    %2357 = vdwg.mxu0
    %2358 = vmatpush.msra.mxu0 0.0
    %2359 = vmatpush.msra.mxu0 0.0
    %2360 = vmatpush.msra.mxu0 0.0
    %2361 = vmatpush.msra.mxu0 0.0
    %2362 = vmatpush.msra.mxu0 0.0
    %2363 = vmatpush.msra.mxu0 0.0
    %2364 = vmatpush.msra.mxu0 0.0
    %2365 = vmatpush.msra.mxu0 0.0
    %2366 = vmatpush.msra.mxu0 0.0
    %2367 = vmatpush.msra.mxu0 0.0
    %2368 = vmatpush.msra.mxu0 0.0
    %2369 = vmatpush.msra.mxu0 0.0
    %2370 = vmatpush.msra.mxu0 0.0
    %2371 = vmatpush.msra.mxu0 0.0
    %2372 = vmatpush.msra.mxu0 0.0
    %2373 = vmatpush.msra.mxu0 %v30
    %2374 = vmatmul.f32.gmra.mxu0 %v2336
    %v2375 = vpop.f32.mrf.mxu0
    %v2376 = vadd.f32 0.0, %v2375
    %2377 = vdwg.mxu0
    %2378 = vmatpush.msra.mxu0 0.0
    %2379 = vmatpush.msra.mxu0 0.0
    %2380 = vmatpush.msra.mxu0 0.0
    %2381 = vmatpush.msra.mxu0 0.0
    %2382 = vmatpush.msra.mxu0 0.0
    %2383 = vmatpush.msra.mxu0 0.0
    %2384 = vmatpush.msra.mxu0 0.0
    %2385 = vmatpush.msra.mxu0 0.0
    %2386 = vmatpush.msra.mxu0 0.0
    %2387 = vmatpush.msra.mxu0 0.0
    %2388 = vmatpush.msra.mxu0 0.0
    %2389 = vmatpush.msra.mxu0 0.0
    %2390 = vmatpush.msra.mxu0 0.0
    %2391 = vmatpush.msra.mxu0 0.0
    %2392 = vmatpush.msra.mxu0 0.0
    %2393 = vmatpush.msra.mxu0 %v31
    %2394 = vmatmul.f32.gmra.mxu0 %v2336
    %v2395 = vpop.f32.mrf.mxu0
    %v2396 = vadd.f32 0.0, %v2395
    %2397 = vdwg.mxu0
    %v2398 = vpack.c.bf16 %v2332, %v2332
    %2399 = vmatpush.bf16.msra.mxu0 %v230
    %2400 = vmatpush.bf16.msra.mxu0 %v227
    %2401 = vmatpush.bf16.msra.mxu0 %v224
    %2402 = vmatpush.bf16.msra.mxu0 %v221
    %2403 = vmatpush.bf16.msra.mxu0 %v218
    %2404 = vmatpush.bf16.msra.mxu0 %v215
    %2405 = vmatpush.bf16.msra.mxu0 %v212
    %2406 = vmatpush.bf16.msra.mxu0 %v209
    %2407 = vmatmul.bf16.gmra.mxu0 %v2398
    %v2408 = vpop.f32.mrf.mxu0
    %v2409 = vadd.f32 0.0, %v2408
    %v2410 = vpop.f32.mrf.mxu0
    %2411 = vdwg.mxu0
    %2412 = vmatpush.bf16.msra.mxu0 %v231
    %2413 = vmatpush.bf16.msra.mxu0 %v228
    %2414 = vmatpush.bf16.msra.mxu0 %v225
    %2415 = vmatpush.bf16.msra.mxu0 %v222
    %2416 = vmatpush.bf16.msra.mxu0 %v219
    %2417 = vmatpush.bf16.msra.mxu0 %v216
    %2418 = vmatpush.bf16.msra.mxu0 %v213
    %2419 = vmatpush.bf16.msra.mxu0 %v210
    %2420 = vmatmul.bf16.gmra.mxu0 %v2398
    %v2421 = vpop.f32.mrf.mxu0
    %v2422 = vadd.f32 0.0, %v2421
    %v2423 = vpop.f32.mrf.mxu0
    %2424 = vdwg.mxu0
    %2425 = vmatpush.bf16.msra.mxu0 %v232
    %2426 = vmatpush.bf16.msra.mxu0 %v229
    %2427 = vmatpush.bf16.msra.mxu0 %v226
    %2428 = vmatpush.bf16.msra.mxu0 %v223
    %2429 = vmatpush.bf16.msra.mxu0 %v220
    %2430 = vmatpush.bf16.msra.mxu0 %v217
    %2431 = vmatpush.bf16.msra.mxu0 %v214
    %2432 = vmatpush.bf16.msra.mxu0 %v211
    %2433 = vmatmul.bf16.gmra.mxu0 %v2398
    %v2434 = vpop.f32.mrf.mxu0
    %v2435 = vadd.f32 0.0, %v2434
    %v2436 = vpop.f32.mrf.mxu0
    %2437 = vdwg.mxu0
    %v2438 = vadd.f32 %v2356, %v2409
    %v2439 = vxor.u32 %v2438, 2147483648
    %v2440 = vmul.f32 %v2439, 1.442695
    %v2441 = vpow.pop %v2440
    %v2442 = vadd.f32 %v2441, 1.0
    %v2443 = vrcp.pop %v2442
    %v2444 = vmul.f32 %v2442, %v2443
    %v2445 = vsub.f32 1.0, %v2444
    %v2446 = vmul.f32 %v2443, %v2445
    %v2447 = vadd.f32 %v2443, %v2446
    %vm2448 = vweird.f32 %v2442
    %vm2449 = vweird.f32 %v2443
    %vm2450 = vmor %vm2448, %vm2449
    %v2451 = vsel %vm2450, %v2443, %v2447
    %v2452 = vand.u32 2147483647, %v2442
    %vm2453 = vcmp.eq.f32.partialorder %v2452, 8.507059e+37
    %v2454 = vand.u32 %v2442, 2147483648
    %v2455 = vor.u32 1.1754944e-38, %v2454
    %v2456 = vsel %vm2453, %v2455, %v2451
    %v2457 = vmul.f32 1.0, %v2456
    %v2458 = vadd.f32 %v2376, %v2422
    %v2459 = vxor.u32 %v2458, 2147483648
    %v2460 = vmul.f32 %v2459, 1.442695
    %v2461 = vpow.pop %v2460
    %v2462 = vadd.f32 %v2461, 1.0
    %v2463 = vrcp.pop %v2462
    %v2464 = vmul.f32 %v2462, %v2463
    %v2465 = vsub.f32 1.0, %v2464
    %v2466 = vmul.f32 %v2463, %v2465
    %v2467 = vadd.f32 %v2463, %v2466
    %vm2468 = vweird.f32 %v2462
    %vm2469 = vweird.f32 %v2463
    %vm2470 = vmor %vm2468, %vm2469
    %v2471 = vsel %vm2470, %v2463, %v2467
    %v2472 = vand.u32 2147483647, %v2462
    %vm2473 = vcmp.eq.f32.partialorder %v2472, 8.507059e+37
    %v2474 = vand.u32 %v2462, 2147483648
    %v2475 = vor.u32 1.1754944e-38, %v2474
    %v2476 = vsel %vm2473, %v2475, %v2471
    %v2477 = vmul.f32 1.0, %v2476
    %v2478 = vadd.f32 %v2435, %v25
    %v2479 = vmul.f32 %v2457, %v2478
    %v2480 = vadd.f32 %v2396, %v2479
    %v2481 = vtanh.pop %v2480
    %v2482 = vsub.f32 1.0, %v2477
    %v2483 = vmul.f32 %v2482, %v2481
    %v2484 = vmul.f32 %v2477, %v2332
    %v2485 = vadd.f32 %v2483, %v2484
    %s2486 = scalar_lea.vmem %s0, 30
    %v2487 = vld [vmem:[%s2486] sm:$0x3]
    %v2489 = vsel %vm32, %v2487, 0
    %2491 = vmatpush.msra.mxu0 0.0
    %2492 = vmatpush.msra.mxu0 0.0
    %2493 = vmatpush.msra.mxu0 0.0
    %2494 = vmatpush.msra.mxu0 0.0
    %2495 = vmatpush.msra.mxu0 0.0
    %2496 = vmatpush.msra.mxu0 0.0
    %2497 = vmatpush.msra.mxu0 0.0
    %2498 = vmatpush.msra.mxu0 0.0
    %2499 = vmatpush.msra.mxu0 0.0
    %2500 = vmatpush.msra.mxu0 0.0
    %2501 = vmatpush.msra.mxu0 0.0
    %2502 = vmatpush.msra.mxu0 0.0
    %2503 = vmatpush.msra.mxu0 0.0
    %2504 = vmatpush.msra.mxu0 0.0
    %2505 = vmatpush.msra.mxu0 0.0
    %2506 = vmatpush.msra.mxu0 %v29
    %2507 = vmatmul.f32.gmra.mxu0 %v2489
    %v2508 = vpop.f32.mrf.mxu0
    %v2509 = vadd.f32 0.0, %v2508
    %2510 = vdwg.mxu0
    %2511 = vmatpush.msra.mxu0 0.0
    %2512 = vmatpush.msra.mxu0 0.0
    %2513 = vmatpush.msra.mxu0 0.0
    %2514 = vmatpush.msra.mxu0 0.0
    %2515 = vmatpush.msra.mxu0 0.0
    %2516 = vmatpush.msra.mxu0 0.0
    %2517 = vmatpush.msra.mxu0 0.0
    %2518 = vmatpush.msra.mxu0 0.0
    %2519 = vmatpush.msra.mxu0 0.0
    %2520 = vmatpush.msra.mxu0 0.0
    %2521 = vmatpush.msra.mxu0 0.0
    %2522 = vmatpush.msra.mxu0 0.0
    %2523 = vmatpush.msra.mxu0 0.0
    %2524 = vmatpush.msra.mxu0 0.0
    %2525 = vmatpush.msra.mxu0 0.0
    %2526 = vmatpush.msra.mxu0 %v30
    %2527 = vmatmul.f32.gmra.mxu0 %v2489
    %v2528 = vpop.f32.mrf.mxu0
    %v2529 = vadd.f32 0.0, %v2528
    %2530 = vdwg.mxu0
    %2531 = vmatpush.msra.mxu0 0.0
    %2532 = vmatpush.msra.mxu0 0.0
    %2533 = vmatpush.msra.mxu0 0.0
    %2534 = vmatpush.msra.mxu0 0.0
    %2535 = vmatpush.msra.mxu0 0.0
    %2536 = vmatpush.msra.mxu0 0.0
    %2537 = vmatpush.msra.mxu0 0.0
    %2538 = vmatpush.msra.mxu0 0.0
    %2539 = vmatpush.msra.mxu0 0.0
    %2540 = vmatpush.msra.mxu0 0.0
    %2541 = vmatpush.msra.mxu0 0.0
    %2542 = vmatpush.msra.mxu0 0.0
    %2543 = vmatpush.msra.mxu0 0.0
    %2544 = vmatpush.msra.mxu0 0.0
    %2545 = vmatpush.msra.mxu0 0.0
    %2546 = vmatpush.msra.mxu0 %v31
    %2547 = vmatmul.f32.gmra.mxu0 %v2489
    %v2548 = vpop.f32.mrf.mxu0
    %v2549 = vadd.f32 0.0, %v2548
    %2550 = vdwg.mxu0
    %v2551 = vpack.c.bf16 %v2485, %v2485
    %2552 = vmatpush.bf16.msra.mxu0 %v230
    %2553 = vmatpush.bf16.msra.mxu0 %v227
    %2554 = vmatpush.bf16.msra.mxu0 %v224
    %2555 = vmatpush.bf16.msra.mxu0 %v221
    %2556 = vmatpush.bf16.msra.mxu0 %v218
    %2557 = vmatpush.bf16.msra.mxu0 %v215
    %2558 = vmatpush.bf16.msra.mxu0 %v212
    %2559 = vmatpush.bf16.msra.mxu0 %v209
    %2560 = vmatmul.bf16.gmra.mxu0 %v2551
    %v2561 = vpop.f32.mrf.mxu0
    %v2562 = vadd.f32 0.0, %v2561
    %v2563 = vpop.f32.mrf.mxu0
    %2564 = vdwg.mxu0
    %2565 = vmatpush.bf16.msra.mxu0 %v231
    %2566 = vmatpush.bf16.msra.mxu0 %v228
    %2567 = vmatpush.bf16.msra.mxu0 %v225
    %2568 = vmatpush.bf16.msra.mxu0 %v222
    %2569 = vmatpush.bf16.msra.mxu0 %v219
    %2570 = vmatpush.bf16.msra.mxu0 %v216
    %2571 = vmatpush.bf16.msra.mxu0 %v213
    %2572 = vmatpush.bf16.msra.mxu0 %v210
    %2573 = vmatmul.bf16.gmra.mxu0 %v2551
    %v2574 = vpop.f32.mrf.mxu0
    %v2575 = vadd.f32 0.0, %v2574
    %v2576 = vpop.f32.mrf.mxu0
    %2577 = vdwg.mxu0
    %2578 = vmatpush.bf16.msra.mxu0 %v232
    %2579 = vmatpush.bf16.msra.mxu0 %v229
    %2580 = vmatpush.bf16.msra.mxu0 %v226
    %2581 = vmatpush.bf16.msra.mxu0 %v223
    %2582 = vmatpush.bf16.msra.mxu0 %v220
    %2583 = vmatpush.bf16.msra.mxu0 %v217
    %2584 = vmatpush.bf16.msra.mxu0 %v214
    %2585 = vmatpush.bf16.msra.mxu0 %v211
    %2586 = vmatmul.bf16.gmra.mxu0 %v2551
    %v2587 = vpop.f32.mrf.mxu0
    %v2588 = vadd.f32 0.0, %v2587
    %v2589 = vpop.f32.mrf.mxu0
    %2590 = vdwg.mxu0
    %v2591 = vadd.f32 %v2509, %v2562
    %v2592 = vxor.u32 %v2591, 2147483648
    %v2593 = vmul.f32 %v2592, 1.442695
    %v2594 = vpow.pop %v2593
    %v2595 = vadd.f32 %v2594, 1.0
    %v2596 = vrcp.pop %v2595
    %v2597 = vmul.f32 %v2595, %v2596
    %v2598 = vsub.f32 1.0, %v2597
    %v2599 = vmul.f32 %v2596, %v2598
    %v2600 = vadd.f32 %v2596, %v2599
    %vm2601 = vweird.f32 %v2595
    %vm2602 = vweird.f32 %v2596
    %vm2603 = vmor %vm2601, %vm2602
    %v2604 = vsel %vm2603, %v2596, %v2600
    %v2605 = vand.u32 2147483647, %v2595
    %vm2606 = vcmp.eq.f32.partialorder %v2605, 8.507059e+37
    %v2607 = vand.u32 %v2595, 2147483648
    %v2608 = vor.u32 1.1754944e-38, %v2607
    %v2609 = vsel %vm2606, %v2608, %v2604
    %v2610 = vmul.f32 1.0, %v2609
    %v2611 = vadd.f32 %v2529, %v2575
    %v2612 = vxor.u32 %v2611, 2147483648
    %v2613 = vmul.f32 %v2612, 1.442695
    %v2614 = vpow.pop %v2613
    %v2615 = vadd.f32 %v2614, 1.0
    %v2616 = vrcp.pop %v2615
    %v2617 = vmul.f32 %v2615, %v2616
    %v2618 = vsub.f32 1.0, %v2617
    %v2619 = vmul.f32 %v2616, %v2618
    %v2620 = vadd.f32 %v2616, %v2619
    %vm2621 = vweird.f32 %v2615
    %vm2622 = vweird.f32 %v2616
    %vm2623 = vmor %vm2621, %vm2622
    %v2624 = vsel %vm2623, %v2616, %v2620
    %v2625 = vand.u32 2147483647, %v2615
    %vm2626 = vcmp.eq.f32.partialorder %v2625, 8.507059e+37
    %v2627 = vand.u32 %v2615, 2147483648
    %v2628 = vor.u32 1.1754944e-38, %v2627
    %v2629 = vsel %vm2626, %v2628, %v2624
    %v2630 = vmul.f32 1.0, %v2629
    %v2631 = vadd.f32 %v2588, %v25
    %v2632 = vmul.f32 %v2610, %v2631
    %v2633 = vadd.f32 %v2549, %v2632
    %v2634 = vtanh.pop %v2633
    %v2635 = vsub.f32 1.0, %v2630
    %v2636 = vmul.f32 %v2635, %v2634
    %v2637 = vmul.f32 %v2630, %v2485
    %v2638 = vadd.f32 %v2636, %v2637
    %2639 = vst [vmem:[#allocation2] sm:$0x3] %v2638
    // Predicated region
    $region22: #{rnn_block_forward.1} parent=1 // pred_check
      %p2640 = pneg %p18
    $region23: #{rnn_block_forward.1} parent=1 // pred_check_branch
      %2642 = sbr.rel (%p2640) target = $region25
    $region24: #{rnn_block_forward.1} parent=1 // pred_region
      %2643 = vst [vmem:[#allocation3] sm:$0x3] %v2638
    $region25: #{rnn_block_forward.1} parent=1 // pred_fallthru
      _
    // Predicated region
    $region26: #{rnn_block_forward.1} parent=1 // pred_check
      _
    $region27: #{rnn_block_forward.1} parent=1 // pred_check_branch
      %2645 = sbr.rel (0) target = $region29
    $region28: #{rnn_block_forward.1} parent=1 // pred_region
      %2647 = vsyncadd [#allocation4], 0
      %s2649 = sshll.u32 [#allocation3], 4
      %s2650 = int_to_ptr.vmem [resolvable:$true] %s2649
      %s2651 = sshll.u32 %s4, 4
      %s2652 = int_to_ptr.hbm [resolvable:$true] %s2651
      %2654 = dma.vmem_to_hbm [thread:$0]  %s2650, 32, %s2652, [#allocation4]
    $region29: #{rnn_block_forward.1} parent=1 // pred_fallthru
      _
    // Predicated region
    $region30: #{rnn_block_forward.1} parent=1 // pred_check
      _
    $region31: #{rnn_block_forward.1} parent=1 // pred_check_branch
      %2656 = sbr.rel (0) target = $region33
    $region32: #{rnn_block_forward.1} parent=1 // pred_region
      %2658 = dma.done [#allocation4], 32
    $region33: #{rnn_block_forward.1} parent=1 // pred_fallthru
      _
    %2659 = vsyncpa [#allocation4], 1

</llo_original>
